<compile_context>
chip_gen: v7x
topology: tpu7x:2x2x1
jax: 0.10.0
libtpu: 0.0.40
codegen_flags: <defaults>
</compile_context>

<pallas_src>
import functools

import jax
import jax.numpy as jnp
from jax.experimental import pallas as pl
from jax.experimental.pallas import tpu as pltpu


# ---------------------------------------------------------------------------
# Kernel
# ---------------------------------------------------------------------------
def _upsample_conv_kernel(x_ref, w_ref, b_ref, o_ref, *, packed, tiled_input):
    """One (batch, row-tile, cout-tile) grid step.

    x_ref : (1, TH+2, Wp, Cin)   padded original-res rows [t*TH, t*TH + TH + 2)
            (or (1, 1, TH+2, Wp, Cin) when tiled_input=True  -- Blocked fallback)
    w_ref : packed   -> (12, Cin, 2*Cout)  folded weights, index (py*2+dy)*3 + s
            unpacked -> (16, Cin, Ct)      folded weights, index ((py*2+px)*2+dy)*2+dx
    b_ref : (1, 2*Cout) packed / (1, Ct) unpacked, float32
    o_ref : (1, TH, 2, W, 2*Ct)  dims [_, iy, py, ix, px*Ct + c]  (channels-last slab)
    """
    TH = o_ref.shape[1]
    W = o_ref.shape[3]
    L = o_ref.shape[4]                      # 2 * Ct

    def xview(r, s):
        # Shifted (TH, W, Cin) view straight off the input block -- no scratch copy.
        # NOTE: s in {1, 2} is a sublane-unaligned slice start (micro cost only).
        if tiled_input:
            return x_ref[0, 0, r:r + TH, s:s + W, :]
        return x_ref[0, r:r + TH, s:s + W, :]

    bias = b_ref[0].astype(jnp.float32)

    # Parity-major: finish one output row-parity completely and store it before the
    # next starts, so only ONE (TH, W, 2*Ct) fp32 accumulator is live at a time.
    for py in range(2):
        if packed:
            # px packed into lanes: 6 matmuls of (Cin, 2*Cout) per row parity.
            acc = jnp.broadcast_to(bias[None, None, :], (TH, W, L))
            for dy in range(2):
                for s in range(3):
                    acc = acc + jnp.einsum(
                        'hwc,cd->hwd', xview(py + dy, s),
                        w_ref[(py * 2 + dy) * 3 + s],
                        preferred_element_type=jnp.float32)
            o_ref[0, :, py] = acc.astype(o_ref.dtype)
        else:
            # Wide channels: keep the minimal 16-MAC scheme, lane-concat the two
            # column parities so the store is still 2*Ct lanes wide.
            ct = L // 2
            slabs = []
            for px in range(2):
                acc = jnp.broadcast_to(bias[None, None, :], (TH, W, ct))
                for dy in range(2):
                    for dx in range(2):
                        p = ((py * 2 + px) * 2 + dy) * 2 + dx
                        acc = acc + jnp.einsum(
                            'hwc,cd->hwd', xview(py + dy, px + dx), w_ref[p],
                            preferred_element_type=jnp.float32)
                slabs.append(acc)
            o_ref[0, :, py] = jnp.concatenate(slabs, axis=-1).astype(o_ref.dtype)


# ---------------------------------------------------------------------------
# VMEM budgeting / tile selection (generation-aware)
# ---------------------------------------------------------------------------
def _physical_vmem_bytes():
    try:
        info = pltpu.get_tpu_info()
        cap = getattr(info, "vmem_capacity_bytes", None)
        if cap:
            return int(cap)
    except Exception:
        pass
    return 64 * 2**20            # conservative default (v7x per-core VMEM)


def _footprint_bytes(th, ct, *, W, Cin, Cout, itemsize, packed):
    """Real per-step VMEM use: double-buffered blocks + live fp32 accumulators."""
    Wp = W + 2
    w_last = 2 * Cout if packed else ct
    n_mats = 12 if packed else 16
    in_blk = (th + 2) * Wp * Cin * itemsize
    out_blk = th * 2 * W * 2 * ct * itemsize
    w_blk = n_mats * Cin * w_last * itemsize
    b_blk = 2 * Cout * 4
    acc_f32 = th * W * 2 * ct * 4            # one live parity accumulator
    # 2x: double-buffered pipeline copies; 2x on acc for matmul/relayout temporaries.
    return 2 * (in_blk + out_blk + w_blk + b_blk) + 2 * acc_f32 + (2 << 20)


def _choose_tiling(N, H, W, Cin, Cout, itemsize, packed, budget):
    """Pick (tile_h, cout_tile) so the real footprint fits `budget`."""
    th_cands = [t for t in range(H, 0, -1) if H % t == 0]
    if packed:
        ct_cands = [Cout]
    else:
        ct_cands = [Cout] + sorted(
            (d for d in range(128, Cout, 128) if Cout % d == 0), reverse=True)

    def fits(th, ct):
        return _footprint_bytes(th, ct, W=W, Cin=Cin, Cout=Cout,
                                itemsize=itemsize, packed=packed) <= budget

    choice = None
    for ct in ct_cands:
        for th in th_cands:
            if fits(th, ct):
                choice = (th, ct)
                break
        if choice:
            break
    if choice is None:
        choice = (1, ct_cands[-1])

    th, ct = choice
    # v7x has 2 TensorCores: prefer >= 2 parallel grid points when possible.
    if N * (H // th) * (Cout // ct) < 2:
        for th2 in th_cands:
            if H // th2 >= 2 and fits(th2, ct):
                th = th2
                break
    return th, ct


# ---------------------------------------------------------------------------
# Wrapper
# ---------------------------------------------------------------------------
def upsample2d_pallas(x_nchw, weight_oihw, bias, *, tile_h=None, cout_tile=None,
                      pack_px=None, channels_last=False):
    """Nearest 2x upsample followed by 3x3 conv (stride 1, pad 1). NCHW in / NCHW out."""
    N, Cin, H, W = x_nchw.shape
    Cout = weight_oihw.shape[0]
    assert weight_oihw.shape == (Cout, Cin, 3, 3)
    assert bias.shape == (Cout,)

    dtype = x_nchw.dtype
    itemsize = jnp.dtype(dtype).itemsize
    Wp = W + 2

    # Lane-dense px packing pays off when the channel width is narrow.
    packed = (Cout < 128) if pack_px is None else bool(pack_px)

    phys_vmem = _physical_vmem_bytes()
    budget = max(16 << 20, min(int(phys_vmem * 0.40), 80 << 20))

    auto_th, auto_ct = _choose_tiling(N, H, W, Cin, Cout, itemsize, packed, budget)
    tile_h = auto_th if tile_h is None else int(tile_h)
    ct = auto_ct if cout_tile is None else int(cout_tile)
    if packed:
        ct = Cout                                   # parity packing ⇒ no Cout tiling
    assert H % tile_h == 0, "H must be divisible by tile_h"  # TODO(synk): ragged H
    assert Cout % ct == 0 and (ct == Cout or ct % 128 == 0), \
        "cout_tile must divide Cout and be a multiple of 128 (or equal Cout)"
    n_row = H // tile_h
    n_ct = Cout // ct

    fp = _footprint_bytes(tile_h, ct, W=W, Cin=Cin, Cout=Cout, itemsize=itemsize,
                          packed=packed)
    vmem_limit = int(min(phys_vmem * 0.75, max(2 * fp, 48 << 20)))

    # NHWC + 1-pixel zero pad at ORIGINAL resolution (the upsample is folded into the
    # weights, so no upsampled intermediate is ever materialized in HBM).
    x_pad = jnp.pad(jnp.transpose(x_nchw, (0, 2, 3, 1)),
                    ((0, 0), (1, 1), (1, 1), (0, 0)))

    # Fold the nearest-2x upsample into 4 parity weight sets:
    #   y[2iy+py, 2ix+px, o] = b[o] + sum_{dy,dx} xpad[iy+py+dy, ix+px+dx, :]·Wf[py,px,dy,dx]
    w_hwio = jnp.transpose(weight_oihw, (2, 3, 1, 0)).astype(jnp.float32)   # (3,3,Cin,Cout)
    fold = jnp.array([[[1., 0., 0.], [0., 1., 1.]],
                      [[1., 1., 0.], [0., 0., 1.]]], dtype=jnp.float32)     # [parity, d, tap]
    wf = jnp.einsum('pdh,qew,hwio->pqdeio', fold, fold, w_hwio)             # (2,2,2,2,Cin,Cout)

    # NOTE: for bf16 inputs the folded taps are re-rounded to bf16; slightly different
    # rounding than accumulating separate bf16 products in fp32 (widen tolerances).
    if packed:
        zero = jnp.zeros((Cin, Cout), jnp.float32)
        mats = []
        for py in range(2):
            for dy in range(2):
                for s in range(3):                       # s = px + dx
                    left = wf[py, 0, dy, s] if 0 <= s <= 1 else zero        # px=0, dx=s
                    right = wf[py, 1, dy, s - 1] if 0 <= s - 1 <= 1 else zero
                    mats.append(jnp.concatenate([left, right], axis=-1))    # (Cin, 2*Cout)
        w_arr = jnp.stack(mats, 0).astype(dtype)                            # (12, Cin, 2*Cout)
        b_arr = jnp.concatenate([bias, bias]).astype(jnp.float32).reshape(1, 2 * Cout)
        n_mats, w_last = 12, 2 * Cout
    else:
        w_arr = wf.reshape(16, Cin, Cout).astype(dtype)                     # (16, Cin, Cout)
        b_arr = bias.astype(jnp.float32).reshape(1, Cout)
        n_mats, w_last = 16, ct

    out_shape = jax.ShapeDtypeStruct((N, H, 2, W, 2 * Cout), dtype)
    w_spec = pl.BlockSpec((n_mats, Cin, w_last), lambda n, t, j: (0, 0, j))
    b_spec = pl.BlockSpec((1, w_last), lambda n, t, j: (0, j))
    o_spec = pl.BlockSpec((1, tile_h, 2, W, 2 * ct), lambda n, t, j: (n, t, 0, 0, j))
    cparams = pltpu.CompilerParams(
        dimension_semantics=("parallel", "parallel", "parallel"),
        vmem_limit_bytes=vmem_limit)

    def run(use_element_window):
        if use_element_window:
            # Preferred: one overlapping (tile_h+2)-row window, element-offset row dim.
            x_in = x_pad
            x_spec = pl.BlockSpec((1, pl.Element(tile_h + 2), Wp, Cin),
                                  lambda n, t, j: (n, t * tile_h, 0, 0))
        else:
            # Fallback: overlapping row tiles pre-built in HBM, plain Blocked spec.
            x_in = jnp.concatenate(
                [x_pad[:, t * tile_h:t * tile_h + tile_h + 2][:, None]
                 for t in range(n_row)], axis=1)
            x_spec = pl.BlockSpec((1, 1, tile_h + 2, Wp, Cin),
                                  lambda n, t, j: (n, t, 0, 0, 0))
        kern = functools.partial(_upsample_conv_kernel, packed=packed,
                                 tiled_input=not use_element_window)
        return pl.pallas_call(
            kern, out_shape=out_shape, grid=(N, n_row, n_ct),
            in_specs=[x_spec, w_spec, b_spec], out_specs=o_spec,
            compiler_params=cparams,
        )(x_in, w_arr, b_arr)

    try:
        out = run(True)
    except Exception:
        out = run(False)

    # Kernel output is already the fully interleaved upsampled image, channels-last;
    # the only remaining XLA work is the NHWC->NCHW relayout (skippable).
    o = out.reshape(N, H, 2, W, n_ct, 2, ct)         # [n, iy, py, ix, j, px, c']
    if channels_last:
        o = jnp.transpose(o, (0, 1, 2, 3, 5, 4, 6))  # [n, iy, py, ix, px, j, c']
        return o.reshape(N, 2 * H, 2 * W, Cout)
    o = jnp.transpose(o, (0, 4, 6, 1, 2, 3, 5))      # [n, j, c', iy, py, ix, px]
    return o.reshape(N, Cout, 2 * H, 2 * W)


# ---------------------------------------------------------------------------
# Pure-JAX reference (matches PyTorch semantics)
# ---------------------------------------------------------------------------
def upsample2d_reference(x_nchw, weight_oihw, bias):
    x = jnp.repeat(jnp.repeat(x_nchw, 2, axis=2), 2, axis=3)
    y = jax.lax.conv_general_dilated(
        x, weight_oihw, window_strides=(1, 1), padding=((1, 1), (1, 1)),
        dimension_numbers=('NCHW', 'OIHW', 'NCHW'))
    return y + bias[None, :, None, None]


if __name__ == "__main__":
    key = jax.random.PRNGKey(0)
    k_x, k_w, k_b, k_x2, k_w2, k_b2 = jax.random.split(key, 6)

    # Case 1: module-sized shapes; narrow channels -> packed-px path, 2 overlapping
    # row windows (exercises the halo delivery).
    N, Cin, Cout, H, W = 2, 4, 4, 16, 16
    x = jax.random.normal(k_x, (N, Cin, H, W), dtype=jnp.float32)
    fan_in = Cin * 9
    bound = 1.0 / (fan_in ** 0.5)
    weight = jax.random.uniform(k_w, (Cout, Cin, 3, 3), minval=-bound, maxval=bound,
                                dtype=jnp.float32)
    bias = jax.random.uniform(k_b, (Cout,), minval=-bound, maxval=bound,
                              dtype=jnp.float32)

    out = jax.block_until_ready(upsample2d_pallas(x, weight, bias, tile_h=8))
    ref = jax.block_until_ready(upsample2d_reference(x, weight, bias))
    assert out.shape == (N, Cout, 2 * H, 2 * W), out.shape
    err = float(jnp.max(jnp.abs(out - ref)))
    assert jnp.allclose(out, ref, atol=1e-4, rtol=1e-4), err

    # Case 2: same shapes, force the wide-channel (unpacked, 16-matmul) path.
    out2 = jax.block_until_ready(upsample2d_pallas(x, weight, bias, tile_h=8,
                                                   pack_px=False))
    assert jnp.allclose(out2, ref, atol=1e-4, rtol=1e-4)

    # Case 3: wide channels with a Cout grid tile (exercises the third grid axis).
    N3, Cin3, Cout3, H3, W3 = 1, 8, 256, 8, 8
    x3 = jax.random.normal(k_x2, (N3, Cin3, H3, W3), dtype=jnp.float32)
    fan3 = Cin3 * 9
    bnd3 = 1.0 / (fan3 ** 0.5)
    w3 = jax.random.uniform(k_w2, (Cout3, Cin3, 3, 3), minval=-bnd3, maxval=bnd3,
                            dtype=jnp.float32)
    b3 = jax.random.uniform(k_b2, (Cout3,), minval=-bnd3, maxval=bnd3,
                            dtype=jnp.float32)
    out3 = jax.block_until_ready(upsample2d_pallas(x3, w3, b3, tile_h=4, cout_tile=128))
    ref3 = jax.block_until_ready(upsample2d_reference(x3, w3, b3))
    assert jnp.allclose(out3, ref3, atol=1e-4, rtol=1e-4)

    print("KERNEL_OK")
</pallas_src>

<mosaic_0001>
module attributes {stable_mosaic.version = 11 : i64} {
  func.func @_upsample_conv_kernel(%arg0: i32, %arg1: i32, %arg2: i32, %arg3: memref<1x1x10x18x4xf32, #tpu.memory_space<vmem>>, %arg4: memref<12x4x8xf32, #tpu.memory_space<vmem>>, %arg5: memref<1x8xf32, #tpu.memory_space<vmem>>, %arg6: memref<1x8x2x16x8xf32, #tpu.memory_space<vmem>>) attributes {dimension_semantics = [#tpu.dimension_semantics<parallel>, #tpu.dimension_semantics<parallel>, #tpu.dimension_semantics<parallel>], iteration_bounds = array<i64: 2, 2, 1>, scalar_prefetch = 0 : i64, scratch_operands = 0 : i64, tpu.core_type = #tpu.core_type<tc>, window_params = [{transform_indices = @transform_0, window_bounds = array<i64: 1, 1, 10, 18, 4>}, {transform_indices = @transform_1, window_bounds = array<i64: 12, 4, 8>}, {transform_indices = @transform_2, window_bounds = array<i64: 1, 8>}, {transform_indices = @transform_3, window_bounds = array<i64: 1, 8, 2, 16, 8>}]} {
    %c0 = arith.constant 0 : index
    %c0_0 = arith.constant 0 : index
    %0 = vector.load %arg5[%c0, %c0_0] : memref<1x8xf32, #tpu.memory_space<vmem>>, vector<1x8xf32>
    %1 = vector.shape_cast %0 : vector<1x8xf32> to vector<8xf32>
    %2 = vector.shape_cast %1 : vector<8xf32> to vector<1x1x8xf32>
    %3 = vector.shape_cast %2 : vector<1x1x8xf32> to vector<1x1x8xf32>
    %4 = vector.broadcast %3 : vector<1x1x8xf32> to vector<8x16x8xf32>
    %c0_1 = arith.constant 0 : index
    %c0_2 = arith.constant 0 : index
    %c0_3 = arith.constant 0 : index
    %c0_4 = arith.constant 0 : index
    %c0_5 = arith.constant 0 : index
    %5 = vector.load %arg3[%c0_1, %c0_2, %c0_3, %c0_4, %c0_5] : memref<1x1x10x18x4xf32, #tpu.memory_space<vmem>>, vector<1x1x8x16x4xf32>
    %6 = vector.shape_cast %5 : vector<1x1x8x16x4xf32> to vector<8x16x4xf32>
    %c0_6 = arith.constant 0 : index
    %c0_7 = arith.constant 0 : index
    %c0_8 = arith.constant 0 : index
    %7 = vector.load %arg4[%c0_6, %c0_7, %c0_8] : memref<12x4x8xf32, #tpu.memory_space<vmem>>, vector<1x4x8xf32>
    %8 = vector.shape_cast %7 : vector<1x4x8xf32> to vector<4x8xf32>
    "tpu.trace_start"() <{level = 10 : i32, message = "hwc,cd->hwd"}> : () -> ()
    %cst = arith.constant dense<0.000000e+00> : vector<8x16x8xf32>
    %9 = tpu.matmul %6, %8, %cst {dimension_numbers = #tpu.dot_dimension_numbers<[2], [0], [0, 1], [1], [0, 0, 0, 1, 1, 1], [], []>} : vector<8x16x4xf32>, vector<4x8xf32>, vector<8x16x8xf32> -> vector<8x16x8xf32>
    "tpu.trace_stop"() : () -> ()
    %10 = arith.addf %4, %9 : vector<8x16x8xf32>
    %c0_9 = arith.constant 0 : index
    %c0_10 = arith.constant 0 : index
    %c0_11 = arith.constant 0 : index
    %c1 = arith.constant 1 : index
    %c0_12 = arith.constant 0 : index
    %11 = vector.load %arg3[%c0_9, %c0_10, %c0_11, %c1, %c0_12] : memref<1x1x10x18x4xf32, #tpu.memory_space<vmem>>, vector<1x1x8x16x4xf32>
    %12 = vector.shape_cast %11 : vector<1x1x8x16x4xf32> to vector<8x16x4xf32>
    %c1_13 = arith.constant 1 : index
    %c0_14 = arith.constant 0 : index
    %c0_15 = arith.constant 0 : index
    %13 = vector.load %arg4[%c1_13, %c0_14, %c0_15] : memref<12x4x8xf32, #tpu.memory_space<vmem>>, vector<1x4x8xf32>
    %14 = vector.shape_cast %13 : vector<1x4x8xf32> to vector<4x8xf32>
    "tpu.trace_start"() <{level = 10 : i32, message = "hwc,cd->hwd"}> : () -> ()
    %cst_16 = arith.constant dense<0.000000e+00> : vector<8x16x8xf32>
    %15 = tpu.matmul %12, %14, %cst_16 {dimension_numbers = #tpu.dot_dimension_numbers<[2], [0], [0, 1], [1], [0, 0, 0, 1, 1, 1], [], []>} : vector<8x16x4xf32>, vector<4x8xf32>, vector<8x16x8xf32> -> vector<8x16x8xf32>
    "tpu.trace_stop"() : () -> ()
    %16 = arith.addf %10, %15 : vector<8x16x8xf32>
    %c0_17 = arith.constant 0 : index
    %c0_18 = arith.constant 0 : index
    %c0_19 = arith.constant 0 : index
    %c2 = arith.constant 2 : index
    %c0_20 = arith.constant 0 : index
    %17 = vector.load %arg3[%c0_17, %c0_18, %c0_19, %c2, %c0_20] : memref<1x1x10x18x4xf32, #tpu.memory_space<vmem>>, vector<1x1x8x16x4xf32>
    %18 = vector.shape_cast %17 : vector<1x1x8x16x4xf32> to vector<8x16x4xf32>
    %c2_21 = arith.constant 2 : index
    %c0_22 = arith.constant 0 : index
    %c0_23 = arith.constant 0 : index
    %19 = vector.load %arg4[%c2_21, %c0_22, %c0_23] : memref<12x4x8xf32, #tpu.memory_space<vmem>>, vector<1x4x8xf32>
    %20 = vector.shape_cast %19 : vector<1x4x8xf32> to vector<4x8xf32>
    "tpu.trace_start"() <{level = 10 : i32, message = "hwc,cd->hwd"}> : () -> ()
    %cst_24 = arith.constant dense<0.000000e+00> : vector<8x16x8xf32>
    %21 = tpu.matmul %18, %20, %cst_24 {dimension_numbers = #tpu.dot_dimension_numbers<[2], [0], [0, 1], [1], [0, 0, 0, 1, 1, 1], [], []>} : vector<8x16x4xf32>, vector<4x8xf32>, vector<8x16x8xf32> -> vector<8x16x8xf32>
    "tpu.trace_stop"() : () -> ()
    %22 = arith.addf %16, %21 : vector<8x16x8xf32>
    %c0_25 = arith.constant 0 : index
    %c0_26 = arith.constant 0 : index
    %c1_27 = arith.constant 1 : index
    %c0_28 = arith.constant 0 : index
    %c0_29 = arith.constant 0 : index
    %23 = vector.load %arg3[%c0_25, %c0_26, %c1_27, %c0_28, %c0_29] : memref<1x1x10x18x4xf32, #tpu.memory_space<vmem>>, vector<1x1x8x16x4xf32>
    %24 = vector.shape_cast %23 : vector<1x1x8x16x4xf32> to vector<8x16x4xf32>
    %c3 = arith.constant 3 : index
    %c0_30 = arith.constant 0 : index
    %c0_31 = arith.constant 0 : index
    %25 = vector.load %arg4[%c3, %c0_30, %c0_31] : memref<12x4x8xf32, #tpu.memory_space<vmem>>, vector<1x4x8xf32>
    %26 = vector.shape_cast %25 : vector<1x4x8xf32> to vector<4x8xf32>
    "tpu.trace_start"() <{level = 10 : i32, message = "hwc,cd->hwd"}> : () -> ()
    %cst_32 = arith.constant dense<0.000000e+00> : vector<8x16x8xf32>
    %27 = tpu.matmul %24, %26, %cst_32 {dimension_numbers = #tpu.dot_dimension_numbers<[2], [0], [0, 1], [1], [0, 0, 0, 1, 1, 1], [], []>} : vector<8x16x4xf32>, vector<4x8xf32>, vector<8x16x8xf32> -> vector<8x16x8xf32>
    "tpu.trace_stop"() : () -> ()
    %28 = arith.addf %22, %27 : vector<8x16x8xf32>
    %c0_33 = arith.constant 0 : index
    %c0_34 = arith.constant 0 : index
    %c1_35 = arith.constant 1 : index
    %c1_36 = arith.constant 1 : index
    %c0_37 = arith.constant 0 : index
    %29 = vector.load %arg3[%c0_33, %c0_34, %c1_35, %c1_36, %c0_37] : memref<1x1x10x18x4xf32, #tpu.memory_space<vmem>>, vector<1x1x8x16x4xf32>
    %30 = vector.shape_cast %29 : vector<1x1x8x16x4xf32> to vector<8x16x4xf32>
    %c4 = arith.constant 4 : index
    %c0_38 = arith.constant 0 : index
    %c0_39 = arith.constant 0 : index
    %31 = vector.load %arg4[%c4, %c0_38, %c0_39] : memref<12x4x8xf32, #tpu.memory_space<vmem>>, vector<1x4x8xf32>
    %32 = vector.shape_cast %31 : vector<1x4x8xf32> to vector<4x8xf32>
    "tpu.trace_start"() <{level = 10 : i32, message = "hwc,cd->hwd"}> : () -> ()
    %cst_40 = arith.constant dense<0.000000e+00> : vector<8x16x8xf32>
    %33 = tpu.matmul %30, %32, %cst_40 {dimension_numbers = #tpu.dot_dimension_numbers<[2], [0], [0, 1], [1], [0, 0, 0, 1, 1, 1], [], []>} : vector<8x16x4xf32>, vector<4x8xf32>, vector<8x16x8xf32> -> vector<8x16x8xf32>
    "tpu.trace_stop"() : () -> ()
    %34 = arith.addf %28, %33 : vector<8x16x8xf32>
    %c0_41 = arith.constant 0 : index
    %c0_42 = arith.constant 0 : index
    %c1_43 = arith.constant 1 : index
    %c2_44 = arith.constant 2 : index
    %c0_45 = arith.constant 0 : index
    %35 = vector.load %arg3[%c0_41, %c0_42, %c1_43, %c2_44, %c0_45] : memref<1x1x10x18x4xf32, #tpu.memory_space<vmem>>, vector<1x1x8x16x4xf32>
    %36 = vector.shape_cast %35 : vector<1x1x8x16x4xf32> to vector<8x16x4xf32>
    %c5 = arith.constant 5 : index
    %c0_46 = arith.constant 0 : index
    %c0_47 = arith.constant 0 : index
    %37 = vector.load %arg4[%c5, %c0_46, %c0_47] : memref<12x4x8xf32, #tpu.memory_space<vmem>>, vector<1x4x8xf32>
    %38 = vector.shape_cast %37 : vector<1x4x8xf32> to vector<4x8xf32>
    "tpu.trace_start"() <{level = 10 : i32, message = "hwc,cd->hwd"}> : () -> ()
    %cst_48 = arith.constant dense<0.000000e+00> : vector<8x16x8xf32>
    %39 = tpu.matmul %36, %38, %cst_48 {dimension_numbers = #tpu.dot_dimension_numbers<[2], [0], [0, 1], [1], [0, 0, 0, 1, 1, 1], [], []>} : vector<8x16x4xf32>, vector<4x8xf32>, vector<8x16x8xf32> -> vector<8x16x8xf32>
    "tpu.trace_stop"() : () -> ()
    %40 = arith.addf %34, %39 : vector<8x16x8xf32>
    %c0_49 = arith.constant 0 : index
    %c0_50 = arith.constant 0 : index
    %c0_51 = arith.constant 0 : index
    %c0_52 = arith.constant 0 : index
    %c0_53 = arith.constant 0 : index
    %41 = vector.load %arg6[%c0_49, %c0_50, %c0_51, %c0_52, %c0_53] : memref<1x8x2x16x8xf32, #tpu.memory_space<vmem>>, vector<1x8x1x16x8xf32>
    %42 = vector.shape_cast %41 : vector<1x8x1x16x8xf32> to vector<8x16x8xf32>
    %43 = vector.shape_cast %40 : vector<8x16x8xf32> to vector<1x8x1x16x8xf32>
    tpu.vector_store %arg6[%c0_49, %c0_50, %c0_51, %c0_52, %c0_53], %43 {strides = array<i32>} : memref<1x8x2x16x8xf32, #tpu.memory_space<vmem>>, vector<1x8x1x16x8xf32>,
    %44 = vector.shape_cast %1 : vector<8xf32> to vector<1x1x8xf32>
    %45 = vector.shape_cast %44 : vector<1x1x8xf32> to vector<1x1x8xf32>
    %46 = vector.broadcast %45 : vector<1x1x8xf32> to vector<8x16x8xf32>
    %c0_54 = arith.constant 0 : index
    %c0_55 = arith.constant 0 : index
    %c1_56 = arith.constant 1 : index
    %c0_57 = arith.constant 0 : index
    %c0_58 = arith.constant 0 : index
    %47 = vector.load %arg3[%c0_54, %c0_55, %c1_56, %c0_57, %c0_58] : memref<1x1x10x18x4xf32, #tpu.memory_space<vmem>>, vector<1x1x8x16x4xf32>
    %48 = vector.shape_cast %47 : vector<1x1x8x16x4xf32> to vector<8x16x4xf32>
    %c6 = arith.constant 6 : index
    %c0_59 = arith.constant 0 : index
    %c0_60 = arith.constant 0 : index
    %49 = vector.load %arg4[%c6, %c0_59, %c0_60] : memref<12x4x8xf32, #tpu.memory_space<vmem>>, vector<1x4x8xf32>
    %50 = vector.shape_cast %49 : vector<1x4x8xf32> to vector<4x8xf32>
    "tpu.trace_start"() <{level = 10 : i32, message = "hwc,cd->hwd"}> : () -> ()
    %cst_61 = arith.constant dense<0.000000e+00> : vector<8x16x8xf32>
    %51 = tpu.matmul %48, %50, %cst_61 {dimension_numbers = #tpu.dot_dimension_numbers<[2], [0], [0, 1], [1], [0, 0, 0, 1, 1, 1], [], []>} : vector<8x16x4xf32>, vector<4x8xf32>, vector<8x16x8xf32> -> vector<8x16x8xf32>
    "tpu.trace_stop"() : () -> ()
    %52 = arith.addf %46, %51 : vector<8x16x8xf32>
    %c0_62 = arith.constant 0 : index
    %c0_63 = arith.constant 0 : index
    %c1_64 = arith.constant 1 : index
    %c1_65 = arith.constant 1 : index
    %c0_66 = arith.constant 0 : index
    %53 = vector.load %arg3[%c0_62, %c0_63, %c1_64, %c1_65, %c0_66] : memref<1x1x10x18x4xf32, #tpu.memory_space<vmem>>, vector<1x1x8x16x4xf32>
    %54 = vector.shape_cast %53 : vector<1x1x8x16x4xf32> to vector<8x16x4xf32>
    %c7 = arith.constant 7 : index
    %c0_67 = arith.constant 0 : index
    %c0_68 = arith.constant 0 : index
    %55 = vector.load %arg4[%c7, %c0_67, %c0_68] : memref<12x4x8xf32, #tpu.memory_space<vmem>>, vector<1x4x8xf32>
    %56 = vector.shape_cast %55 : vector<1x4x8xf32> to vector<4x8xf32>
    "tpu.trace_start"() <{level = 10 : i32, message = "hwc,cd->hwd"}> : () -> ()
    %cst_69 = arith.constant dense<0.000000e+00> : vector<8x16x8xf32>
    %57 = tpu.matmul %54, %56, %cst_69 {dimension_numbers = #tpu.dot_dimension_numbers<[2], [0], [0, 1], [1], [0, 0, 0, 1, 1, 1], [], []>} : vector<8x16x4xf32>, vector<4x8xf32>, vector<8x16x8xf32> -> vector<8x16x8xf32>
    "tpu.trace_stop"() : () -> ()
    %58 = arith.addf %52, %57 : vector<8x16x8xf32>
    %c0_70 = arith.constant 0 : index
    %c0_71 = arith.constant 0 : index
    %c1_72 = arith.constant 1 : index
    %c2_73 = arith.constant 2 : index
    %c0_74 = arith.constant 0 : index
    %59 = vector.load %arg3[%c0_70, %c0_71, %c1_72, %c2_73, %c0_74] : memref<1x1x10x18x4xf32, #tpu.memory_space<vmem>>, vector<1x1x8x16x4xf32>
    %60 = vector.shape_cast %59 : vector<1x1x8x16x4xf32> to vector<8x16x4xf32>
    %c8 = arith.constant 8 : index
    %c0_75 = arith.constant 0 : index
    %c0_76 = arith.constant 0 : index
    %61 = vector.load %arg4[%c8, %c0_75, %c0_76] : memref<12x4x8xf32, #tpu.memory_space<vmem>>, vector<1x4x8xf32>
    %62 = vector.shape_cast %61 : vector<1x4x8xf32> to vector<4x8xf32>
    "tpu.trace_start"() <{level = 10 : i32, message = "hwc,cd->hwd"}> : () -> ()
    %cst_77 = arith.constant dense<0.000000e+00> : vector<8x16x8xf32>
    %63 = tpu.matmul %60, %62, %cst_77 {dimension_numbers = #tpu.dot_dimension_numbers<[2], [0], [0, 1], [1], [0, 0, 0, 1, 1, 1], [], []>} : vector<8x16x4xf32>, vector<4x8xf32>, vector<8x16x8xf32> -> vector<8x16x8xf32>
    "tpu.trace_stop"() : () -> ()
    %64 = arith.addf %58, %63 : vector<8x16x8xf32>
    %c0_78 = arith.constant 0 : index
    %c0_79 = arith.constant 0 : index
    %c2_80 = arith.constant 2 : index
    %c0_81 = arith.constant 0 : index
    %c0_82 = arith.constant 0 : index
    %65 = vector.load %arg3[%c0_78, %c0_79, %c2_80, %c0_81, %c0_82] : memref<1x1x10x18x4xf32, #tpu.memory_space<vmem>>, vector<1x1x8x16x4xf32>
    %66 = vector.shape_cast %65 : vector<1x1x8x16x4xf32> to vector<8x16x4xf32>
    %c9 = arith.constant 9 : index
    %c0_83 = arith.constant 0 : index
    %c0_84 = arith.constant 0 : index
    %67 = vector.load %arg4[%c9, %c0_83, %c0_84] : memref<12x4x8xf32, #tpu.memory_space<vmem>>, vector<1x4x8xf32>
    %68 = vector.shape_cast %67 : vector<1x4x8xf32> to vector<4x8xf32>
    "tpu.trace_start"() <{level = 10 : i32, message = "hwc,cd->hwd"}> : () -> ()
    %cst_85 = arith.constant dense<0.000000e+00> : vector<8x16x8xf32>
    %69 = tpu.matmul %66, %68, %cst_85 {dimension_numbers = #tpu.dot_dimension_numbers<[2], [0], [0, 1], [1], [0, 0, 0, 1, 1, 1], [], []>} : vector<8x16x4xf32>, vector<4x8xf32>, vector<8x16x8xf32> -> vector<8x16x8xf32>
    "tpu.trace_stop"() : () -> ()
    %70 = arith.addf %64, %69 : vector<8x16x8xf32>
    %c0_86 = arith.constant 0 : index
    %c0_87 = arith.constant 0 : index
    %c2_88 = arith.constant 2 : index
    %c1_89 = arith.constant 1 : index
    %c0_90 = arith.constant 0 : index
    %71 = vector.load %arg3[%c0_86, %c0_87, %c2_88, %c1_89, %c0_90] : memref<1x1x10x18x4xf32, #tpu.memory_space<vmem>>, vector<1x1x8x16x4xf32>
    %72 = vector.shape_cast %71 : vector<1x1x8x16x4xf32> to vector<8x16x4xf32>
    %c10 = arith.constant 10 : index
    %c0_91 = arith.constant 0 : index
    %c0_92 = arith.constant 0 : index
    %73 = vector.load %arg4[%c10, %c0_91, %c0_92] : memref<12x4x8xf32, #tpu.memory_space<vmem>>, vector<1x4x8xf32>
    %74 = vector.shape_cast %73 : vector<1x4x8xf32> to vector<4x8xf32>
    "tpu.trace_start"() <{level = 10 : i32, message = "hwc,cd->hwd"}> : () -> ()
    %cst_93 = arith.constant dense<0.000000e+00> : vector<8x16x8xf32>
    %75 = tpu.matmul %72, %74, %cst_93 {dimension_numbers = #tpu.dot_dimension_numbers<[2], [0], [0, 1], [1], [0, 0, 0, 1, 1, 1], [], []>} : vector<8x16x4xf32>, vector<4x8xf32>, vector<8x16x8xf32> -> vector<8x16x8xf32>
    "tpu.trace_stop"() : () -> ()
    %76 = arith.addf %70, %75 : vector<8x16x8xf32>
    %c0_94 = arith.constant 0 : index
    %c0_95 = arith.constant 0 : index
    %c2_96 = arith.constant 2 : index
    %c2_97 = arith.constant 2 : index
    %c0_98 = arith.constant 0 : index
    %77 = vector.load %arg3[%c0_94, %c0_95, %c2_96, %c2_97, %c0_98] : memref<1x1x10x18x4xf32, #tpu.memory_space<vmem>>, vector<1x1x8x16x4xf32>
    %78 = vector.shape_cast %77 : vector<1x1x8x16x4xf32> to vector<8x16x4xf32>
    %c11 = arith.constant 11 : index
    %c0_99 = arith.constant 0 : index
    %c0_100 = arith.constant 0 : index
    %79 = vector.load %arg4[%c11, %c0_99, %c0_100] : memref<12x4x8xf32, #tpu.memory_space<vmem>>, vector<1x4x8xf32>
    %80 = vector.shape_cast %79 : vector<1x4x8xf32> to vector<4x8xf32>
    "tpu.trace_start"() <{level = 10 : i32, message = "hwc,cd->hwd"}> : () -> ()
    %cst_101 = arith.constant dense<0.000000e+00> : vector<8x16x8xf32>
    %81 = tpu.matmul %78, %80, %cst_101 {dimension_numbers = #tpu.dot_dimension_numbers<[2], [0], [0, 1], [1], [0, 0, 0, 1, 1, 1], [], []>} : vector<8x16x4xf32>, vector<4x8xf32>, vector<8x16x8xf32> -> vector<8x16x8xf32>
    "tpu.trace_stop"() : () -> ()
    %82 = arith.addf %76, %81 : vector<8x16x8xf32>
    %c0_102 = arith.constant 0 : index
    %c0_103 = arith.constant 0 : index
    %c1_104 = arith.constant 1 : index
    %c0_105 = arith.constant 0 : index
    %c0_106 = arith.constant 0 : index
    %83 = vector.load %arg6[%c0_102, %c0_103, %c1_104, %c0_105, %c0_106] : memref<1x8x2x16x8xf32, #tpu.memory_space<vmem>>, vector<1x8x1x16x8xf32>
    %84 = vector.shape_cast %83 : vector<1x8x1x16x8xf32> to vector<8x16x8xf32>
    %85 = vector.shape_cast %82 : vector<8x16x8xf32> to vector<1x8x1x16x8xf32>
    tpu.vector_store %arg6[%c0_102, %c0_103, %c1_104, %c0_105, %c0_106], %85 {strides = array<i32>} : memref<1x8x2x16x8xf32, #tpu.memory_space<vmem>>, vector<1x8x1x16x8xf32>,
    return
  }
  func.func @transform_0(%arg0: i32, %arg1: i32, %arg2: i32) -> (i32, i32, i32, i32, i32) {
    %c0_i32 = arith.constant 0 : i32
    %c0_i32_0 = arith.constant 0 : i32
    %c0_i32_1 = arith.constant 0 : i32
    %c0_i32_2 = arith.constant 0 : i32
    return %arg0, %arg1, %c0_i32, %c0_i32_0, %c0_i32_1 : i32, i32, i32, i32, i32
  }
  func.func @transform_1(%arg0: i32, %arg1: i32, %arg2: i32) -> (i32, i32, i32) {
    %c0_i32 = arith.constant 0 : i32
    %c0_i32_0 = arith.constant 0 : i32
    %c0_i32_1 = arith.constant 0 : i32
    return %c0_i32, %c0_i32_0, %arg2 : i32, i32, i32
  }
  func.func @transform_2(%arg0: i32, %arg1: i32, %arg2: i32) -> (i32, i32) {
    %c0_i32 = arith.constant 0 : i32
    %c0_i32_0 = arith.constant 0 : i32
    return %c0_i32, %arg2 : i32, i32
  }
  func.func @transform_3(%arg0: i32, %arg1: i32, %arg2: i32) -> (i32, i32, i32, i32, i32) {
    %c0_i32 = arith.constant 0 : i32
    %c0_i32_0 = arith.constant 0 : i32
    %c0_i32_1 = arith.constant 0 : i32
    return %arg0, %arg1, %c0_i32, %c0_i32_0, %arg2 : i32, i32, i32, i32, i32
  }
}

</mosaic_0001>

<llo_original>
// kernel: tpu_custom_call.1
$region0: #{tpu_custom_call.1}
  #allocation0 [shape = 'u32[]', space=smem, size = 0x4, offset = 0x4, fixed_abs, tag = 'smem constant byte address 0x4 - core index']
  #allocation1 [shape = 'u32[144,128]{1,0:T(1,128)}', space=vmem, size = 0x12000, scoped, tag = 'internal scratch']
  %s0 = inlined_call_operand.vmem [shape: f32[2,2,10,18,4], index: 0, kind: input, shape index: {}]
  %s1 = inlined_call_operand.vmem [shape: f32[12,4,8], index: 1, kind: input, shape index: {}]
  %s2 = inlined_call_operand.vmem [shape: f32[1,8], index: 2, kind: input, shape index: {}]
  %s3 = inlined_call_operand.vmem [shape: f32[2,16,2,16,8], index: 3, kind: output, shape index: {}]
  %s4 = sld [smem:[#allocation0]]
  $region45: #{tpu_custom_call.1} parent=0
    _
  %s6 = ssub.s32 1, %s4
  %s7 = scalar_select 0, %s6, %s4
  loop: start=0, step=1, limit=6
  $region2: #{tpu_custom_call.1} parent=0 // loop_pre_header
    _
  $region3: #{tpu_custom_call.1} parent=0 // loop_header
    %s9 = sphi 0, %s13
    %p10 = scmp.ge.s32.totalorder %s9, 6
    %s16 = sphi 0, %s35
    %s17 = sphi 0, %s31
    %s18 = sphi 0, %s27
    %s19 = sphi 0, %s16
    %s20 = sphi 0, %s17
    %s21 = sphi 0, %s18
    %s22 = sphi 0, %s19
    %s23 = sphi 0, %s20
    %s24 = sphi 0, %s21
    %s40 = sphi 0, %s42
    %s43 = sphi 0, %s40
    %s44 = sphi 0, %s43
    %s60 = sphi 0, %s44
    %s66 = sphi 0, %s68
    %s69 = sphi 0, %s66
    %s70 = sphi 0, %s69
    %s86 = sphi 0, %s70
    %s92 = sphi 0, %s94
    %s95 = sphi 0, %s92
    %s96 = sphi 0, %s95
    %s112 = sphi 0, %s96
    %s122 = sphi 0, %s124
    %s125 = sphi 0, %s122
    %s126 = sphi 0, %s125
    %s142 = sphi 0, %s126
  $region4: #{tpu_custom_call.1} parent=0 // loop_header_branch
    %12 = sbr.rel (%p10) target = $region8
  $region5: #{tpu_custom_call.1} parent=0 // loop_body
    %s14 = ssub.s32 %s9, 1
    %s15 = ssub.s32 %s9, 2
    %s25 = sadd.s32 1, %s18
    %p26 = scmp.ge.s32.totalorder %s25, 1
    %s27 = scalar_select %p26, 0, %s25
    %s28 = sadd.s32 1, %s17
    %s29 = scalar_select %p26, %s28, %s17
    %p30 = scmp.ge.s32.totalorder %s29, 2
    %s31 = scalar_select %p30, 0, %s29
    %s32 = sadd.s32 1, %s16
    %s33 = scalar_select %p30, %s32, %s16
    %p34 = scmp.ge.s32.totalorder %s33, 2
    %s35 = scalar_select %p34, 0, %s33
    %s36 = ssub.s32 %s16, %s35
    %s37 = ssub.s32 %s17, %s31
    %s38 = sor.u32 %s36, %s37
    %p39 = scmp.eq.s32.totalorder %s38, 0
    %s41 = sadd.s32 %s40, 1
    %s42 = scalar_select %p39, %s40, %s41
    %p45 = pneg %p39
    %p46 = scmp.eq.s32.totalorder %s9, 3
    %p47 = por %p45, %p46
    %p48 = scmp.ne.s32.totalorder %s40, %s43
    %p49 = scmp.eq.s32.totalorder %s9, 0
    %p50 = por %p48, %p49
    %p51 = scmp.ne.s32.totalorder %s40, %s43
    %p52 = scmp.eq.s32.totalorder %s14, 3
    %p53 = por %p51, %p52
    %p54 = scmp.ne.s32.totalorder %s43, %s44
    %p55 = scmp.eq.s32.totalorder %s14, 0
    %p56 = por %p54, %p55
    %p57 = scmp.ne.s32.totalorder %s43, %s44
    %p58 = scmp.eq.s32.totalorder %s15, 3
    %p59 = por %p57, %p58
    %p61 = scmp.ne.s32.totalorder %s44, %s60
    %p62 = scmp.eq.s32.totalorder %s15, 0
    %p63 = por %p61, %p62
    %s64 = ssub.s32 %s18, %s27
    %p65 = scmp.eq.s32.totalorder %s64, 0
    %s67 = sadd.s32 %s66, 1
    %s68 = scalar_select %p65, %s66, %s67
    %p71 = pneg %p65
    %p72 = scmp.eq.s32.totalorder %s9, 3
    %p73 = por %p71, %p72
    %p74 = scmp.ne.s32.totalorder %s66, %s69
    %p75 = scmp.eq.s32.totalorder %s9, 0
    %p76 = por %p74, %p75
    %p77 = scmp.ne.s32.totalorder %s66, %s69
    %p78 = scmp.eq.s32.totalorder %s14, 3
    %p79 = por %p77, %p78
    %p80 = scmp.ne.s32.totalorder %s69, %s70
    %p81 = scmp.eq.s32.totalorder %s14, 0
    %p82 = por %p80, %p81
    %p83 = scmp.ne.s32.totalorder %s69, %s70
    %p84 = scmp.eq.s32.totalorder %s15, 3
    %p85 = por %p83, %p84
    %p87 = scmp.ne.s32.totalorder %s70, %s86
    %p88 = scmp.eq.s32.totalorder %s15, 0
    %p89 = por %p87, %p88
    %s90 = ssub.s32 %s18, %s27
    %p91 = scmp.eq.s32.totalorder %s90, 0
    %s93 = sadd.s32 %s92, 1
    %s94 = scalar_select %p91, %s92, %s93
    %p97 = pneg %p91
    %p98 = scmp.eq.s32.totalorder %s9, 3
    %p99 = por %p97, %p98
    %p100 = scmp.ne.s32.totalorder %s92, %s95
    %p101 = scmp.eq.s32.totalorder %s9, 0
    %p102 = por %p100, %p101
    %p103 = scmp.ne.s32.totalorder %s92, %s95
    %p104 = scmp.eq.s32.totalorder %s14, 3
    %p105 = por %p103, %p104
    %p106 = scmp.ne.s32.totalorder %s95, %s96
    %p107 = scmp.eq.s32.totalorder %s14, 0
    %p108 = por %p106, %p107
    %p109 = scmp.ne.s32.totalorder %s95, %s96
    %p110 = scmp.eq.s32.totalorder %s15, 3
    %p111 = por %p109, %p110
    %p113 = scmp.ne.s32.totalorder %s96, %s112
    %p114 = scmp.eq.s32.totalorder %s15, 0
    %p115 = por %p113, %p114
    %s116 = ssub.s32 %s16, %s35
    %s117 = ssub.s32 %s17, %s31
    %s118 = sor.u32 %s116, %s117
    %s119 = ssub.s32 %s18, %s27
    %s120 = sor.u32 %s118, %s119
    %p121 = scmp.eq.s32.totalorder %s120, 0
    %s123 = sadd.s32 %s122, 1
    %s124 = scalar_select %p121, %s122, %s123
    %p127 = pneg %p121
    %p128 = scmp.eq.s32.totalorder %s9, 3
    %p129 = por %p127, %p128
    %p130 = scmp.ne.s32.totalorder %s122, %s125
    %p131 = scmp.eq.s32.totalorder %s9, 0
    %p132 = por %p130, %p131
    %p133 = scmp.ne.s32.totalorder %s122, %s125
    %p134 = scmp.eq.s32.totalorder %s14, 3
    %p135 = por %p133, %p134
    %p136 = scmp.ne.s32.totalorder %s125, %s126
    %p137 = scmp.eq.s32.totalorder %s14, 0
    %p138 = por %p136, %p137
    %p139 = scmp.ne.s32.totalorder %s125, %s126
    %p140 = scmp.eq.s32.totalorder %s15, 3
    %p141 = por %p139, %p140
    %p143 = scmp.ne.s32.totalorder %s126, %s142
    %p144 = scmp.eq.s32.totalorder %s15, 0
    %p145 = por %p143, %p144
    %p146 = scmp.le.s32.totalorder 1, %s9
    %p147 = scmp.lt.s32.totalorder %s9, 5
    %p148 = pnand %p146, %p147
    %p149 = pneg %p148
    // Predicated region
    $region9: #{tpu_custom_call.1} parent=5 // pred_check
      _
    $region10: #{tpu_custom_call.1} parent=5 // pred_check_branch
      %151 = sbr.rel (%p148) target = $region12
    $region11: #{tpu_custom_call.1} parent=5 // pred_region
      %s152 = ssub.s32 %s9, 1
      // Predicated region
      $region13: #{tpu_custom_call.1} parent=11 // pred_check
        %p153 = pneg %p82
      $region14: #{tpu_custom_call.1} parent=11 // pred_check_branch
        %155 = sbr.rel (%p153) target = $region16
      $region15: #{tpu_custom_call.1} parent=11 // pred_region
        %p156 = scmp.lt.s32.totalorder %s21, 0
        %s157 = scalar_select %p156, %s21, 0
        %s158 = smul.addr %s157, 4
        %s159 = scalar_lea.vmem %s1, %s158
      $region16: #{tpu_custom_call.1} parent=11 // pred_fallthru
        _
      // Predicated region
      $region17: #{tpu_custom_call.1} parent=11 // pred_check
        %p160 = pneg %p108
      $region18: #{tpu_custom_call.1} parent=11 // pred_check_branch
        %162 = sbr.rel (%p160) target = $region20
      $region19: #{tpu_custom_call.1} parent=11 // pred_region
        %p163 = scmp.lt.s32.totalorder %s21, 0
        %s164 = scalar_select %p163, %s21, 0
        %s165 = scalar_lea.vmem %s2, %s164
      $region20: #{tpu_custom_call.1} parent=11 // pred_fallthru
        _
    $region12: #{tpu_custom_call.1} parent=5 // pred_fallthru
      _
    %p166 = scmp.lt.s32.totalorder %s9, 4
    // Predicated region
    $region21: #{tpu_custom_call.1} parent=5 // pred_check
      %p167 = pneg %p166
    $region22: #{tpu_custom_call.1} parent=5 // pred_check_branch
      %169 = sbr.rel (%p167) target = $region24
    $region23: #{tpu_custom_call.1} parent=5 // pred_region
      // Predicated region
      $region25: #{tpu_custom_call.1} parent=23 // pred_check
        %p170 = pneg %p50
      $region26: #{tpu_custom_call.1} parent=23 // pred_check_branch
        %172 = sbr.rel (%p170) target = $region28
      $region27: #{tpu_custom_call.1} parent=23 // pred_region
        %p173 = scmp.lt.s32.totalorder %s16, 1
        %s174 = scalar_select %p173, %s16, 1
        %p175 = scmp.lt.s32.totalorder %s17, 1
        %s176 = scalar_select %p175, %s17, 1
        %s177 = smul.addr %s176, 30
        %s178 = smul.addr %s174, 60
        %s179 = sadd.s32 %s177, %s178
        %s180 = smul.addr %s179, 8
        %s181 = scalar_lea.vmem %s0, %s180
      $region28: #{tpu_custom_call.1} parent=23 // pred_fallthru
        _
    $region24: #{tpu_custom_call.1} parent=5 // pred_fallthru
      _
    %p182 = scmp.le.s32.totalorder 1, %s9
    %p183 = scmp.lt.s32.totalorder %s9, 5
    %p184 = pnand %p182, %p183
    %p185 = pneg %p184
    // Predicated region
    $region29: #{tpu_custom_call.1} parent=5 // pred_check
      _
    $region30: #{tpu_custom_call.1} parent=5 // pred_check_branch
      %187 = sbr.rel (%p184) target = $region32
    $region31: #{tpu_custom_call.1} parent=5 // pred_region
      %s188 = ssub.s32 %s9, 1
      %p189 = scmp.lt.s32.totalorder %s19, 1
      %s190 = scalar_select %p189, %s19, 1
      %p191 = scmp.lt.s32.totalorder %s20, 1
      %s192 = scalar_select %p191, %s20, 1
      %s193 = smul.addr %s192, 30
      %s194 = smul.addr %s190, 60
      %s195 = sadd.s32 %s193, %s194
      %s196 = smul.addr %s195, 8
      %s197 = scalar_lea.vmem %s0, %s196
      %p198 = pneg %p56
      %p199 = pneg %p53
      %p200 = scmp.lt.s32.totalorder %s21, 0
      %s201 = scalar_select %p200, %s21, 0
      %s202 = smul.addr %s201, 4
      %s203 = scalar_lea.vmem %s1, %s202
      %p204 = pneg %p82
      %p205 = pneg %p79
      %p206 = scmp.lt.s32.totalorder %s21, 0
      %s207 = scalar_select %p206, %s21, 0
      %s208 = scalar_lea.vmem %s2, %s207
      %p209 = pneg %p108
      %p210 = pneg %p105
      %p211 = pneg %p138
      %p212 = pneg %p135
      %s213 = smul.u32 8, %s20
      %p214 = scmp.lt.s32.totalorder %s19, 1
      %s215 = scalar_select %p214, %s19, 1
      %p216 = scmp.lt.s32.totalorder %s213, 15
      %s217 = scalar_select %p216, %s213, 15
      %p218 = scmp.lt.s32.totalorder %s21, 0
      %s219 = scalar_select %p218, %s21, 0
      %s220 = smul.addr %s217, 4
      %s221 = sadd.s32 %s219, %s220
      %s222 = smul.addr %s215, 64
      %s223 = sadd.s32 %s221, %s222
      %s224 = smul.addr %s223, 8
      %s225 = scalar_lea.vmem %s3, %s224
      %p226 = scmp.lt.s32.totalorder %s19, 1
      %s227 = scalar_select %p226, %s19, 1
      %p228 = scmp.lt.s32.totalorder %s20, 1
      %s229 = scalar_select %p228, %s20, 1
      %s230 = smul.addr %s229, 30
      %s231 = smul.addr %s227, 60
      %s232 = sadd.s32 %s230, %s231
      %s233 = smul.addr %s232, 8
      %s234 = scalar_lea.vmem %s0, %s233
      %p235 = scmp.lt.s32.totalorder %s21, 0
      %s236 = scalar_select %p235, %s21, 0
      %s237 = smul.addr %s236, 4
      %s238 = scalar_lea.vmem %s1, %s237
      %p239 = scmp.lt.s32.totalorder %s21, 0
      %s240 = scalar_select %p239, %s21, 0
      %s241 = scalar_lea.vmem %s2, %s240
      %s242 = smul.u32 8, %s20
      %p243 = scmp.lt.s32.totalorder %s19, 1
      %s244 = scalar_select %p243, %s19, 1
      %p245 = scmp.lt.s32.totalorder %s242, 15
      %s246 = scalar_select %p245, %s242, 15
      %p247 = scmp.lt.s32.totalorder %s21, 0
      %s248 = scalar_select %p247, %s21, 0
      %s249 = smul.addr %s246, 4
      %s250 = sadd.s32 %s248, %s249
      %s251 = smul.addr %s244, 64
      %s252 = sadd.s32 %s250, %s251
      %s253 = smul.addr %s252, 8
      %s254 = scalar_lea.vmem %s3, %s253
      %s255 = smul.u32 8, %s20
      %v256 = vld [vmem:[%s241] sm:$0x1]
      %v258 = vlaneseq
      %v259 = vshrl.u32 %v258, 7
      %v260 = vsub.s32 0, %v259
      %v261 = vrot.slane %v256, %v260
      %v263 = vld [vmem:[%s234] sm:$0xff]
      %v264 = vld [vmem:[%s234 + $0x8] sm:$0xff]
      %v265 = vld [vmem:[%s234 + $0x18] sm:$0xff]
      %v266 = vld [vmem:[%s234 + $0x20] sm:$0xff]
      %v267 = vld [vmem:[%s234 + $0x30] sm:$0xff]
      %v268 = vld [vmem:[%s234 + $0x38] sm:$0xff]
      %v269 = vld [vmem:[%s234 + $0x48] sm:$0xff]
      %v270 = vld [vmem:[%s234 + $0x50] sm:$0xff]
      %v271 = vld [vmem:[%s234 + $0x60] sm:$0xff]
      %v272 = vld [vmem:[%s234 + $0x68] sm:$0xff]
      %v273 = vld [vmem:[%s234 + $0x78] sm:$0xff]
      %v274 = vld [vmem:[%s234 + $0x80] sm:$0xff]
      %v275 = vld [vmem:[%s234 + $0x90] sm:$0xff]
      %v276 = vld [vmem:[%s234 + $0x98] sm:$0xff]
      %v277 = vld [vmem:[%s234 + $0xa8] sm:$0xff]
      %v278 = vld [vmem:[%s234 + $0xb0] sm:$0xff]
      %v279 = vld [vmem:[%s238] sm:$0xf]
      %vm280 = vcmask 31744
      %v282 = vsel %vm280, %v263, 0
      %v285 = vsel %vm280, %v264, 0
      %v288 = vsel %vm280, %v265, 0
      %v291 = vsel %vm280, %v266, 0
      %v294 = vsel %vm280, %v267, 0
      %v297 = vsel %vm280, %v268, 0
      %v300 = vsel %vm280, %v269, 0
      %v303 = vsel %vm280, %v270, 0
      %v306 = vsel %vm280, %v271, 0
      %v309 = vsel %vm280, %v272, 0
      %v312 = vsel %vm280, %v273, 0
      %v315 = vsel %vm280, %v274, 0
      %v318 = vsel %vm280, %v275, 0
      %v321 = vsel %vm280, %v276, 0
      %v324 = vsel %vm280, %v277, 0
      %v327 = vsel %vm280, %v278, 0
      %vm329 = vcmask 1043456
      %v331 = vsel %vm329, %v279, 0
      %333 = vmatprep.subr.mxu0 0.0
      %334 = vmatpush1.msra.mxu0 %v331
      %335 = vmatprep.subr.mxu0 0.0
      %336 = vmatpush1.msra.mxu0 0.0
      %337 = vmatprep.subr.mxu0 0.0
      %338 = vmatpush1.msra.mxu0 0.0
      %339 = vmatprep.subr.mxu0 0.0
      %340 = vmatpush1.msra.mxu0 0.0
      %341 = vmatprep.subr.mxu0 0.0
      %342 = vmatpush1.msra.mxu0 0.0
      %343 = vmatprep.subr.mxu0 0.0
      %344 = vmatpush1.msra.mxu0 0.0
      %345 = vmatprep.subr.mxu0 0.0
      %346 = vmatpush1.msra.mxu0 0.0
      %347 = vmatprep.subr.mxu0 0.0
      %348 = vmatpush1.msra.mxu0 0.0
      %349 = vmatprep.subr.mxu0 0.0
      %350 = vmatpush1.msra.mxu0 0.0
      %351 = vmatprep.subr.mxu0 0.0
      %352 = vmatpush1.msra.mxu0 0.0
      %353 = vmatprep.subr.mxu0 0.0
      %354 = vmatpush1.msra.mxu0 0.0
      %355 = vmatprep.subr.mxu0 0.0
      %356 = vmatpush1.msra.mxu0 0.0
      %357 = vmatprep.subr.mxu0 0.0
      %358 = vmatpush1.msra.mxu0 0.0
      %359 = vmatprep.subr.mxu0 0.0
      %360 = vmatpush1.msra.mxu0 0.0
      %361 = vmatprep.subr.mxu0 0.0
      %362 = vmatpush1.msra.mxu0 0.0
      %363 = vmatprep.subr.mxu0 0.0
      %364 = vmatpush1.msra.mxu0 0.0
      %365 = vmatprep.subr.mxu0 0.0
      %366 = vmatpush1.msra.mxu0 0.0
      %367 = vmatprep.subr.mxu0 0.0
      %368 = vmatpush1.msra.mxu0 0.0
      %369 = vmatprep.subr.mxu0 0.0
      %370 = vmatpush1.msra.mxu0 0.0
      %371 = vmatprep.subr.mxu0 0.0
      %372 = vmatpush1.msra.mxu0 0.0
      %373 = vmatprep.subr.mxu0 0.0
      %374 = vmatpush1.msra.mxu0 0.0
      %375 = vmatprep.subr.mxu0 0.0
      %376 = vmatpush1.msra.mxu0 0.0
      %377 = vmatprep.subr.mxu0 0.0
      %378 = vmatpush1.msra.mxu0 0.0
      %379 = vmatprep.subr.mxu0 0.0
      %380 = vmatpush1.msra.mxu0 0.0
      %381 = vmatprep.subr.mxu0 0.0
      %382 = vmatpush1.msra.mxu0 0.0
      %383 = vmatprep.subr.mxu0 0.0
      %384 = vmatpush1.msra.mxu0 0.0
      %385 = vmatprep.subr.mxu0 0.0
      %386 = vmatpush1.msra.mxu0 0.0
      %387 = vmatprep.subr.mxu0 0.0
      %388 = vmatpush1.msra.mxu0 0.0
      %389 = vmatprep.subr.mxu0 0.0
      %390 = vmatpush1.msra.mxu0 0.0
      %391 = vmatprep.subr.mxu0 0.0
      %392 = vmatpush1.msra.mxu0 0.0
      %393 = vmatprep.subr.mxu0 0.0
      %394 = vmatpush1.msra.mxu0 0.0
      %395 = vmatprep.subr.mxu0 0.0
      %396 = vmatpush1.msra.mxu0 0.0
      %397 = vmatprep.mubr.f32.mxu0 0.0
      %398 = vmatmul.mubr.f32.gmra.mrb[0].mxu0 %v282
      %v399 = vpop.f32.mrb[0].mxu0
      %v400 = vadd.f32 0.0, %v399
      %v401 = vpop.f32.mrb[0].mxu0
      %402 = vmatprep.mubr.f32.mxu0 0.0
      %403 = vmatmul.mubr.f32.gmra.mrb[0].mxu0 %v285
      %v404 = vpop.f32.mrb[0].mxu0
      %v405 = vadd.f32 0.0, %v404
      %v406 = vpop.f32.mrb[0].mxu0
      %407 = vmatprep.mubr.f32.mxu0 0.0
      %408 = vmatmul.mubr.f32.gmra.mrb[0].mxu0 %v288
      %v409 = vpop.f32.mrb[0].mxu0
      %v410 = vadd.f32 0.0, %v409
      %v411 = vpop.f32.mrb[0].mxu0
      %412 = vmatprep.mubr.f32.mxu0 0.0
      %413 = vmatmul.mubr.f32.gmra.mrb[0].mxu0 %v291
      %v414 = vpop.f32.mrb[0].mxu0
      %v415 = vadd.f32 0.0, %v414
      %v416 = vpop.f32.mrb[0].mxu0
      %417 = vmatprep.mubr.f32.mxu0 0.0
      %418 = vmatmul.mubr.f32.gmra.mrb[0].mxu0 %v294
      %v419 = vpop.f32.mrb[0].mxu0
      %v420 = vadd.f32 0.0, %v419
      %v421 = vpop.f32.mrb[0].mxu0
      %422 = vmatprep.mubr.f32.mxu0 0.0
      %423 = vmatmul.mubr.f32.gmra.mrb[0].mxu0 %v297
      %v424 = vpop.f32.mrb[0].mxu0
      %v425 = vadd.f32 0.0, %v424
      %v426 = vpop.f32.mrb[0].mxu0
      %427 = vmatprep.mubr.f32.mxu0 0.0
      %428 = vmatmul.mubr.f32.gmra.mrb[0].mxu0 %v300
      %v429 = vpop.f32.mrb[0].mxu0
      %v430 = vadd.f32 0.0, %v429
      %v431 = vpop.f32.mrb[0].mxu0
      %432 = vmatprep.mubr.f32.mxu0 0.0
      %433 = vmatmul.mubr.f32.gmra.mrb[0].mxu0 %v303
      %v434 = vpop.f32.mrb[0].mxu0
      %v435 = vadd.f32 0.0, %v434
      %v436 = vpop.f32.mrb[0].mxu0
      %437 = vmatprep.mubr.f32.mxu0 0.0
      %438 = vmatmul.mubr.f32.gmra.mrb[0].mxu0 %v306
      %v439 = vpop.f32.mrb[0].mxu0
      %v440 = vadd.f32 0.0, %v439
      %v441 = vpop.f32.mrb[0].mxu0
      %442 = vmatprep.mubr.f32.mxu0 0.0
      %443 = vmatmul.mubr.f32.gmra.mrb[0].mxu0 %v309
      %v444 = vpop.f32.mrb[0].mxu0
      %v445 = vadd.f32 0.0, %v444
      %v446 = vpop.f32.mrb[0].mxu0
      %447 = vmatprep.mubr.f32.mxu0 0.0
      %448 = vmatmul.mubr.f32.gmra.mrb[0].mxu0 %v312
      %v449 = vpop.f32.mrb[0].mxu0
      %v450 = vadd.f32 0.0, %v449
      %v451 = vpop.f32.mrb[0].mxu0
      %452 = vmatprep.mubr.f32.mxu0 0.0
      %453 = vmatmul.mubr.f32.gmra.mrb[0].mxu0 %v315
      %v454 = vpop.f32.mrb[0].mxu0
      %v455 = vadd.f32 0.0, %v454
      %v456 = vpop.f32.mrb[0].mxu0
      %457 = vmatprep.mubr.f32.mxu0 0.0
      %458 = vmatmul.mubr.f32.gmra.mrb[0].mxu0 %v318
      %v459 = vpop.f32.mrb[0].mxu0
      %v460 = vadd.f32 0.0, %v459
      %v461 = vpop.f32.mrb[0].mxu0
      %462 = vmatprep.mubr.f32.mxu0 0.0
      %463 = vmatmul.mubr.f32.gmra.mrb[0].mxu0 %v321
      %v464 = vpop.f32.mrb[0].mxu0
      %v465 = vadd.f32 0.0, %v464
      %v466 = vpop.f32.mrb[0].mxu0
      %467 = vmatprep.mubr.f32.mxu0 0.0
      %468 = vmatmul.mubr.f32.gmra.mrb[0].mxu0 %v324
      %v469 = vpop.f32.mrb[0].mxu0
      %v470 = vadd.f32 0.0, %v469
      %v471 = vpop.f32.mrb[0].mxu0
      %472 = vmatprep.mubr.f32.mxu0 0.0
      %473 = vmatmul.mubr.f32.gmra.mrb[0].mxu0 %v327
      %v474 = vpop.f32.mrb[0].mxu0
      %v475 = vadd.f32 0.0, %v474
      %v476 = vpop.f32.mrb[0].mxu0
      %477 = vdwg.mxu0
      %v478 = vadd.f32 %v261, %v400
      %v479 = vadd.f32 %v261, %v405
      %v480 = vadd.f32 %v261, %v410
      %v481 = vadd.f32 %v261, %v415
      %v482 = vadd.f32 %v261, %v420
      %v483 = vadd.f32 %v261, %v425
      %v484 = vadd.f32 %v261, %v430
      %v485 = vadd.f32 %v261, %v435
      %v486 = vadd.f32 %v261, %v440
      %v487 = vadd.f32 %v261, %v445
      %v488 = vadd.f32 %v261, %v450
      %v489 = vadd.f32 %v261, %v455
      %v490 = vadd.f32 %v261, %v460
      %v491 = vadd.f32 %v261, %v465
      %v492 = vadd.f32 %v261, %v470
      %v493 = vadd.f32 %v261, %v475
      %v494 = vld [vmem:[%s234 + $0x1] sm:$0xff]
      %v495 = vld [vmem:[%s234 + $0x9] sm:$0xff]
      %v496 = vld [vmem:[%s234 + $0x19] sm:$0xff]
      %v497 = vld [vmem:[%s234 + $0x21] sm:$0xff]
      %v498 = vld [vmem:[%s234 + $0x31] sm:$0xff]
      %v499 = vld [vmem:[%s234 + $0x39] sm:$0xff]
      %v500 = vld [vmem:[%s234 + $0x49] sm:$0xff]
      %v501 = vld [vmem:[%s234 + $0x51] sm:$0xff]
      %v502 = vld [vmem:[%s234 + $0x61] sm:$0xff]
      %v503 = vld [vmem:[%s234 + $0x69] sm:$0xff]
      %v504 = vld [vmem:[%s234 + $0x79] sm:$0xff]
      %v505 = vld [vmem:[%s234 + $0x81] sm:$0xff]
      %v506 = vld [vmem:[%s234 + $0x91] sm:$0xff]
      %v507 = vld [vmem:[%s234 + $0x99] sm:$0xff]
      %v508 = vld [vmem:[%s234 + $0xa9] sm:$0xff]
      %v509 = vld [vmem:[%s234 + $0xb1] sm:$0xff]
      %s510 = scalar_lea.vmem %s238, 4
      %v511 = vld [vmem:[%s510] sm:$0xf]
      %v513 = vsel %vm280, %v494, 0
      %v516 = vsel %vm280, %v495, 0
      %v519 = vsel %vm280, %v496, 0
      %v522 = vsel %vm280, %v497, 0
      %v525 = vsel %vm280, %v498, 0
      %v528 = vsel %vm280, %v499, 0
      %v531 = vsel %vm280, %v500, 0
      %v534 = vsel %vm280, %v501, 0
      %v537 = vsel %vm280, %v502, 0
      %v540 = vsel %vm280, %v503, 0
      %v543 = vsel %vm280, %v504, 0
      %v546 = vsel %vm280, %v505, 0
      %v549 = vsel %vm280, %v506, 0
      %v552 = vsel %vm280, %v507, 0
      %v555 = vsel %vm280, %v508, 0
      %v558 = vsel %vm280, %v509, 0
      %v561 = vsel %vm329, %v511, 0
      %563 = vmatprep.subr.mxu0 0.0
      %564 = vmatpush1.msra.mxu0 %v561
      %565 = vmatprep.subr.mxu0 0.0
      %566 = vmatpush1.msra.mxu0 0.0
      %567 = vmatprep.subr.mxu0 0.0
      %568 = vmatpush1.msra.mxu0 0.0
      %569 = vmatprep.subr.mxu0 0.0
      %570 = vmatpush1.msra.mxu0 0.0
      %571 = vmatprep.subr.mxu0 0.0
      %572 = vmatpush1.msra.mxu0 0.0
      %573 = vmatprep.subr.mxu0 0.0
      %574 = vmatpush1.msra.mxu0 0.0
      %575 = vmatprep.subr.mxu0 0.0
      %576 = vmatpush1.msra.mxu0 0.0
      %577 = vmatprep.subr.mxu0 0.0
      %578 = vmatpush1.msra.mxu0 0.0
      %579 = vmatprep.subr.mxu0 0.0
      %580 = vmatpush1.msra.mxu0 0.0
      %581 = vmatprep.subr.mxu0 0.0
      %582 = vmatpush1.msra.mxu0 0.0
      %583 = vmatprep.subr.mxu0 0.0
      %584 = vmatpush1.msra.mxu0 0.0
      %585 = vmatprep.subr.mxu0 0.0
      %586 = vmatpush1.msra.mxu0 0.0
      %587 = vmatprep.subr.mxu0 0.0
      %588 = vmatpush1.msra.mxu0 0.0
      %589 = vmatprep.subr.mxu0 0.0
      %590 = vmatpush1.msra.mxu0 0.0
      %591 = vmatprep.subr.mxu0 0.0
      %592 = vmatpush1.msra.mxu0 0.0
      %593 = vmatprep.subr.mxu0 0.0
      %594 = vmatpush1.msra.mxu0 0.0
      %595 = vmatprep.subr.mxu0 0.0
      %596 = vmatpush1.msra.mxu0 0.0
      %597 = vmatprep.subr.mxu0 0.0
      %598 = vmatpush1.msra.mxu0 0.0
      %599 = vmatprep.subr.mxu0 0.0
      %600 = vmatpush1.msra.mxu0 0.0
      %601 = vmatprep.subr.mxu0 0.0
      %602 = vmatpush1.msra.mxu0 0.0
      %603 = vmatprep.subr.mxu0 0.0
      %604 = vmatpush1.msra.mxu0 0.0
      %605 = vmatprep.subr.mxu0 0.0
      %606 = vmatpush1.msra.mxu0 0.0
      %607 = vmatprep.subr.mxu0 0.0
      %608 = vmatpush1.msra.mxu0 0.0
      %609 = vmatprep.subr.mxu0 0.0
      %610 = vmatpush1.msra.mxu0 0.0
      %611 = vmatprep.subr.mxu0 0.0
      %612 = vmatpush1.msra.mxu0 0.0
      %613 = vmatprep.subr.mxu0 0.0
      %614 = vmatpush1.msra.mxu0 0.0
      %615 = vmatprep.subr.mxu0 0.0
      %616 = vmatpush1.msra.mxu0 0.0
      %617 = vmatprep.subr.mxu0 0.0
      %618 = vmatpush1.msra.mxu0 0.0
      %619 = vmatprep.subr.mxu0 0.0
      %620 = vmatpush1.msra.mxu0 0.0
      %621 = vmatprep.subr.mxu0 0.0
      %622 = vmatpush1.msra.mxu0 0.0
      %623 = vmatprep.subr.mxu0 0.0
      %624 = vmatpush1.msra.mxu0 0.0
      %625 = vmatprep.subr.mxu0 0.0
      %626 = vmatpush1.msra.mxu0 0.0
      %627 = vmatprep.mubr.f32.mxu0 0.0
      %628 = vmatmul.mubr.f32.gmra.mrb[0].mxu0 %v513
      %v629 = vpop.f32.mrb[0].mxu0
      %v630 = vadd.f32 0.0, %v629
      %v631 = vpop.f32.mrb[0].mxu0
      %632 = vmatprep.mubr.f32.mxu0 0.0
      %633 = vmatmul.mubr.f32.gmra.mrb[0].mxu0 %v516
      %v634 = vpop.f32.mrb[0].mxu0
      %v635 = vadd.f32 0.0, %v634
      %v636 = vpop.f32.mrb[0].mxu0
      %637 = vmatprep.mubr.f32.mxu0 0.0
      %638 = vmatmul.mubr.f32.gmra.mrb[0].mxu0 %v519
      %v639 = vpop.f32.mrb[0].mxu0
      %v640 = vadd.f32 0.0, %v639
      %v641 = vpop.f32.mrb[0].mxu0
      %642 = vmatprep.mubr.f32.mxu0 0.0
      %643 = vmatmul.mubr.f32.gmra.mrb[0].mxu0 %v522
      %v644 = vpop.f32.mrb[0].mxu0
      %v645 = vadd.f32 0.0, %v644
      %v646 = vpop.f32.mrb[0].mxu0
      %647 = vmatprep.mubr.f32.mxu0 0.0
      %648 = vmatmul.mubr.f32.gmra.mrb[0].mxu0 %v525
      %v649 = vpop.f32.mrb[0].mxu0
      %v650 = vadd.f32 0.0, %v649
      %v651 = vpop.f32.mrb[0].mxu0
      %652 = vmatprep.mubr.f32.mxu0 0.0
      %653 = vmatmul.mubr.f32.gmra.mrb[0].mxu0 %v528
      %v654 = vpop.f32.mrb[0].mxu0
      %v655 = vadd.f32 0.0, %v654
      %v656 = vpop.f32.mrb[0].mxu0
      %657 = vmatprep.mubr.f32.mxu0 0.0
      %658 = vmatmul.mubr.f32.gmra.mrb[0].mxu0 %v531
      %v659 = vpop.f32.mrb[0].mxu0
      %v660 = vadd.f32 0.0, %v659
      %v661 = vpop.f32.mrb[0].mxu0
      %662 = vmatprep.mubr.f32.mxu0 0.0
      %663 = vmatmul.mubr.f32.gmra.mrb[0].mxu0 %v534
      %v664 = vpop.f32.mrb[0].mxu0
      %v665 = vadd.f32 0.0, %v664
      %v666 = vpop.f32.mrb[0].mxu0
      %667 = vmatprep.mubr.f32.mxu0 0.0
      %668 = vmatmul.mubr.f32.gmra.mrb[0].mxu0 %v537
      %v669 = vpop.f32.mrb[0].mxu0
      %v670 = vadd.f32 0.0, %v669
      %v671 = vpop.f32.mrb[0].mxu0
      %672 = vmatprep.mubr.f32.mxu0 0.0
      %673 = vmatmul.mubr.f32.gmra.mrb[0].mxu0 %v540
      %v674 = vpop.f32.mrb[0].mxu0
      %v675 = vadd.f32 0.0, %v674
      %v676 = vpop.f32.mrb[0].mxu0
      %677 = vmatprep.mubr.f32.mxu0 0.0
      %678 = vmatmul.mubr.f32.gmra.mrb[0].mxu0 %v543
      %v679 = vpop.f32.mrb[0].mxu0
      %v680 = vadd.f32 0.0, %v679
      %v681 = vpop.f32.mrb[0].mxu0
      %682 = vmatprep.mubr.f32.mxu0 0.0
      %683 = vmatmul.mubr.f32.gmra.mrb[0].mxu0 %v546
      %v684 = vpop.f32.mrb[0].mxu0
      %v685 = vadd.f32 0.0, %v684
      %v686 = vpop.f32.mrb[0].mxu0
      %687 = vmatprep.mubr.f32.mxu0 0.0
      %688 = vmatmul.mubr.f32.gmra.mrb[0].mxu0 %v549
      %v689 = vpop.f32.mrb[0].mxu0
      %v690 = vadd.f32 0.0, %v689
      %v691 = vpop.f32.mrb[0].mxu0
      %692 = vmatprep.mubr.f32.mxu0 0.0
      %693 = vmatmul.mubr.f32.gmra.mrb[0].mxu0 %v552
      %v694 = vpop.f32.mrb[0].mxu0
      %v695 = vadd.f32 0.0, %v694
      %v696 = vpop.f32.mrb[0].mxu0
      %697 = vmatprep.mubr.f32.mxu0 0.0
      %698 = vmatmul.mubr.f32.gmra.mrb[0].mxu0 %v555
      %v699 = vpop.f32.mrb[0].mxu0
      %v700 = vadd.f32 0.0, %v699
      %v701 = vpop.f32.mrb[0].mxu0
      %702 = vmatprep.mubr.f32.mxu0 0.0
      %703 = vmatmul.mubr.f32.gmra.mrb[0].mxu0 %v558
      %v704 = vpop.f32.mrb[0].mxu0
      %v705 = vadd.f32 0.0, %v704
      %v706 = vpop.f32.mrb[0].mxu0
      %707 = vdwg.mxu0
      %v708 = vadd.f32 %v478, %v630
      %v709 = vadd.f32 %v479, %v635
      %v710 = vadd.f32 %v480, %v640
      %v711 = vadd.f32 %v481, %v645
      %v712 = vadd.f32 %v482, %v650
      %v713 = vadd.f32 %v483, %v655
      %v714 = vadd.f32 %v484, %v660
      %v715 = vadd.f32 %v485, %v665
      %v716 = vadd.f32 %v486, %v670
      %v717 = vadd.f32 %v487, %v675
      %v718 = vadd.f32 %v488, %v680
      %v719 = vadd.f32 %v489, %v685
      %v720 = vadd.f32 %v490, %v690
      %v721 = vadd.f32 %v491, %v695
      %v722 = vadd.f32 %v492, %v700
      %v723 = vadd.f32 %v493, %v705
      %v724 = vld [vmem:[%s234 + $0x2] sm:$0xff]
      %v725 = vld [vmem:[%s234 + $0xa] sm:$0xff]
      %v726 = vld [vmem:[%s234 + $0x1a] sm:$0xff]
      %v727 = vld [vmem:[%s234 + $0x22] sm:$0xff]
      %v728 = vld [vmem:[%s234 + $0x32] sm:$0xff]
      %v729 = vld [vmem:[%s234 + $0x3a] sm:$0xff]
      %v730 = vld [vmem:[%s234 + $0x4a] sm:$0xff]
      %v731 = vld [vmem:[%s234 + $0x52] sm:$0xff]
      %v732 = vld [vmem:[%s234 + $0x62] sm:$0xff]
      %v733 = vld [vmem:[%s234 + $0x6a] sm:$0xff]
      %v734 = vld [vmem:[%s234 + $0x7a] sm:$0xff]
      %v735 = vld [vmem:[%s234 + $0x82] sm:$0xff]
      %v736 = vld [vmem:[%s234 + $0x92] sm:$0xff]
      %v737 = vld [vmem:[%s234 + $0x9a] sm:$0xff]
      %v738 = vld [vmem:[%s234 + $0xaa] sm:$0xff]
      %v739 = vld [vmem:[%s234 + $0xb2] sm:$0xff]
      %s740 = scalar_lea.vmem %s238, 8
      %v741 = vld [vmem:[%s740] sm:$0xf]
      %v743 = vsel %vm280, %v724, 0
      %v746 = vsel %vm280, %v725, 0
      %v749 = vsel %vm280, %v726, 0
      %v752 = vsel %vm280, %v727, 0
      %v755 = vsel %vm280, %v728, 0
      %v758 = vsel %vm280, %v729, 0
      %v761 = vsel %vm280, %v730, 0
      %v764 = vsel %vm280, %v731, 0
      %v767 = vsel %vm280, %v732, 0
      %v770 = vsel %vm280, %v733, 0
      %v773 = vsel %vm280, %v734, 0
      %v776 = vsel %vm280, %v735, 0
      %v779 = vsel %vm280, %v736, 0
      %v782 = vsel %vm280, %v737, 0
      %v785 = vsel %vm280, %v738, 0
      %v788 = vsel %vm280, %v739, 0
      %v791 = vsel %vm329, %v741, 0
      %793 = vmatprep.subr.mxu0 0.0
      %794 = vmatpush1.msra.mxu0 %v791
      %795 = vmatprep.subr.mxu0 0.0
      %796 = vmatpush1.msra.mxu0 0.0
      %797 = vmatprep.subr.mxu0 0.0
      %798 = vmatpush1.msra.mxu0 0.0
      %799 = vmatprep.subr.mxu0 0.0
      %800 = vmatpush1.msra.mxu0 0.0
      %801 = vmatprep.subr.mxu0 0.0
      %802 = vmatpush1.msra.mxu0 0.0
      %803 = vmatprep.subr.mxu0 0.0
      %804 = vmatpush1.msra.mxu0 0.0
      %805 = vmatprep.subr.mxu0 0.0
      %806 = vmatpush1.msra.mxu0 0.0
      %807 = vmatprep.subr.mxu0 0.0
      %808 = vmatpush1.msra.mxu0 0.0
      %809 = vmatprep.subr.mxu0 0.0
      %810 = vmatpush1.msra.mxu0 0.0
      %811 = vmatprep.subr.mxu0 0.0
      %812 = vmatpush1.msra.mxu0 0.0
      %813 = vmatprep.subr.mxu0 0.0
      %814 = vmatpush1.msra.mxu0 0.0
      %815 = vmatprep.subr.mxu0 0.0
      %816 = vmatpush1.msra.mxu0 0.0
      %817 = vmatprep.subr.mxu0 0.0
      %818 = vmatpush1.msra.mxu0 0.0
      %819 = vmatprep.subr.mxu0 0.0
      %820 = vmatpush1.msra.mxu0 0.0
      %821 = vmatprep.subr.mxu0 0.0
      %822 = vmatpush1.msra.mxu0 0.0
      %823 = vmatprep.subr.mxu0 0.0
      %824 = vmatpush1.msra.mxu0 0.0
      %825 = vmatprep.subr.mxu0 0.0
      %826 = vmatpush1.msra.mxu0 0.0
      %827 = vmatprep.subr.mxu0 0.0
      %828 = vmatpush1.msra.mxu0 0.0
      %829 = vmatprep.subr.mxu0 0.0
      %830 = vmatpush1.msra.mxu0 0.0
      %831 = vmatprep.subr.mxu0 0.0
      %832 = vmatpush1.msra.mxu0 0.0
      %833 = vmatprep.subr.mxu0 0.0
      %834 = vmatpush1.msra.mxu0 0.0
      %835 = vmatprep.subr.mxu0 0.0
      %836 = vmatpush1.msra.mxu0 0.0
      %837 = vmatprep.subr.mxu0 0.0
      %838 = vmatpush1.msra.mxu0 0.0
      %839 = vmatprep.subr.mxu0 0.0
      %840 = vmatpush1.msra.mxu0 0.0
      %841 = vmatprep.subr.mxu0 0.0
      %842 = vmatpush1.msra.mxu0 0.0
      %843 = vmatprep.subr.mxu0 0.0
      %844 = vmatpush1.msra.mxu0 0.0
      %845 = vmatprep.subr.mxu0 0.0
      %846 = vmatpush1.msra.mxu0 0.0
      %847 = vmatprep.subr.mxu0 0.0
      %848 = vmatpush1.msra.mxu0 0.0
      %849 = vmatprep.subr.mxu0 0.0
      %850 = vmatpush1.msra.mxu0 0.0
      %851 = vmatprep.subr.mxu0 0.0
      %852 = vmatpush1.msra.mxu0 0.0
      %853 = vmatprep.subr.mxu0 0.0
      %854 = vmatpush1.msra.mxu0 0.0
      %855 = vmatprep.subr.mxu0 0.0
      %856 = vmatpush1.msra.mxu0 0.0
      %857 = vmatprep.mubr.f32.mxu0 0.0
      %858 = vmatmul.mubr.f32.gmra.mrb[0].mxu0 %v743
      %v859 = vpop.f32.mrb[0].mxu0
      %v860 = vadd.f32 0.0, %v859
      %v861 = vpop.f32.mrb[0].mxu0
      %862 = vmatprep.mubr.f32.mxu0 0.0
      %863 = vmatmul.mubr.f32.gmra.mrb[0].mxu0 %v746
      %v864 = vpop.f32.mrb[0].mxu0
      %v865 = vadd.f32 0.0, %v864
      %v866 = vpop.f32.mrb[0].mxu0
      %867 = vmatprep.mubr.f32.mxu0 0.0
      %868 = vmatmul.mubr.f32.gmra.mrb[0].mxu0 %v749
      %v869 = vpop.f32.mrb[0].mxu0
      %v870 = vadd.f32 0.0, %v869
      %v871 = vpop.f32.mrb[0].mxu0
      %872 = vmatprep.mubr.f32.mxu0 0.0
      %873 = vmatmul.mubr.f32.gmra.mrb[0].mxu0 %v752
      %v874 = vpop.f32.mrb[0].mxu0
      %v875 = vadd.f32 0.0, %v874
      %v876 = vpop.f32.mrb[0].mxu0
      %877 = vmatprep.mubr.f32.mxu0 0.0
      %878 = vmatmul.mubr.f32.gmra.mrb[0].mxu0 %v755
      %v879 = vpop.f32.mrb[0].mxu0
      %v880 = vadd.f32 0.0, %v879
      %v881 = vpop.f32.mrb[0].mxu0
      %882 = vmatprep.mubr.f32.mxu0 0.0
      %883 = vmatmul.mubr.f32.gmra.mrb[0].mxu0 %v758
      %v884 = vpop.f32.mrb[0].mxu0
      %v885 = vadd.f32 0.0, %v884
      %v886 = vpop.f32.mrb[0].mxu0
      %887 = vmatprep.mubr.f32.mxu0 0.0
      %888 = vmatmul.mubr.f32.gmra.mrb[0].mxu0 %v761
      %v889 = vpop.f32.mrb[0].mxu0
      %v890 = vadd.f32 0.0, %v889
      %v891 = vpop.f32.mrb[0].mxu0
      %892 = vmatprep.mubr.f32.mxu0 0.0
      %893 = vmatmul.mubr.f32.gmra.mrb[0].mxu0 %v764
      %v894 = vpop.f32.mrb[0].mxu0
      %v895 = vadd.f32 0.0, %v894
      %v896 = vpop.f32.mrb[0].mxu0
      %897 = vmatprep.mubr.f32.mxu0 0.0
      %898 = vmatmul.mubr.f32.gmra.mrb[0].mxu0 %v767
      %v899 = vpop.f32.mrb[0].mxu0
      %v900 = vadd.f32 0.0, %v899
      %v901 = vpop.f32.mrb[0].mxu0
      %902 = vmatprep.mubr.f32.mxu0 0.0
      %903 = vmatmul.mubr.f32.gmra.mrb[0].mxu0 %v770
      %v904 = vpop.f32.mrb[0].mxu0
      %v905 = vadd.f32 0.0, %v904
      %v906 = vpop.f32.mrb[0].mxu0
      %907 = vmatprep.mubr.f32.mxu0 0.0
      %908 = vmatmul.mubr.f32.gmra.mrb[0].mxu0 %v773
      %v909 = vpop.f32.mrb[0].mxu0
      %v910 = vadd.f32 0.0, %v909
      %v911 = vpop.f32.mrb[0].mxu0
      %912 = vmatprep.mubr.f32.mxu0 0.0
      %913 = vmatmul.mubr.f32.gmra.mrb[0].mxu0 %v776
      %v914 = vpop.f32.mrb[0].mxu0
      %v915 = vadd.f32 0.0, %v914
      %v916 = vpop.f32.mrb[0].mxu0
      %917 = vmatprep.mubr.f32.mxu0 0.0
      %918 = vmatmul.mubr.f32.gmra.mrb[0].mxu0 %v779
      %v919 = vpop.f32.mrb[0].mxu0
      %v920 = vadd.f32 0.0, %v919
      %v921 = vpop.f32.mrb[0].mxu0
      %922 = vmatprep.mubr.f32.mxu0 0.0
      %923 = vmatmul.mubr.f32.gmra.mrb[0].mxu0 %v782
      %v924 = vpop.f32.mrb[0].mxu0
      %v925 = vadd.f32 0.0, %v924
      %v926 = vpop.f32.mrb[0].mxu0
      %927 = vmatprep.mubr.f32.mxu0 0.0
      %928 = vmatmul.mubr.f32.gmra.mrb[0].mxu0 %v785
      %v929 = vpop.f32.mrb[0].mxu0
      %v930 = vadd.f32 0.0, %v929
      %v931 = vpop.f32.mrb[0].mxu0
      %932 = vmatprep.mubr.f32.mxu0 0.0
      %933 = vmatmul.mubr.f32.gmra.mrb[0].mxu0 %v788
      %v934 = vpop.f32.mrb[0].mxu0
      %v935 = vadd.f32 0.0, %v934
      %v936 = vpop.f32.mrb[0].mxu0
      %937 = vdwg.mxu0
      %v938 = vadd.f32 %v708, %v860
      %v939 = vadd.f32 %v709, %v865
      %v940 = vadd.f32 %v710, %v870
      %v941 = vadd.f32 %v711, %v875
      %v942 = vadd.f32 %v712, %v880
      %v943 = vadd.f32 %v713, %v885
      %v944 = vadd.f32 %v714, %v890
      %v945 = vadd.f32 %v715, %v895
      %v946 = vadd.f32 %v716, %v900
      %v947 = vadd.f32 %v717, %v905
      %v948 = vadd.f32 %v718, %v910
      %v949 = vadd.f32 %v719, %v915
      %v950 = vadd.f32 %v720, %v920
      %v951 = vadd.f32 %v721, %v925
      %v952 = vadd.f32 %v722, %v930
      %v953 = vadd.f32 %v723, %v935
      %s954 = scalar_lea.vmem %s234, 24
      %v955 = vld [vmem:[%s954] sm:$0xff]
      %v956 = vld [vmem:[%s954 + $0x8] sm:$0xff]
      %v957 = vld [vmem:[%s954 + $0x18] sm:$0xff]
      %v958 = vld [vmem:[%s954 + $0x20] sm:$0xff]
      %v959 = vld [vmem:[%s954 + $0x30] sm:$0xff]
      %v960 = vld [vmem:[%s954 + $0x38] sm:$0xff]
      %v961 = vld [vmem:[%s954 + $0x48] sm:$0xff]
      %v962 = vld [vmem:[%s954 + $0x50] sm:$0xff]
      %v963 = vld [vmem:[%s954 + $0x60] sm:$0xff]
      %v964 = vld [vmem:[%s954 + $0x68] sm:$0xff]
      %v965 = vld [vmem:[%s954 + $0x78] sm:$0xff]
      %v966 = vld [vmem:[%s954 + $0x80] sm:$0xff]
      %v967 = vld [vmem:[%s954 + $0x90] sm:$0xff]
      %v968 = vld [vmem:[%s954 + $0x98] sm:$0xff]
      %v969 = vld [vmem:[%s954 + $0xa8] sm:$0xff]
      %v970 = vld [vmem:[%s954 + $0xb0] sm:$0xff]
      %s971 = scalar_lea.vmem %s238, 12
      %v972 = vld [vmem:[%s971] sm:$0xf]
      %v974 = vsel %vm280, %v955, 0
      %v977 = vsel %vm280, %v956, 0
      %v980 = vsel %vm280, %v957, 0
      %v983 = vsel %vm280, %v958, 0
      %v986 = vsel %vm280, %v959, 0
      %v989 = vsel %vm280, %v960, 0
      %v992 = vsel %vm280, %v961, 0
      %v995 = vsel %vm280, %v962, 0
      %v998 = vsel %vm280, %v963, 0
      %v1001 = vsel %vm280, %v964, 0
      %v1004 = vsel %vm280, %v965, 0
      %v1007 = vsel %vm280, %v966, 0
      %v1010 = vsel %vm280, %v967, 0
      %v1013 = vsel %vm280, %v968, 0
      %v1016 = vsel %vm280, %v969, 0
      %v1019 = vsel %vm280, %v970, 0
      %v1022 = vsel %vm329, %v972, 0
      %1024 = vmatprep.subr.mxu0 0.0
      %1025 = vmatpush1.msra.mxu0 %v1022
      %1026 = vmatprep.subr.mxu0 0.0
      %1027 = vmatpush1.msra.mxu0 0.0
      %1028 = vmatprep.subr.mxu0 0.0
      %1029 = vmatpush1.msra.mxu0 0.0
      %1030 = vmatprep.subr.mxu0 0.0
      %1031 = vmatpush1.msra.mxu0 0.0
      %1032 = vmatprep.subr.mxu0 0.0
      %1033 = vmatpush1.msra.mxu0 0.0
      %1034 = vmatprep.subr.mxu0 0.0
      %1035 = vmatpush1.msra.mxu0 0.0
      %1036 = vmatprep.subr.mxu0 0.0
      %1037 = vmatpush1.msra.mxu0 0.0
      %1038 = vmatprep.subr.mxu0 0.0
      %1039 = vmatpush1.msra.mxu0 0.0
      %1040 = vmatprep.subr.mxu0 0.0
      %1041 = vmatpush1.msra.mxu0 0.0
      %1042 = vmatprep.subr.mxu0 0.0
      %1043 = vmatpush1.msra.mxu0 0.0
      %1044 = vmatprep.subr.mxu0 0.0
      %1045 = vmatpush1.msra.mxu0 0.0
      %1046 = vmatprep.subr.mxu0 0.0
      %1047 = vmatpush1.msra.mxu0 0.0
      %1048 = vmatprep.subr.mxu0 0.0
      %1049 = vmatpush1.msra.mxu0 0.0
      %1050 = vmatprep.subr.mxu0 0.0
      %1051 = vmatpush1.msra.mxu0 0.0
      %1052 = vmatprep.subr.mxu0 0.0
      %1053 = vmatpush1.msra.mxu0 0.0
      %1054 = vmatprep.subr.mxu0 0.0
      %1055 = vmatpush1.msra.mxu0 0.0
      %1056 = vmatprep.subr.mxu0 0.0
      %1057 = vmatpush1.msra.mxu0 0.0
      %1058 = vmatprep.subr.mxu0 0.0
      %1059 = vmatpush1.msra.mxu0 0.0
      %1060 = vmatprep.subr.mxu0 0.0
      %1061 = vmatpush1.msra.mxu0 0.0
      %1062 = vmatprep.subr.mxu0 0.0
      %1063 = vmatpush1.msra.mxu0 0.0
      %1064 = vmatprep.subr.mxu0 0.0
      %1065 = vmatpush1.msra.mxu0 0.0
      %1066 = vmatprep.subr.mxu0 0.0
      %1067 = vmatpush1.msra.mxu0 0.0
      %1068 = vmatprep.subr.mxu0 0.0
      %1069 = vmatpush1.msra.mxu0 0.0
      %1070 = vmatprep.subr.mxu0 0.0
      %1071 = vmatpush1.msra.mxu0 0.0
      %1072 = vmatprep.subr.mxu0 0.0
      %1073 = vmatpush1.msra.mxu0 0.0
      %1074 = vmatprep.subr.mxu0 0.0
      %1075 = vmatpush1.msra.mxu0 0.0
      %1076 = vmatprep.subr.mxu0 0.0
      %1077 = vmatpush1.msra.mxu0 0.0
      %1078 = vmatprep.subr.mxu0 0.0
      %1079 = vmatpush1.msra.mxu0 0.0
      %1080 = vmatprep.subr.mxu0 0.0
      %1081 = vmatpush1.msra.mxu0 0.0
      %1082 = vmatprep.subr.mxu0 0.0
      %1083 = vmatpush1.msra.mxu0 0.0
      %1084 = vmatprep.subr.mxu0 0.0
      %1085 = vmatpush1.msra.mxu0 0.0
      %1086 = vmatprep.subr.mxu0 0.0
      %1087 = vmatpush1.msra.mxu0 0.0
      %1088 = vmatprep.mubr.f32.mxu0 0.0
      %1089 = vmatmul.mubr.f32.gmra.mrb[0].mxu0 %v974
      %v1090 = vpop.f32.mrb[0].mxu0
      %v1091 = vadd.f32 0.0, %v1090
      %v1092 = vpop.f32.mrb[0].mxu0
      %1093 = vmatprep.mubr.f32.mxu0 0.0
      %1094 = vmatmul.mubr.f32.gmra.mrb[0].mxu0 %v977
      %v1095 = vpop.f32.mrb[0].mxu0
      %v1096 = vadd.f32 0.0, %v1095
      %v1097 = vpop.f32.mrb[0].mxu0
      %1098 = vmatprep.mubr.f32.mxu0 0.0
      %1099 = vmatmul.mubr.f32.gmra.mrb[0].mxu0 %v980
      %v1100 = vpop.f32.mrb[0].mxu0
      %v1101 = vadd.f32 0.0, %v1100
      %v1102 = vpop.f32.mrb[0].mxu0
      %1103 = vmatprep.mubr.f32.mxu0 0.0
      %1104 = vmatmul.mubr.f32.gmra.mrb[0].mxu0 %v983
      %v1105 = vpop.f32.mrb[0].mxu0
      %v1106 = vadd.f32 0.0, %v1105
      %v1107 = vpop.f32.mrb[0].mxu0
      %1108 = vmatprep.mubr.f32.mxu0 0.0
      %1109 = vmatmul.mubr.f32.gmra.mrb[0].mxu0 %v986
      %v1110 = vpop.f32.mrb[0].mxu0
      %v1111 = vadd.f32 0.0, %v1110
      %v1112 = vpop.f32.mrb[0].mxu0
      %1113 = vmatprep.mubr.f32.mxu0 0.0
      %1114 = vmatmul.mubr.f32.gmra.mrb[0].mxu0 %v989
      %v1115 = vpop.f32.mrb[0].mxu0
      %v1116 = vadd.f32 0.0, %v1115
      %v1117 = vpop.f32.mrb[0].mxu0
      %1118 = vmatprep.mubr.f32.mxu0 0.0
      %1119 = vmatmul.mubr.f32.gmra.mrb[0].mxu0 %v992
      %v1120 = vpop.f32.mrb[0].mxu0
      %v1121 = vadd.f32 0.0, %v1120
      %v1122 = vpop.f32.mrb[0].mxu0
      %1123 = vmatprep.mubr.f32.mxu0 0.0
      %1124 = vmatmul.mubr.f32.gmra.mrb[0].mxu0 %v995
      %v1125 = vpop.f32.mrb[0].mxu0
      %v1126 = vadd.f32 0.0, %v1125
      %v1127 = vpop.f32.mrb[0].mxu0
      %1128 = vmatprep.mubr.f32.mxu0 0.0
      %1129 = vmatmul.mubr.f32.gmra.mrb[0].mxu0 %v998
      %v1130 = vpop.f32.mrb[0].mxu0
      %v1131 = vadd.f32 0.0, %v1130
      %v1132 = vpop.f32.mrb[0].mxu0
      %1133 = vmatprep.mubr.f32.mxu0 0.0
      %1134 = vmatmul.mubr.f32.gmra.mrb[0].mxu0 %v1001
      %v1135 = vpop.f32.mrb[0].mxu0
      %v1136 = vadd.f32 0.0, %v1135
      %v1137 = vpop.f32.mrb[0].mxu0
      %1138 = vmatprep.mubr.f32.mxu0 0.0
      %1139 = vmatmul.mubr.f32.gmra.mrb[0].mxu0 %v1004
      %v1140 = vpop.f32.mrb[0].mxu0
      %v1141 = vadd.f32 0.0, %v1140
      %v1142 = vpop.f32.mrb[0].mxu0
      %1143 = vmatprep.mubr.f32.mxu0 0.0
      %1144 = vmatmul.mubr.f32.gmra.mrb[0].mxu0 %v1007
      %v1145 = vpop.f32.mrb[0].mxu0
      %v1146 = vadd.f32 0.0, %v1145
      %v1147 = vpop.f32.mrb[0].mxu0
      %1148 = vmatprep.mubr.f32.mxu0 0.0
      %1149 = vmatmul.mubr.f32.gmra.mrb[0].mxu0 %v1010
      %v1150 = vpop.f32.mrb[0].mxu0
      %v1151 = vadd.f32 0.0, %v1150
      %v1152 = vpop.f32.mrb[0].mxu0
      %1153 = vmatprep.mubr.f32.mxu0 0.0
      %1154 = vmatmul.mubr.f32.gmra.mrb[0].mxu0 %v1013
      %v1155 = vpop.f32.mrb[0].mxu0
      %v1156 = vadd.f32 0.0, %v1155
      %v1157 = vpop.f32.mrb[0].mxu0
      %1158 = vmatprep.mubr.f32.mxu0 0.0
      %1159 = vmatmul.mubr.f32.gmra.mrb[0].mxu0 %v1016
      %v1160 = vpop.f32.mrb[0].mxu0
      %v1161 = vadd.f32 0.0, %v1160
      %v1162 = vpop.f32.mrb[0].mxu0
      %1163 = vmatprep.mubr.f32.mxu0 0.0
      %1164 = vmatmul.mubr.f32.gmra.mrb[0].mxu0 %v1019
      %v1165 = vpop.f32.mrb[0].mxu0
      %v1166 = vadd.f32 0.0, %v1165
      %v1167 = vpop.f32.mrb[0].mxu0
      %1168 = vdwg.mxu0
      %v1169 = vadd.f32 %v938, %v1091
      %v1170 = vadd.f32 %v939, %v1096
      %v1171 = vadd.f32 %v940, %v1101
      %v1172 = vadd.f32 %v941, %v1106
      %v1173 = vadd.f32 %v942, %v1111
      %v1174 = vadd.f32 %v943, %v1116
      %v1175 = vadd.f32 %v944, %v1121
      %v1176 = vadd.f32 %v945, %v1126
      %v1177 = vadd.f32 %v946, %v1131
      %v1178 = vadd.f32 %v947, %v1136
      %v1179 = vadd.f32 %v948, %v1141
      %v1180 = vadd.f32 %v949, %v1146
      %v1181 = vadd.f32 %v950, %v1151
      %v1182 = vadd.f32 %v951, %v1156
      %v1183 = vadd.f32 %v952, %v1161
      %v1184 = vadd.f32 %v953, %v1166
      %v1185 = vld [vmem:[%s954 + $0x1] sm:$0xff]
      %v1186 = vld [vmem:[%s954 + $0x9] sm:$0xff]
      %v1187 = vld [vmem:[%s954 + $0x19] sm:$0xff]
      %v1188 = vld [vmem:[%s954 + $0x21] sm:$0xff]
      %v1189 = vld [vmem:[%s954 + $0x31] sm:$0xff]
      %v1190 = vld [vmem:[%s954 + $0x39] sm:$0xff]
      %v1191 = vld [vmem:[%s954 + $0x49] sm:$0xff]
      %v1192 = vld [vmem:[%s954 + $0x51] sm:$0xff]
      %v1193 = vld [vmem:[%s954 + $0x61] sm:$0xff]
      %v1194 = vld [vmem:[%s954 + $0x69] sm:$0xff]
      %v1195 = vld [vmem:[%s954 + $0x79] sm:$0xff]
      %v1196 = vld [vmem:[%s954 + $0x81] sm:$0xff]
      %v1197 = vld [vmem:[%s954 + $0x91] sm:$0xff]
      %v1198 = vld [vmem:[%s954 + $0x99] sm:$0xff]
      %v1199 = vld [vmem:[%s954 + $0xa9] sm:$0xff]
      %v1200 = vld [vmem:[%s954 + $0xb1] sm:$0xff]
      %s1201 = scalar_lea.vmem %s238, 16
      %v1202 = vld [vmem:[%s1201] sm:$0xf]
      %v1204 = vsel %vm280, %v1185, 0
      %v1207 = vsel %vm280, %v1186, 0
      %v1210 = vsel %vm280, %v1187, 0
      %v1213 = vsel %vm280, %v1188, 0
      %v1216 = vsel %vm280, %v1189, 0
      %v1219 = vsel %vm280, %v1190, 0
      %v1222 = vsel %vm280, %v1191, 0
      %v1225 = vsel %vm280, %v1192, 0
      %v1228 = vsel %vm280, %v1193, 0
      %v1231 = vsel %vm280, %v1194, 0
      %v1234 = vsel %vm280, %v1195, 0
      %v1237 = vsel %vm280, %v1196, 0
      %v1240 = vsel %vm280, %v1197, 0
      %v1243 = vsel %vm280, %v1198, 0
      %v1246 = vsel %vm280, %v1199, 0
      %v1249 = vsel %vm280, %v1200, 0
      %v1252 = vsel %vm329, %v1202, 0
      %1254 = vmatprep.subr.mxu0 0.0
      %1255 = vmatpush1.msra.mxu0 %v1252
      %1256 = vmatprep.subr.mxu0 0.0
      %1257 = vmatpush1.msra.mxu0 0.0
      %1258 = vmatprep.subr.mxu0 0.0
      %1259 = vmatpush1.msra.mxu0 0.0
      %1260 = vmatprep.subr.mxu0 0.0
      %1261 = vmatpush1.msra.mxu0 0.0
      %1262 = vmatprep.subr.mxu0 0.0
      %1263 = vmatpush1.msra.mxu0 0.0
      %1264 = vmatprep.subr.mxu0 0.0
      %1265 = vmatpush1.msra.mxu0 0.0
      %1266 = vmatprep.subr.mxu0 0.0
      %1267 = vmatpush1.msra.mxu0 0.0
      %1268 = vmatprep.subr.mxu0 0.0
      %1269 = vmatpush1.msra.mxu0 0.0
      %1270 = vmatprep.subr.mxu0 0.0
      %1271 = vmatpush1.msra.mxu0 0.0
      %1272 = vmatprep.subr.mxu0 0.0
      %1273 = vmatpush1.msra.mxu0 0.0
      %1274 = vmatprep.subr.mxu0 0.0
      %1275 = vmatpush1.msra.mxu0 0.0
      %1276 = vmatprep.subr.mxu0 0.0
      %1277 = vmatpush1.msra.mxu0 0.0
      %1278 = vmatprep.subr.mxu0 0.0
      %1279 = vmatpush1.msra.mxu0 0.0
      %1280 = vmatprep.subr.mxu0 0.0
      %1281 = vmatpush1.msra.mxu0 0.0
      %1282 = vmatprep.subr.mxu0 0.0
      %1283 = vmatpush1.msra.mxu0 0.0
      %1284 = vmatprep.subr.mxu0 0.0
      %1285 = vmatpush1.msra.mxu0 0.0
      %1286 = vmatprep.subr.mxu0 0.0
      %1287 = vmatpush1.msra.mxu0 0.0
      %1288 = vmatprep.subr.mxu0 0.0
      %1289 = vmatpush1.msra.mxu0 0.0
      %1290 = vmatprep.subr.mxu0 0.0
      %1291 = vmatpush1.msra.mxu0 0.0
      %1292 = vmatprep.subr.mxu0 0.0
      %1293 = vmatpush1.msra.mxu0 0.0
      %1294 = vmatprep.subr.mxu0 0.0
      %1295 = vmatpush1.msra.mxu0 0.0
      %1296 = vmatprep.subr.mxu0 0.0
      %1297 = vmatpush1.msra.mxu0 0.0
      %1298 = vmatprep.subr.mxu0 0.0
      %1299 = vmatpush1.msra.mxu0 0.0
      %1300 = vmatprep.subr.mxu0 0.0
      %1301 = vmatpush1.msra.mxu0 0.0
      %1302 = vmatprep.subr.mxu0 0.0
      %1303 = vmatpush1.msra.mxu0 0.0
      %1304 = vmatprep.subr.mxu0 0.0
      %1305 = vmatpush1.msra.mxu0 0.0
      %1306 = vmatprep.subr.mxu0 0.0
      %1307 = vmatpush1.msra.mxu0 0.0
      %1308 = vmatprep.subr.mxu0 0.0
      %1309 = vmatpush1.msra.mxu0 0.0
      %1310 = vmatprep.subr.mxu0 0.0
      %1311 = vmatpush1.msra.mxu0 0.0
      %1312 = vmatprep.subr.mxu0 0.0
      %1313 = vmatpush1.msra.mxu0 0.0
      %1314 = vmatprep.subr.mxu0 0.0
      %1315 = vmatpush1.msra.mxu0 0.0
      %1316 = vmatprep.subr.mxu0 0.0
      %1317 = vmatpush1.msra.mxu0 0.0
      %1318 = vmatprep.mubr.f32.mxu0 0.0
      %1319 = vmatmul.mubr.f32.gmra.mrb[0].mxu0 %v1204
      %v1320 = vpop.f32.mrb[0].mxu0
      %v1321 = vadd.f32 0.0, %v1320
      %v1322 = vpop.f32.mrb[0].mxu0
      %1323 = vmatprep.mubr.f32.mxu0 0.0
      %1324 = vmatmul.mubr.f32.gmra.mrb[0].mxu0 %v1207
      %v1325 = vpop.f32.mrb[0].mxu0
      %v1326 = vadd.f32 0.0, %v1325
      %v1327 = vpop.f32.mrb[0].mxu0
      %1328 = vmatprep.mubr.f32.mxu0 0.0
      %1329 = vmatmul.mubr.f32.gmra.mrb[0].mxu0 %v1210
      %v1330 = vpop.f32.mrb[0].mxu0
      %v1331 = vadd.f32 0.0, %v1330
      %v1332 = vpop.f32.mrb[0].mxu0
      %1333 = vmatprep.mubr.f32.mxu0 0.0
      %1334 = vmatmul.mubr.f32.gmra.mrb[0].mxu0 %v1213
      %v1335 = vpop.f32.mrb[0].mxu0
      %v1336 = vadd.f32 0.0, %v1335
      %v1337 = vpop.f32.mrb[0].mxu0
      %1338 = vmatprep.mubr.f32.mxu0 0.0
      %1339 = vmatmul.mubr.f32.gmra.mrb[0].mxu0 %v1216
      %v1340 = vpop.f32.mrb[0].mxu0
      %v1341 = vadd.f32 0.0, %v1340
      %v1342 = vpop.f32.mrb[0].mxu0
      %1343 = vmatprep.mubr.f32.mxu0 0.0
      %1344 = vmatmul.mubr.f32.gmra.mrb[0].mxu0 %v1219
      %v1345 = vpop.f32.mrb[0].mxu0
      %v1346 = vadd.f32 0.0, %v1345
      %v1347 = vpop.f32.mrb[0].mxu0
      %1348 = vmatprep.mubr.f32.mxu0 0.0
      %1349 = vmatmul.mubr.f32.gmra.mrb[0].mxu0 %v1222
      %v1350 = vpop.f32.mrb[0].mxu0
      %v1351 = vadd.f32 0.0, %v1350
      %v1352 = vpop.f32.mrb[0].mxu0
      %1353 = vmatprep.mubr.f32.mxu0 0.0
      %1354 = vmatmul.mubr.f32.gmra.mrb[0].mxu0 %v1225
      %v1355 = vpop.f32.mrb[0].mxu0
      %v1356 = vadd.f32 0.0, %v1355
      %v1357 = vpop.f32.mrb[0].mxu0
      %1358 = vmatprep.mubr.f32.mxu0 0.0
      %1359 = vmatmul.mubr.f32.gmra.mrb[0].mxu0 %v1228
      %v1360 = vpop.f32.mrb[0].mxu0
      %v1361 = vadd.f32 0.0, %v1360
      %v1362 = vpop.f32.mrb[0].mxu0
      %1363 = vmatprep.mubr.f32.mxu0 0.0
      %1364 = vmatmul.mubr.f32.gmra.mrb[0].mxu0 %v1231
      %v1365 = vpop.f32.mrb[0].mxu0
      %v1366 = vadd.f32 0.0, %v1365
      %v1367 = vpop.f32.mrb[0].mxu0
      %1368 = vmatprep.mubr.f32.mxu0 0.0
      %1369 = vmatmul.mubr.f32.gmra.mrb[0].mxu0 %v1234
      %v1370 = vpop.f32.mrb[0].mxu0
      %v1371 = vadd.f32 0.0, %v1370
      %v1372 = vpop.f32.mrb[0].mxu0
      %1373 = vmatprep.mubr.f32.mxu0 0.0
      %1374 = vmatmul.mubr.f32.gmra.mrb[0].mxu0 %v1237
      %v1375 = vpop.f32.mrb[0].mxu0
      %v1376 = vadd.f32 0.0, %v1375
      %v1377 = vpop.f32.mrb[0].mxu0
      %1378 = vmatprep.mubr.f32.mxu0 0.0
      %1379 = vmatmul.mubr.f32.gmra.mrb[0].mxu0 %v1240
      %v1380 = vpop.f32.mrb[0].mxu0
      %v1381 = vadd.f32 0.0, %v1380
      %v1382 = vpop.f32.mrb[0].mxu0
      %1383 = vmatprep.mubr.f32.mxu0 0.0
      %1384 = vmatmul.mubr.f32.gmra.mrb[0].mxu0 %v1243
      %v1385 = vpop.f32.mrb[0].mxu0
      %v1386 = vadd.f32 0.0, %v1385
      %v1387 = vpop.f32.mrb[0].mxu0
      %1388 = vmatprep.mubr.f32.mxu0 0.0
      %1389 = vmatmul.mubr.f32.gmra.mrb[0].mxu0 %v1246
      %v1390 = vpop.f32.mrb[0].mxu0
      %v1391 = vadd.f32 0.0, %v1390
      %v1392 = vpop.f32.mrb[0].mxu0
      %1393 = vmatprep.mubr.f32.mxu0 0.0
      %1394 = vmatmul.mubr.f32.gmra.mrb[0].mxu0 %v1249
      %v1395 = vpop.f32.mrb[0].mxu0
      %v1396 = vadd.f32 0.0, %v1395
      %v1397 = vpop.f32.mrb[0].mxu0
      %1398 = vdwg.mxu0
      %v1399 = vadd.f32 %v1169, %v1321
      %v1400 = vadd.f32 %v1170, %v1326
      %v1401 = vadd.f32 %v1171, %v1331
      %v1402 = vadd.f32 %v1172, %v1336
      %v1403 = vadd.f32 %v1173, %v1341
      %v1404 = vadd.f32 %v1174, %v1346
      %v1405 = vadd.f32 %v1175, %v1351
      %v1406 = vadd.f32 %v1176, %v1356
      %v1407 = vadd.f32 %v1177, %v1361
      %v1408 = vadd.f32 %v1178, %v1366
      %v1409 = vadd.f32 %v1179, %v1371
      %v1410 = vadd.f32 %v1180, %v1376
      %v1411 = vadd.f32 %v1181, %v1381
      %v1412 = vadd.f32 %v1182, %v1386
      %v1413 = vadd.f32 %v1183, %v1391
      %v1414 = vadd.f32 %v1184, %v1396
      %v1415 = vld [vmem:[%s954 + $0x2] sm:$0xff]
      %v1416 = vld [vmem:[%s954 + $0xa] sm:$0xff]
      %v1417 = vld [vmem:[%s954 + $0x1a] sm:$0xff]
      %v1418 = vld [vmem:[%s954 + $0x22] sm:$0xff]
      %v1419 = vld [vmem:[%s954 + $0x32] sm:$0xff]
      %v1420 = vld [vmem:[%s954 + $0x3a] sm:$0xff]
      %v1421 = vld [vmem:[%s954 + $0x4a] sm:$0xff]
      %v1422 = vld [vmem:[%s954 + $0x52] sm:$0xff]
      %v1423 = vld [vmem:[%s954 + $0x62] sm:$0xff]
      %v1424 = vld [vmem:[%s954 + $0x6a] sm:$0xff]
      %v1425 = vld [vmem:[%s954 + $0x7a] sm:$0xff]
      %v1426 = vld [vmem:[%s954 + $0x82] sm:$0xff]
      %v1427 = vld [vmem:[%s954 + $0x92] sm:$0xff]
      %v1428 = vld [vmem:[%s954 + $0x9a] sm:$0xff]
      %v1429 = vld [vmem:[%s954 + $0xaa] sm:$0xff]
      %v1430 = vld [vmem:[%s954 + $0xb2] sm:$0xff]
      %s1431 = scalar_lea.vmem %s238, 20
      %v1432 = vld [vmem:[%s1431] sm:$0xf]
      %v1434 = vsel %vm280, %v1415, 0
      %v1437 = vsel %vm280, %v1416, 0
      %v1440 = vsel %vm280, %v1417, 0
      %v1443 = vsel %vm280, %v1418, 0
      %v1446 = vsel %vm280, %v1419, 0
      %v1449 = vsel %vm280, %v1420, 0
      %v1452 = vsel %vm280, %v1421, 0
      %v1455 = vsel %vm280, %v1422, 0
      %v1458 = vsel %vm280, %v1423, 0
      %v1461 = vsel %vm280, %v1424, 0
      %v1464 = vsel %vm280, %v1425, 0
      %v1467 = vsel %vm280, %v1426, 0
      %v1470 = vsel %vm280, %v1427, 0
      %v1473 = vsel %vm280, %v1428, 0
      %v1476 = vsel %vm280, %v1429, 0
      %v1479 = vsel %vm280, %v1430, 0
      %v1482 = vsel %vm329, %v1432, 0
      %1484 = vmatprep.subr.mxu0 0.0
      %1485 = vmatpush1.msra.mxu0 %v1482
      %1486 = vmatprep.subr.mxu0 0.0
      %1487 = vmatpush1.msra.mxu0 0.0
      %1488 = vmatprep.subr.mxu0 0.0
      %1489 = vmatpush1.msra.mxu0 0.0
      %1490 = vmatprep.subr.mxu0 0.0
      %1491 = vmatpush1.msra.mxu0 0.0
      %1492 = vmatprep.subr.mxu0 0.0
      %1493 = vmatpush1.msra.mxu0 0.0
      %1494 = vmatprep.subr.mxu0 0.0
      %1495 = vmatpush1.msra.mxu0 0.0
      %1496 = vmatprep.subr.mxu0 0.0
      %1497 = vmatpush1.msra.mxu0 0.0
      %1498 = vmatprep.subr.mxu0 0.0
      %1499 = vmatpush1.msra.mxu0 0.0
      %1500 = vmatprep.subr.mxu0 0.0
      %1501 = vmatpush1.msra.mxu0 0.0
      %1502 = vmatprep.subr.mxu0 0.0
      %1503 = vmatpush1.msra.mxu0 0.0
      %1504 = vmatprep.subr.mxu0 0.0
      %1505 = vmatpush1.msra.mxu0 0.0
      %1506 = vmatprep.subr.mxu0 0.0
      %1507 = vmatpush1.msra.mxu0 0.0
      %1508 = vmatprep.subr.mxu0 0.0
      %1509 = vmatpush1.msra.mxu0 0.0
      %1510 = vmatprep.subr.mxu0 0.0
      %1511 = vmatpush1.msra.mxu0 0.0
      %1512 = vmatprep.subr.mxu0 0.0
      %1513 = vmatpush1.msra.mxu0 0.0
      %1514 = vmatprep.subr.mxu0 0.0
      %1515 = vmatpush1.msra.mxu0 0.0
      %1516 = vmatprep.subr.mxu0 0.0
      %1517 = vmatpush1.msra.mxu0 0.0
      %1518 = vmatprep.subr.mxu0 0.0
      %1519 = vmatpush1.msra.mxu0 0.0
      %1520 = vmatprep.subr.mxu0 0.0
      %1521 = vmatpush1.msra.mxu0 0.0
      %1522 = vmatprep.subr.mxu0 0.0
      %1523 = vmatpush1.msra.mxu0 0.0
      %1524 = vmatprep.subr.mxu0 0.0
      %1525 = vmatpush1.msra.mxu0 0.0
      %1526 = vmatprep.subr.mxu0 0.0
      %1527 = vmatpush1.msra.mxu0 0.0
      %1528 = vmatprep.subr.mxu0 0.0
      %1529 = vmatpush1.msra.mxu0 0.0
      %1530 = vmatprep.subr.mxu0 0.0
      %1531 = vmatpush1.msra.mxu0 0.0
      %1532 = vmatprep.subr.mxu0 0.0
      %1533 = vmatpush1.msra.mxu0 0.0
      %1534 = vmatprep.subr.mxu0 0.0
      %1535 = vmatpush1.msra.mxu0 0.0
      %1536 = vmatprep.subr.mxu0 0.0
      %1537 = vmatpush1.msra.mxu0 0.0
      %1538 = vmatprep.subr.mxu0 0.0
      %1539 = vmatpush1.msra.mxu0 0.0
      %1540 = vmatprep.subr.mxu0 0.0
      %1541 = vmatpush1.msra.mxu0 0.0
      %1542 = vmatprep.subr.mxu0 0.0
      %1543 = vmatpush1.msra.mxu0 0.0
      %1544 = vmatprep.subr.mxu0 0.0
      %1545 = vmatpush1.msra.mxu0 0.0
      %1546 = vmatprep.subr.mxu0 0.0
      %1547 = vmatpush1.msra.mxu0 0.0
      %1548 = vmatprep.mubr.f32.mxu0 0.0
      %1549 = vmatmul.mubr.f32.gmra.mrb[0].mxu0 %v1434
      %v1550 = vpop.f32.mrb[0].mxu0
      %v1551 = vadd.f32 0.0, %v1550
      %v1552 = vpop.f32.mrb[0].mxu0
      %1553 = vmatprep.mubr.f32.mxu0 0.0
      %1554 = vmatmul.mubr.f32.gmra.mrb[0].mxu0 %v1437
      %v1555 = vpop.f32.mrb[0].mxu0
      %v1556 = vadd.f32 0.0, %v1555
      %v1557 = vpop.f32.mrb[0].mxu0
      %1558 = vmatprep.mubr.f32.mxu0 0.0
      %1559 = vmatmul.mubr.f32.gmra.mrb[0].mxu0 %v1440
      %v1560 = vpop.f32.mrb[0].mxu0
      %v1561 = vadd.f32 0.0, %v1560
      %v1562 = vpop.f32.mrb[0].mxu0
      %1563 = vmatprep.mubr.f32.mxu0 0.0
      %1564 = vmatmul.mubr.f32.gmra.mrb[0].mxu0 %v1443
      %v1565 = vpop.f32.mrb[0].mxu0
      %v1566 = vadd.f32 0.0, %v1565
      %v1567 = vpop.f32.mrb[0].mxu0
      %1568 = vmatprep.mubr.f32.mxu0 0.0
      %1569 = vmatmul.mubr.f32.gmra.mrb[0].mxu0 %v1446
      %v1570 = vpop.f32.mrb[0].mxu0
      %v1571 = vadd.f32 0.0, %v1570
      %v1572 = vpop.f32.mrb[0].mxu0
      %1573 = vmatprep.mubr.f32.mxu0 0.0
      %1574 = vmatmul.mubr.f32.gmra.mrb[0].mxu0 %v1449
      %v1575 = vpop.f32.mrb[0].mxu0
      %v1576 = vadd.f32 0.0, %v1575
      %v1577 = vpop.f32.mrb[0].mxu0
      %1578 = vmatprep.mubr.f32.mxu0 0.0
      %1579 = vmatmul.mubr.f32.gmra.mrb[0].mxu0 %v1452
      %v1580 = vpop.f32.mrb[0].mxu0
      %v1581 = vadd.f32 0.0, %v1580
      %v1582 = vpop.f32.mrb[0].mxu0
      %1583 = vmatprep.mubr.f32.mxu0 0.0
      %1584 = vmatmul.mubr.f32.gmra.mrb[0].mxu0 %v1455
      %v1585 = vpop.f32.mrb[0].mxu0
      %v1586 = vadd.f32 0.0, %v1585
      %v1587 = vpop.f32.mrb[0].mxu0
      %1588 = vmatprep.mubr.f32.mxu0 0.0
      %1589 = vmatmul.mubr.f32.gmra.mrb[0].mxu0 %v1458
      %v1590 = vpop.f32.mrb[0].mxu0
      %v1591 = vadd.f32 0.0, %v1590
      %v1592 = vpop.f32.mrb[0].mxu0
      %1593 = vmatprep.mubr.f32.mxu0 0.0
      %1594 = vmatmul.mubr.f32.gmra.mrb[0].mxu0 %v1461
      %v1595 = vpop.f32.mrb[0].mxu0
      %v1596 = vadd.f32 0.0, %v1595
      %v1597 = vpop.f32.mrb[0].mxu0
      %1598 = vmatprep.mubr.f32.mxu0 0.0
      %1599 = vmatmul.mubr.f32.gmra.mrb[0].mxu0 %v1464
      %v1600 = vpop.f32.mrb[0].mxu0
      %v1601 = vadd.f32 0.0, %v1600
      %v1602 = vpop.f32.mrb[0].mxu0
      %1603 = vmatprep.mubr.f32.mxu0 0.0
      %1604 = vmatmul.mubr.f32.gmra.mrb[0].mxu0 %v1467
      %v1605 = vpop.f32.mrb[0].mxu0
      %v1606 = vadd.f32 0.0, %v1605
      %v1607 = vpop.f32.mrb[0].mxu0
      %1608 = vmatprep.mubr.f32.mxu0 0.0
      %1609 = vmatmul.mubr.f32.gmra.mrb[0].mxu0 %v1470
      %v1610 = vpop.f32.mrb[0].mxu0
      %v1611 = vadd.f32 0.0, %v1610
      %v1612 = vpop.f32.mrb[0].mxu0
      %1613 = vmatprep.mubr.f32.mxu0 0.0
      %1614 = vmatmul.mubr.f32.gmra.mrb[0].mxu0 %v1473
      %v1615 = vpop.f32.mrb[0].mxu0
      %v1616 = vadd.f32 0.0, %v1615
      %v1617 = vpop.f32.mrb[0].mxu0
      %1618 = vmatprep.mubr.f32.mxu0 0.0
      %1619 = vmatmul.mubr.f32.gmra.mrb[0].mxu0 %v1476
      %v1620 = vpop.f32.mrb[0].mxu0
      %v1621 = vadd.f32 0.0, %v1620
      %v1622 = vpop.f32.mrb[0].mxu0
      %1623 = vmatprep.mubr.f32.mxu0 0.0
      %1624 = vmatmul.mubr.f32.gmra.mrb[0].mxu0 %v1479
      %v1625 = vpop.f32.mrb[0].mxu0
      %v1626 = vadd.f32 0.0, %v1625
      %v1627 = vpop.f32.mrb[0].mxu0
      %1628 = vdwg.mxu0
      %v1629 = vadd.f32 %v1399, %v1551
      %v1630 = vadd.f32 %v1400, %v1556
      %v1631 = vadd.f32 %v1401, %v1561
      %v1632 = vadd.f32 %v1402, %v1566
      %v1633 = vadd.f32 %v1403, %v1571
      %v1634 = vadd.f32 %v1404, %v1576
      %v1635 = vadd.f32 %v1405, %v1581
      %v1636 = vadd.f32 %v1406, %v1586
      %v1637 = vadd.f32 %v1407, %v1591
      %v1638 = vadd.f32 %v1408, %v1596
      %v1639 = vadd.f32 %v1409, %v1601
      %v1640 = vadd.f32 %v1410, %v1606
      %v1641 = vadd.f32 %v1411, %v1611
      %v1642 = vadd.f32 %v1412, %v1616
      %v1643 = vadd.f32 %v1413, %v1621
      %v1644 = vadd.f32 %v1414, %v1626
      %vm1645 = vcmask 64512
      %1646 = vst.msk [vmem:[%s254] sm:$0xff] %vm1645, %v1629
      %1647 = vst.msk [vmem:[%s254 + $0x8] sm:$0xff] %vm1645, %v1630
      %1648 = vst.msk [vmem:[%s254 + $0x20] sm:$0xff] %vm1645, %v1631
      %1649 = vst.msk [vmem:[%s254 + $0x28] sm:$0xff] %vm1645, %v1632
      %1650 = vst.msk [vmem:[%s254 + $0x40] sm:$0xff] %vm1645, %v1633
      %1651 = vst.msk [vmem:[%s254 + $0x48] sm:$0xff] %vm1645, %v1634
      %1652 = vst.msk [vmem:[%s254 + $0x60] sm:$0xff] %vm1645, %v1635
      %1653 = vst.msk [vmem:[%s254 + $0x68] sm:$0xff] %vm1645, %v1636
      %1654 = vst.msk [vmem:[%s254 + $0x80] sm:$0xff] %vm1645, %v1637
      %1655 = vst.msk [vmem:[%s254 + $0x88] sm:$0xff] %vm1645, %v1638
      %1656 = vst.msk [vmem:[%s254 + $0xa0] sm:$0xff] %vm1645, %v1639
      %1657 = vst.msk [vmem:[%s254 + $0xa8] sm:$0xff] %vm1645, %v1640
      %1658 = vst.msk [vmem:[%s254 + $0xc0] sm:$0xff] %vm1645, %v1641
      %1659 = vst.msk [vmem:[%s254 + $0xc8] sm:$0xff] %vm1645, %v1642
      %1660 = vst.msk [vmem:[%s254 + $0xe0] sm:$0xff] %vm1645, %v1643
      %1661 = vst.msk [vmem:[%s254 + $0xe8] sm:$0xff] %vm1645, %v1644
      %v1662 = vld [vmem:[%s954] sm:$0xff]
      %v1663 = vld [vmem:[%s954 + $0x8] sm:$0xff]
      %v1664 = vld [vmem:[%s954 + $0x18] sm:$0xff]
      %v1665 = vld [vmem:[%s954 + $0x20] sm:$0xff]
      %v1666 = vld [vmem:[%s954 + $0x30] sm:$0xff]
      %v1667 = vld [vmem:[%s954 + $0x38] sm:$0xff]
      %v1668 = vld [vmem:[%s954 + $0x48] sm:$0xff]
      %v1669 = vld [vmem:[%s954 + $0x50] sm:$0xff]
      %v1670 = vld [vmem:[%s954 + $0x60] sm:$0xff]
      %v1671 = vld [vmem:[%s954 + $0x68] sm:$0xff]
      %v1672 = vld [vmem:[%s954 + $0x78] sm:$0xff]
      %v1673 = vld [vmem:[%s954 + $0x80] sm:$0xff]
      %v1674 = vld [vmem:[%s954 + $0x90] sm:$0xff]
      %v1675 = vld [vmem:[%s954 + $0x98] sm:$0xff]
      %v1676 = vld [vmem:[%s954 + $0xa8] sm:$0xff]
      %v1677 = vld [vmem:[%s954 + $0xb0] sm:$0xff]
      %s1678 = scalar_lea.vmem %s238, 24
      %v1679 = vld [vmem:[%s1678] sm:$0xf]
      %v1681 = vsel %vm280, %v1662, 0
      %v1684 = vsel %vm280, %v1663, 0
      %v1687 = vsel %vm280, %v1664, 0
      %v1690 = vsel %vm280, %v1665, 0
      %v1693 = vsel %vm280, %v1666, 0
      %v1696 = vsel %vm280, %v1667, 0
      %v1699 = vsel %vm280, %v1668, 0
      %v1702 = vsel %vm280, %v1669, 0
      %v1705 = vsel %vm280, %v1670, 0
      %v1708 = vsel %vm280, %v1671, 0
      %v1711 = vsel %vm280, %v1672, 0
      %v1714 = vsel %vm280, %v1673, 0
      %v1717 = vsel %vm280, %v1674, 0
      %v1720 = vsel %vm280, %v1675, 0
      %v1723 = vsel %vm280, %v1676, 0
      %v1726 = vsel %vm280, %v1677, 0
      %v1729 = vsel %vm329, %v1679, 0
      %1731 = vmatprep.subr.mxu0 0.0
      %1732 = vmatpush1.msra.mxu0 %v1729
      %1733 = vmatprep.subr.mxu0 0.0
      %1734 = vmatpush1.msra.mxu0 0.0
      %1735 = vmatprep.subr.mxu0 0.0
      %1736 = vmatpush1.msra.mxu0 0.0
      %1737 = vmatprep.subr.mxu0 0.0
      %1738 = vmatpush1.msra.mxu0 0.0
      %1739 = vmatprep.subr.mxu0 0.0
      %1740 = vmatpush1.msra.mxu0 0.0
      %1741 = vmatprep.subr.mxu0 0.0
      %1742 = vmatpush1.msra.mxu0 0.0
      %1743 = vmatprep.subr.mxu0 0.0
      %1744 = vmatpush1.msra.mxu0 0.0
      %1745 = vmatprep.subr.mxu0 0.0
      %1746 = vmatpush1.msra.mxu0 0.0
      %1747 = vmatprep.subr.mxu0 0.0
      %1748 = vmatpush1.msra.mxu0 0.0
      %1749 = vmatprep.subr.mxu0 0.0
      %1750 = vmatpush1.msra.mxu0 0.0
      %1751 = vmatprep.subr.mxu0 0.0
      %1752 = vmatpush1.msra.mxu0 0.0
      %1753 = vmatprep.subr.mxu0 0.0
      %1754 = vmatpush1.msra.mxu0 0.0
      %1755 = vmatprep.subr.mxu0 0.0
      %1756 = vmatpush1.msra.mxu0 0.0
      %1757 = vmatprep.subr.mxu0 0.0
      %1758 = vmatpush1.msra.mxu0 0.0
      %1759 = vmatprep.subr.mxu0 0.0
      %1760 = vmatpush1.msra.mxu0 0.0
      %1761 = vmatprep.subr.mxu0 0.0
      %1762 = vmatpush1.msra.mxu0 0.0
      %1763 = vmatprep.subr.mxu0 0.0
      %1764 = vmatpush1.msra.mxu0 0.0
      %1765 = vmatprep.subr.mxu0 0.0
      %1766 = vmatpush1.msra.mxu0 0.0
      %1767 = vmatprep.subr.mxu0 0.0
      %1768 = vmatpush1.msra.mxu0 0.0
      %1769 = vmatprep.subr.mxu0 0.0
      %1770 = vmatpush1.msra.mxu0 0.0
      %1771 = vmatprep.subr.mxu0 0.0
      %1772 = vmatpush1.msra.mxu0 0.0
      %1773 = vmatprep.subr.mxu0 0.0
      %1774 = vmatpush1.msra.mxu0 0.0
      %1775 = vmatprep.subr.mxu0 0.0
      %1776 = vmatpush1.msra.mxu0 0.0
      %1777 = vmatprep.subr.mxu0 0.0
      %1778 = vmatpush1.msra.mxu0 0.0
      %1779 = vmatprep.subr.mxu0 0.0
      %1780 = vmatpush1.msra.mxu0 0.0
      %1781 = vmatprep.subr.mxu0 0.0
      %1782 = vmatpush1.msra.mxu0 0.0
      %1783 = vmatprep.subr.mxu0 0.0
      %1784 = vmatpush1.msra.mxu0 0.0
      %1785 = vmatprep.subr.mxu0 0.0
      %1786 = vmatpush1.msra.mxu0 0.0
      %1787 = vmatprep.subr.mxu0 0.0
      %1788 = vmatpush1.msra.mxu0 0.0
      %1789 = vmatprep.subr.mxu0 0.0
      %1790 = vmatpush1.msra.mxu0 0.0
      %1791 = vmatprep.subr.mxu0 0.0
      %1792 = vmatpush1.msra.mxu0 0.0
      %1793 = vmatprep.subr.mxu0 0.0
      %1794 = vmatpush1.msra.mxu0 0.0
      %1795 = vmatprep.mubr.f32.mxu0 0.0
      %1796 = vmatmul.mubr.f32.gmra.mrb[0].mxu0 %v1681
      %v1797 = vpop.f32.mrb[0].mxu0
      %v1798 = vadd.f32 0.0, %v1797
      %v1799 = vpop.f32.mrb[0].mxu0
      %1800 = vmatprep.mubr.f32.mxu0 0.0
      %1801 = vmatmul.mubr.f32.gmra.mrb[0].mxu0 %v1684
      %v1802 = vpop.f32.mrb[0].mxu0
      %v1803 = vadd.f32 0.0, %v1802
      %v1804 = vpop.f32.mrb[0].mxu0
      %1805 = vmatprep.mubr.f32.mxu0 0.0
      %1806 = vmatmul.mubr.f32.gmra.mrb[0].mxu0 %v1687
      %v1807 = vpop.f32.mrb[0].mxu0
      %v1808 = vadd.f32 0.0, %v1807
      %v1809 = vpop.f32.mrb[0].mxu0
      %1810 = vmatprep.mubr.f32.mxu0 0.0
      %1811 = vmatmul.mubr.f32.gmra.mrb[0].mxu0 %v1690
      %v1812 = vpop.f32.mrb[0].mxu0
      %v1813 = vadd.f32 0.0, %v1812
      %v1814 = vpop.f32.mrb[0].mxu0
      %1815 = vmatprep.mubr.f32.mxu0 0.0
      %1816 = vmatmul.mubr.f32.gmra.mrb[0].mxu0 %v1693
      %v1817 = vpop.f32.mrb[0].mxu0
      %v1818 = vadd.f32 0.0, %v1817
      %v1819 = vpop.f32.mrb[0].mxu0
      %1820 = vmatprep.mubr.f32.mxu0 0.0
      %1821 = vmatmul.mubr.f32.gmra.mrb[0].mxu0 %v1696
      %v1822 = vpop.f32.mrb[0].mxu0
      %v1823 = vadd.f32 0.0, %v1822
      %v1824 = vpop.f32.mrb[0].mxu0
      %1825 = vmatprep.mubr.f32.mxu0 0.0
      %1826 = vmatmul.mubr.f32.gmra.mrb[0].mxu0 %v1699
      %v1827 = vpop.f32.mrb[0].mxu0
      %v1828 = vadd.f32 0.0, %v1827
      %v1829 = vpop.f32.mrb[0].mxu0
      %1830 = vmatprep.mubr.f32.mxu0 0.0
      %1831 = vmatmul.mubr.f32.gmra.mrb[0].mxu0 %v1702
      %v1832 = vpop.f32.mrb[0].mxu0
      %v1833 = vadd.f32 0.0, %v1832
      %v1834 = vpop.f32.mrb[0].mxu0
      %1835 = vmatprep.mubr.f32.mxu0 0.0
      %1836 = vmatmul.mubr.f32.gmra.mrb[0].mxu0 %v1705
      %v1837 = vpop.f32.mrb[0].mxu0
      %v1838 = vadd.f32 0.0, %v1837
      %v1839 = vpop.f32.mrb[0].mxu0
      %1840 = vmatprep.mubr.f32.mxu0 0.0
      %1841 = vmatmul.mubr.f32.gmra.mrb[0].mxu0 %v1708
      %v1842 = vpop.f32.mrb[0].mxu0
      %v1843 = vadd.f32 0.0, %v1842
      %v1844 = vpop.f32.mrb[0].mxu0
      %1845 = vmatprep.mubr.f32.mxu0 0.0
      %1846 = vmatmul.mubr.f32.gmra.mrb[0].mxu0 %v1711
      %v1847 = vpop.f32.mrb[0].mxu0
      %v1848 = vadd.f32 0.0, %v1847
      %v1849 = vpop.f32.mrb[0].mxu0
      %1850 = vmatprep.mubr.f32.mxu0 0.0
      %1851 = vmatmul.mubr.f32.gmra.mrb[0].mxu0 %v1714
      %v1852 = vpop.f32.mrb[0].mxu0
      %v1853 = vadd.f32 0.0, %v1852
      %v1854 = vpop.f32.mrb[0].mxu0
      %1855 = vmatprep.mubr.f32.mxu0 0.0
      %1856 = vmatmul.mubr.f32.gmra.mrb[0].mxu0 %v1717
      %v1857 = vpop.f32.mrb[0].mxu0
      %v1858 = vadd.f32 0.0, %v1857
      %v1859 = vpop.f32.mrb[0].mxu0
      %1860 = vmatprep.mubr.f32.mxu0 0.0
      %1861 = vmatmul.mubr.f32.gmra.mrb[0].mxu0 %v1720
      %v1862 = vpop.f32.mrb[0].mxu0
      %v1863 = vadd.f32 0.0, %v1862
      %v1864 = vpop.f32.mrb[0].mxu0
      %1865 = vmatprep.mubr.f32.mxu0 0.0
      %1866 = vmatmul.mubr.f32.gmra.mrb[0].mxu0 %v1723
      %v1867 = vpop.f32.mrb[0].mxu0
      %v1868 = vadd.f32 0.0, %v1867
      %v1869 = vpop.f32.mrb[0].mxu0
      %1870 = vmatprep.mubr.f32.mxu0 0.0
      %1871 = vmatmul.mubr.f32.gmra.mrb[0].mxu0 %v1726
      %v1872 = vpop.f32.mrb[0].mxu0
      %v1873 = vadd.f32 0.0, %v1872
      %v1874 = vpop.f32.mrb[0].mxu0
      %1875 = vdwg.mxu0
      %v1876 = vadd.f32 %v261, %v1798
      %v1877 = vadd.f32 %v261, %v1803
      %v1878 = vadd.f32 %v261, %v1808
      %v1879 = vadd.f32 %v261, %v1813
      %v1880 = vadd.f32 %v261, %v1818
      %v1881 = vadd.f32 %v261, %v1823
      %v1882 = vadd.f32 %v261, %v1828
      %v1883 = vadd.f32 %v261, %v1833
      %v1884 = vadd.f32 %v261, %v1838
      %v1885 = vadd.f32 %v261, %v1843
      %v1886 = vadd.f32 %v261, %v1848
      %v1887 = vadd.f32 %v261, %v1853
      %v1888 = vadd.f32 %v261, %v1858
      %v1889 = vadd.f32 %v261, %v1863
      %v1890 = vadd.f32 %v261, %v1868
      %v1891 = vadd.f32 %v261, %v1873
      %v1892 = vld [vmem:[%s954 + $0x1] sm:$0xff]
      %v1893 = vld [vmem:[%s954 + $0x9] sm:$0xff]
      %v1894 = vld [vmem:[%s954 + $0x19] sm:$0xff]
      %v1895 = vld [vmem:[%s954 + $0x21] sm:$0xff]
      %v1896 = vld [vmem:[%s954 + $0x31] sm:$0xff]
      %v1897 = vld [vmem:[%s954 + $0x39] sm:$0xff]
      %v1898 = vld [vmem:[%s954 + $0x49] sm:$0xff]
      %v1899 = vld [vmem:[%s954 + $0x51] sm:$0xff]
      %v1900 = vld [vmem:[%s954 + $0x61] sm:$0xff]
      %v1901 = vld [vmem:[%s954 + $0x69] sm:$0xff]
      %v1902 = vld [vmem:[%s954 + $0x79] sm:$0xff]
      %v1903 = vld [vmem:[%s954 + $0x81] sm:$0xff]
      %v1904 = vld [vmem:[%s954 + $0x91] sm:$0xff]
      %v1905 = vld [vmem:[%s954 + $0x99] sm:$0xff]
      %v1906 = vld [vmem:[%s954 + $0xa9] sm:$0xff]
      %v1907 = vld [vmem:[%s954 + $0xb1] sm:$0xff]
      %s1908 = scalar_lea.vmem %s238, 28
      %v1909 = vld [vmem:[%s1908] sm:$0xf]
      %v1911 = vsel %vm280, %v1892, 0
      %v1914 = vsel %vm280, %v1893, 0
      %v1917 = vsel %vm280, %v1894, 0
      %v1920 = vsel %vm280, %v1895, 0
      %v1923 = vsel %vm280, %v1896, 0
      %v1926 = vsel %vm280, %v1897, 0
      %v1929 = vsel %vm280, %v1898, 0
      %v1932 = vsel %vm280, %v1899, 0
      %v1935 = vsel %vm280, %v1900, 0
      %v1938 = vsel %vm280, %v1901, 0
      %v1941 = vsel %vm280, %v1902, 0
      %v1944 = vsel %vm280, %v1903, 0
      %v1947 = vsel %vm280, %v1904, 0
      %v1950 = vsel %vm280, %v1905, 0
      %v1953 = vsel %vm280, %v1906, 0
      %v1956 = vsel %vm280, %v1907, 0
      %v1959 = vsel %vm329, %v1909, 0
      %1961 = vmatprep.subr.mxu0 0.0
      %1962 = vmatpush1.msra.mxu0 %v1959
      %1963 = vmatprep.subr.mxu0 0.0
      %1964 = vmatpush1.msra.mxu0 0.0
      %1965 = vmatprep.subr.mxu0 0.0
      %1966 = vmatpush1.msra.mxu0 0.0
      %1967 = vmatprep.subr.mxu0 0.0
      %1968 = vmatpush1.msra.mxu0 0.0
      %1969 = vmatprep.subr.mxu0 0.0
      %1970 = vmatpush1.msra.mxu0 0.0
      %1971 = vmatprep.subr.mxu0 0.0
      %1972 = vmatpush1.msra.mxu0 0.0
      %1973 = vmatprep.subr.mxu0 0.0
      %1974 = vmatpush1.msra.mxu0 0.0
      %1975 = vmatprep.subr.mxu0 0.0
      %1976 = vmatpush1.msra.mxu0 0.0
      %1977 = vmatprep.subr.mxu0 0.0
      %1978 = vmatpush1.msra.mxu0 0.0
      %1979 = vmatprep.subr.mxu0 0.0
      %1980 = vmatpush1.msra.mxu0 0.0
      %1981 = vmatprep.subr.mxu0 0.0
      %1982 = vmatpush1.msra.mxu0 0.0
      %1983 = vmatprep.subr.mxu0 0.0
      %1984 = vmatpush1.msra.mxu0 0.0
      %1985 = vmatprep.subr.mxu0 0.0
      %1986 = vmatpush1.msra.mxu0 0.0
      %1987 = vmatprep.subr.mxu0 0.0
      %1988 = vmatpush1.msra.mxu0 0.0
      %1989 = vmatprep.subr.mxu0 0.0
      %1990 = vmatpush1.msra.mxu0 0.0
      %1991 = vmatprep.subr.mxu0 0.0
      %1992 = vmatpush1.msra.mxu0 0.0
      %1993 = vmatprep.subr.mxu0 0.0
      %1994 = vmatpush1.msra.mxu0 0.0
      %1995 = vmatprep.subr.mxu0 0.0
      %1996 = vmatpush1.msra.mxu0 0.0
      %1997 = vmatprep.subr.mxu0 0.0
      %1998 = vmatpush1.msra.mxu0 0.0
      %1999 = vmatprep.subr.mxu0 0.0
      %2000 = vmatpush1.msra.mxu0 0.0
      %2001 = vmatprep.subr.mxu0 0.0
      %2002 = vmatpush1.msra.mxu0 0.0
      %2003 = vmatprep.subr.mxu0 0.0
      %2004 = vmatpush1.msra.mxu0 0.0
      %2005 = vmatprep.subr.mxu0 0.0
      %2006 = vmatpush1.msra.mxu0 0.0
      %2007 = vmatprep.subr.mxu0 0.0
      %2008 = vmatpush1.msra.mxu0 0.0
      %2009 = vmatprep.subr.mxu0 0.0
      %2010 = vmatpush1.msra.mxu0 0.0
      %2011 = vmatprep.subr.mxu0 0.0
      %2012 = vmatpush1.msra.mxu0 0.0
      %2013 = vmatprep.subr.mxu0 0.0
      %2014 = vmatpush1.msra.mxu0 0.0
      %2015 = vmatprep.subr.mxu0 0.0
      %2016 = vmatpush1.msra.mxu0 0.0
      %2017 = vmatprep.subr.mxu0 0.0
      %2018 = vmatpush1.msra.mxu0 0.0
      %2019 = vmatprep.subr.mxu0 0.0
      %2020 = vmatpush1.msra.mxu0 0.0
      %2021 = vmatprep.subr.mxu0 0.0
      %2022 = vmatpush1.msra.mxu0 0.0
      %2023 = vmatprep.subr.mxu0 0.0
      %2024 = vmatpush1.msra.mxu0 0.0
      %2025 = vmatprep.mubr.f32.mxu0 0.0
      %2026 = vmatmul.mubr.f32.gmra.mrb[0].mxu0 %v1911
      %v2027 = vpop.f32.mrb[0].mxu0
      %v2028 = vadd.f32 0.0, %v2027
      %v2029 = vpop.f32.mrb[0].mxu0
      %2030 = vmatprep.mubr.f32.mxu0 0.0
      %2031 = vmatmul.mubr.f32.gmra.mrb[0].mxu0 %v1914
      %v2032 = vpop.f32.mrb[0].mxu0
      %v2033 = vadd.f32 0.0, %v2032
      %v2034 = vpop.f32.mrb[0].mxu0
      %2035 = vmatprep.mubr.f32.mxu0 0.0
      %2036 = vmatmul.mubr.f32.gmra.mrb[0].mxu0 %v1917
      %v2037 = vpop.f32.mrb[0].mxu0
      %v2038 = vadd.f32 0.0, %v2037
      %v2039 = vpop.f32.mrb[0].mxu0
      %2040 = vmatprep.mubr.f32.mxu0 0.0
      %2041 = vmatmul.mubr.f32.gmra.mrb[0].mxu0 %v1920
      %v2042 = vpop.f32.mrb[0].mxu0
      %v2043 = vadd.f32 0.0, %v2042
      %v2044 = vpop.f32.mrb[0].mxu0
      %2045 = vmatprep.mubr.f32.mxu0 0.0
      %2046 = vmatmul.mubr.f32.gmra.mrb[0].mxu0 %v1923
      %v2047 = vpop.f32.mrb[0].mxu0
      %v2048 = vadd.f32 0.0, %v2047
      %v2049 = vpop.f32.mrb[0].mxu0
      %2050 = vmatprep.mubr.f32.mxu0 0.0
      %2051 = vmatmul.mubr.f32.gmra.mrb[0].mxu0 %v1926
      %v2052 = vpop.f32.mrb[0].mxu0
      %v2053 = vadd.f32 0.0, %v2052
      %v2054 = vpop.f32.mrb[0].mxu0
      %2055 = vmatprep.mubr.f32.mxu0 0.0
      %2056 = vmatmul.mubr.f32.gmra.mrb[0].mxu0 %v1929
      %v2057 = vpop.f32.mrb[0].mxu0
      %v2058 = vadd.f32 0.0, %v2057
      %v2059 = vpop.f32.mrb[0].mxu0
      %2060 = vmatprep.mubr.f32.mxu0 0.0
      %2061 = vmatmul.mubr.f32.gmra.mrb[0].mxu0 %v1932
      %v2062 = vpop.f32.mrb[0].mxu0
      %v2063 = vadd.f32 0.0, %v2062
      %v2064 = vpop.f32.mrb[0].mxu0
      %2065 = vmatprep.mubr.f32.mxu0 0.0
      %2066 = vmatmul.mubr.f32.gmra.mrb[0].mxu0 %v1935
      %v2067 = vpop.f32.mrb[0].mxu0
      %v2068 = vadd.f32 0.0, %v2067
      %v2069 = vpop.f32.mrb[0].mxu0
      %2070 = vmatprep.mubr.f32.mxu0 0.0
      %2071 = vmatmul.mubr.f32.gmra.mrb[0].mxu0 %v1938
      %v2072 = vpop.f32.mrb[0].mxu0
      %v2073 = vadd.f32 0.0, %v2072
      %v2074 = vpop.f32.mrb[0].mxu0
      %2075 = vmatprep.mubr.f32.mxu0 0.0
      %2076 = vmatmul.mubr.f32.gmra.mrb[0].mxu0 %v1941
      %v2077 = vpop.f32.mrb[0].mxu0
      %v2078 = vadd.f32 0.0, %v2077
      %v2079 = vpop.f32.mrb[0].mxu0
      %2080 = vmatprep.mubr.f32.mxu0 0.0
      %2081 = vmatmul.mubr.f32.gmra.mrb[0].mxu0 %v1944
      %v2082 = vpop.f32.mrb[0].mxu0
      %v2083 = vadd.f32 0.0, %v2082
      %v2084 = vpop.f32.mrb[0].mxu0
      %2085 = vmatprep.mubr.f32.mxu0 0.0
      %2086 = vmatmul.mubr.f32.gmra.mrb[0].mxu0 %v1947
      %v2087 = vpop.f32.mrb[0].mxu0
      %v2088 = vadd.f32 0.0, %v2087
      %v2089 = vpop.f32.mrb[0].mxu0
      %2090 = vmatprep.mubr.f32.mxu0 0.0
      %2091 = vmatmul.mubr.f32.gmra.mrb[0].mxu0 %v1950
      %v2092 = vpop.f32.mrb[0].mxu0
      %v2093 = vadd.f32 0.0, %v2092
      %v2094 = vpop.f32.mrb[0].mxu0
      %2095 = vmatprep.mubr.f32.mxu0 0.0
      %2096 = vmatmul.mubr.f32.gmra.mrb[0].mxu0 %v1953
      %v2097 = vpop.f32.mrb[0].mxu0
      %v2098 = vadd.f32 0.0, %v2097
      %v2099 = vpop.f32.mrb[0].mxu0
      %2100 = vmatprep.mubr.f32.mxu0 0.0
      %2101 = vmatmul.mubr.f32.gmra.mrb[0].mxu0 %v1956
      %v2102 = vpop.f32.mrb[0].mxu0
      %v2103 = vadd.f32 0.0, %v2102
      %v2104 = vpop.f32.mrb[0].mxu0
      %2105 = vdwg.mxu0
      %v2106 = vadd.f32 %v1876, %v2028
      %v2107 = vadd.f32 %v1877, %v2033
      %v2108 = vadd.f32 %v1878, %v2038
      %v2109 = vadd.f32 %v1879, %v2043
      %v2110 = vadd.f32 %v1880, %v2048
      %v2111 = vadd.f32 %v1881, %v2053
      %v2112 = vadd.f32 %v1882, %v2058
      %v2113 = vadd.f32 %v1883, %v2063
      %v2114 = vadd.f32 %v1884, %v2068
      %v2115 = vadd.f32 %v1885, %v2073
      %v2116 = vadd.f32 %v1886, %v2078
      %v2117 = vadd.f32 %v1887, %v2083
      %v2118 = vadd.f32 %v1888, %v2088
      %v2119 = vadd.f32 %v1889, %v2093
      %v2120 = vadd.f32 %v1890, %v2098
      %v2121 = vadd.f32 %v1891, %v2103
      %v2122 = vld [vmem:[%s954 + $0x2] sm:$0xff]
      %v2123 = vld [vmem:[%s954 + $0xa] sm:$0xff]
      %v2124 = vld [vmem:[%s954 + $0x1a] sm:$0xff]
      %v2125 = vld [vmem:[%s954 + $0x22] sm:$0xff]
      %v2126 = vld [vmem:[%s954 + $0x32] sm:$0xff]
      %v2127 = vld [vmem:[%s954 + $0x3a] sm:$0xff]
      %v2128 = vld [vmem:[%s954 + $0x4a] sm:$0xff]
      %v2129 = vld [vmem:[%s954 + $0x52] sm:$0xff]
      %v2130 = vld [vmem:[%s954 + $0x62] sm:$0xff]
      %v2131 = vld [vmem:[%s954 + $0x6a] sm:$0xff]
      %v2132 = vld [vmem:[%s954 + $0x7a] sm:$0xff]
      %v2133 = vld [vmem:[%s954 + $0x82] sm:$0xff]
      %v2134 = vld [vmem:[%s954 + $0x92] sm:$0xff]
      %v2135 = vld [vmem:[%s954 + $0x9a] sm:$0xff]
      %v2136 = vld [vmem:[%s954 + $0xaa] sm:$0xff]
      %v2137 = vld [vmem:[%s954 + $0xb2] sm:$0xff]
      %s2138 = scalar_lea.vmem %s238, 32
      %v2139 = vld [vmem:[%s2138] sm:$0xf]
      %v2141 = vsel %vm280, %v2122, 0
      %v2144 = vsel %vm280, %v2123, 0
      %v2147 = vsel %vm280, %v2124, 0
      %v2150 = vsel %vm280, %v2125, 0
      %v2153 = vsel %vm280, %v2126, 0
      %v2156 = vsel %vm280, %v2127, 0
      %v2159 = vsel %vm280, %v2128, 0
      %v2162 = vsel %vm280, %v2129, 0
      %v2165 = vsel %vm280, %v2130, 0
      %v2168 = vsel %vm280, %v2131, 0
      %v2171 = vsel %vm280, %v2132, 0
      %v2174 = vsel %vm280, %v2133, 0
      %v2177 = vsel %vm280, %v2134, 0
      %v2180 = vsel %vm280, %v2135, 0
      %v2183 = vsel %vm280, %v2136, 0
      %v2186 = vsel %vm280, %v2137, 0
      %v2189 = vsel %vm329, %v2139, 0
      %2191 = vmatprep.subr.mxu0 0.0
      %2192 = vmatpush1.msra.mxu0 %v2189
      %2193 = vmatprep.subr.mxu0 0.0
      %2194 = vmatpush1.msra.mxu0 0.0
      %2195 = vmatprep.subr.mxu0 0.0
      %2196 = vmatpush1.msra.mxu0 0.0
      %2197 = vmatprep.subr.mxu0 0.0
      %2198 = vmatpush1.msra.mxu0 0.0
      %2199 = vmatprep.subr.mxu0 0.0
      %2200 = vmatpush1.msra.mxu0 0.0
      %2201 = vmatprep.subr.mxu0 0.0
      %2202 = vmatpush1.msra.mxu0 0.0
      %2203 = vmatprep.subr.mxu0 0.0
      %2204 = vmatpush1.msra.mxu0 0.0
      %2205 = vmatprep.subr.mxu0 0.0
      %2206 = vmatpush1.msra.mxu0 0.0
      %2207 = vmatprep.subr.mxu0 0.0
      %2208 = vmatpush1.msra.mxu0 0.0
      %2209 = vmatprep.subr.mxu0 0.0
      %2210 = vmatpush1.msra.mxu0 0.0
      %2211 = vmatprep.subr.mxu0 0.0
      %2212 = vmatpush1.msra.mxu0 0.0
      %2213 = vmatprep.subr.mxu0 0.0
      %2214 = vmatpush1.msra.mxu0 0.0
      %2215 = vmatprep.subr.mxu0 0.0
      %2216 = vmatpush1.msra.mxu0 0.0
      %2217 = vmatprep.subr.mxu0 0.0
      %2218 = vmatpush1.msra.mxu0 0.0
      %2219 = vmatprep.subr.mxu0 0.0
      %2220 = vmatpush1.msra.mxu0 0.0
      %2221 = vmatprep.subr.mxu0 0.0
      %2222 = vmatpush1.msra.mxu0 0.0
      %2223 = vmatprep.subr.mxu0 0.0
      %2224 = vmatpush1.msra.mxu0 0.0
      %2225 = vmatprep.subr.mxu0 0.0
      %2226 = vmatpush1.msra.mxu0 0.0
      %2227 = vmatprep.subr.mxu0 0.0
      %2228 = vmatpush1.msra.mxu0 0.0
      %2229 = vmatprep.subr.mxu0 0.0
      %2230 = vmatpush1.msra.mxu0 0.0
      %2231 = vmatprep.subr.mxu0 0.0
      %2232 = vmatpush1.msra.mxu0 0.0
      %2233 = vmatprep.subr.mxu0 0.0
      %2234 = vmatpush1.msra.mxu0 0.0
      %2235 = vmatprep.subr.mxu0 0.0
      %2236 = vmatpush1.msra.mxu0 0.0
      %2237 = vmatprep.subr.mxu0 0.0
      %2238 = vmatpush1.msra.mxu0 0.0
      %2239 = vmatprep.subr.mxu0 0.0
      %2240 = vmatpush1.msra.mxu0 0.0
      %2241 = vmatprep.subr.mxu0 0.0
      %2242 = vmatpush1.msra.mxu0 0.0
      %2243 = vmatprep.subr.mxu0 0.0
      %2244 = vmatpush1.msra.mxu0 0.0
      %2245 = vmatprep.subr.mxu0 0.0
      %2246 = vmatpush1.msra.mxu0 0.0
      %2247 = vmatprep.subr.mxu0 0.0
      %2248 = vmatpush1.msra.mxu0 0.0
      %2249 = vmatprep.subr.mxu0 0.0
      %2250 = vmatpush1.msra.mxu0 0.0
      %2251 = vmatprep.subr.mxu0 0.0
      %2252 = vmatpush1.msra.mxu0 0.0
      %2253 = vmatprep.subr.mxu0 0.0
      %2254 = vmatpush1.msra.mxu0 0.0
      %2255 = vmatprep.mubr.f32.mxu0 0.0
      %2256 = vmatmul.mubr.f32.gmra.mrb[0].mxu0 %v2141
      %v2257 = vpop.f32.mrb[0].mxu0
      %v2258 = vadd.f32 0.0, %v2257
      %v2259 = vpop.f32.mrb[0].mxu0
      %2260 = vmatprep.mubr.f32.mxu0 0.0
      %2261 = vmatmul.mubr.f32.gmra.mrb[0].mxu0 %v2144
      %v2262 = vpop.f32.mrb[0].mxu0
      %v2263 = vadd.f32 0.0, %v2262
      %v2264 = vpop.f32.mrb[0].mxu0
      %2265 = vmatprep.mubr.f32.mxu0 0.0
      %2266 = vmatmul.mubr.f32.gmra.mrb[0].mxu0 %v2147
      %v2267 = vpop.f32.mrb[0].mxu0
      %v2268 = vadd.f32 0.0, %v2267
      %v2269 = vpop.f32.mrb[0].mxu0
      %2270 = vmatprep.mubr.f32.mxu0 0.0
      %2271 = vmatmul.mubr.f32.gmra.mrb[0].mxu0 %v2150
      %v2272 = vpop.f32.mrb[0].mxu0
      %v2273 = vadd.f32 0.0, %v2272
      %v2274 = vpop.f32.mrb[0].mxu0
      %2275 = vmatprep.mubr.f32.mxu0 0.0
      %2276 = vmatmul.mubr.f32.gmra.mrb[0].mxu0 %v2153
      %v2277 = vpop.f32.mrb[0].mxu0
      %v2278 = vadd.f32 0.0, %v2277
      %v2279 = vpop.f32.mrb[0].mxu0
      %2280 = vmatprep.mubr.f32.mxu0 0.0
      %2281 = vmatmul.mubr.f32.gmra.mrb[0].mxu0 %v2156
      %v2282 = vpop.f32.mrb[0].mxu0
      %v2283 = vadd.f32 0.0, %v2282
      %v2284 = vpop.f32.mrb[0].mxu0
      %2285 = vmatprep.mubr.f32.mxu0 0.0
      %2286 = vmatmul.mubr.f32.gmra.mrb[0].mxu0 %v2159
      %v2287 = vpop.f32.mrb[0].mxu0
      %v2288 = vadd.f32 0.0, %v2287
      %v2289 = vpop.f32.mrb[0].mxu0
      %2290 = vmatprep.mubr.f32.mxu0 0.0
      %2291 = vmatmul.mubr.f32.gmra.mrb[0].mxu0 %v2162
      %v2292 = vpop.f32.mrb[0].mxu0
      %v2293 = vadd.f32 0.0, %v2292
      %v2294 = vpop.f32.mrb[0].mxu0
      %2295 = vmatprep.mubr.f32.mxu0 0.0
      %2296 = vmatmul.mubr.f32.gmra.mrb[0].mxu0 %v2165
      %v2297 = vpop.f32.mrb[0].mxu0
      %v2298 = vadd.f32 0.0, %v2297
      %v2299 = vpop.f32.mrb[0].mxu0
      %2300 = vmatprep.mubr.f32.mxu0 0.0
      %2301 = vmatmul.mubr.f32.gmra.mrb[0].mxu0 %v2168
      %v2302 = vpop.f32.mrb[0].mxu0
      %v2303 = vadd.f32 0.0, %v2302
      %v2304 = vpop.f32.mrb[0].mxu0
      %2305 = vmatprep.mubr.f32.mxu0 0.0
      %2306 = vmatmul.mubr.f32.gmra.mrb[0].mxu0 %v2171
      %v2307 = vpop.f32.mrb[0].mxu0
      %v2308 = vadd.f32 0.0, %v2307
      %v2309 = vpop.f32.mrb[0].mxu0
      %2310 = vmatprep.mubr.f32.mxu0 0.0
      %2311 = vmatmul.mubr.f32.gmra.mrb[0].mxu0 %v2174
      %v2312 = vpop.f32.mrb[0].mxu0
      %v2313 = vadd.f32 0.0, %v2312
      %v2314 = vpop.f32.mrb[0].mxu0
      %2315 = vmatprep.mubr.f32.mxu0 0.0
      %2316 = vmatmul.mubr.f32.gmra.mrb[0].mxu0 %v2177
      %v2317 = vpop.f32.mrb[0].mxu0
      %v2318 = vadd.f32 0.0, %v2317
      %v2319 = vpop.f32.mrb[0].mxu0
      %2320 = vmatprep.mubr.f32.mxu0 0.0
      %2321 = vmatmul.mubr.f32.gmra.mrb[0].mxu0 %v2180
      %v2322 = vpop.f32.mrb[0].mxu0
      %v2323 = vadd.f32 0.0, %v2322
      %v2324 = vpop.f32.mrb[0].mxu0
      %2325 = vmatprep.mubr.f32.mxu0 0.0
      %2326 = vmatmul.mubr.f32.gmra.mrb[0].mxu0 %v2183
      %v2327 = vpop.f32.mrb[0].mxu0
      %v2328 = vadd.f32 0.0, %v2327
      %v2329 = vpop.f32.mrb[0].mxu0
      %2330 = vmatprep.mubr.f32.mxu0 0.0
      %2331 = vmatmul.mubr.f32.gmra.mrb[0].mxu0 %v2186
      %v2332 = vpop.f32.mrb[0].mxu0
      %v2333 = vadd.f32 0.0, %v2332
      %v2334 = vpop.f32.mrb[0].mxu0
      %2335 = vdwg.mxu0
      %v2336 = vadd.f32 %v2106, %v2258
      %v2337 = vadd.f32 %v2107, %v2263
      %v2338 = vadd.f32 %v2108, %v2268
      %v2339 = vadd.f32 %v2109, %v2273
      %v2340 = vadd.f32 %v2110, %v2278
      %v2341 = vadd.f32 %v2111, %v2283
      %v2342 = vadd.f32 %v2112, %v2288
      %v2343 = vadd.f32 %v2113, %v2293
      %v2344 = vadd.f32 %v2114, %v2298
      %v2345 = vadd.f32 %v2115, %v2303
      %v2346 = vadd.f32 %v2116, %v2308
      %v2347 = vadd.f32 %v2117, %v2313
      %v2348 = vadd.f32 %v2118, %v2318
      %v2349 = vadd.f32 %v2119, %v2323
      %v2350 = vadd.f32 %v2120, %v2328
      %v2351 = vadd.f32 %v2121, %v2333
      %s2352 = scalar_lea.vmem %s234, 48
      %v2353 = vld [vmem:[%s2352] sm:$0xff]
      %v2354 = vld [vmem:[%s2352 + $0x8] sm:$0xff]
      %v2355 = vld [vmem:[%s2352 + $0x18] sm:$0xff]
      %v2356 = vld [vmem:[%s2352 + $0x20] sm:$0xff]
      %v2357 = vld [vmem:[%s2352 + $0x30] sm:$0xff]
      %v2358 = vld [vmem:[%s2352 + $0x38] sm:$0xff]
      %v2359 = vld [vmem:[%s2352 + $0x48] sm:$0xff]
      %v2360 = vld [vmem:[%s2352 + $0x50] sm:$0xff]
      %v2361 = vld [vmem:[%s2352 + $0x60] sm:$0xff]
      %v2362 = vld [vmem:[%s2352 + $0x68] sm:$0xff]
      %v2363 = vld [vmem:[%s2352 + $0x78] sm:$0xff]
      %v2364 = vld [vmem:[%s2352 + $0x80] sm:$0xff]
      %v2365 = vld [vmem:[%s2352 + $0x90] sm:$0xff]
      %v2366 = vld [vmem:[%s2352 + $0x98] sm:$0xff]
      %v2367 = vld [vmem:[%s2352 + $0xa8] sm:$0xff]
      %v2368 = vld [vmem:[%s2352 + $0xb0] sm:$0xff]
      %s2369 = scalar_lea.vmem %s238, 36
      %v2370 = vld [vmem:[%s2369] sm:$0xf]
      %v2372 = vsel %vm280, %v2353, 0
      %v2375 = vsel %vm280, %v2354, 0
      %v2378 = vsel %vm280, %v2355, 0
      %v2381 = vsel %vm280, %v2356, 0
      %v2384 = vsel %vm280, %v2357, 0
      %v2387 = vsel %vm280, %v2358, 0
      %v2390 = vsel %vm280, %v2359, 0
      %v2393 = vsel %vm280, %v2360, 0
      %v2396 = vsel %vm280, %v2361, 0
      %v2399 = vsel %vm280, %v2362, 0
      %v2402 = vsel %vm280, %v2363, 0
      %v2405 = vsel %vm280, %v2364, 0
      %v2408 = vsel %vm280, %v2365, 0
      %v2411 = vsel %vm280, %v2366, 0
      %v2414 = vsel %vm280, %v2367, 0
      %v2417 = vsel %vm280, %v2368, 0
      %v2420 = vsel %vm329, %v2370, 0
      %2422 = vmatprep.subr.mxu0 0.0
      %2423 = vmatpush1.msra.mxu0 %v2420
      %2424 = vmatprep.subr.mxu0 0.0
      %2425 = vmatpush1.msra.mxu0 0.0
      %2426 = vmatprep.subr.mxu0 0.0
      %2427 = vmatpush1.msra.mxu0 0.0
      %2428 = vmatprep.subr.mxu0 0.0
      %2429 = vmatpush1.msra.mxu0 0.0
      %2430 = vmatprep.subr.mxu0 0.0
      %2431 = vmatpush1.msra.mxu0 0.0
      %2432 = vmatprep.subr.mxu0 0.0
      %2433 = vmatpush1.msra.mxu0 0.0
      %2434 = vmatprep.subr.mxu0 0.0
      %2435 = vmatpush1.msra.mxu0 0.0
      %2436 = vmatprep.subr.mxu0 0.0
      %2437 = vmatpush1.msra.mxu0 0.0
      %2438 = vmatprep.subr.mxu0 0.0
      %2439 = vmatpush1.msra.mxu0 0.0
      %2440 = vmatprep.subr.mxu0 0.0
      %2441 = vmatpush1.msra.mxu0 0.0
      %2442 = vmatprep.subr.mxu0 0.0
      %2443 = vmatpush1.msra.mxu0 0.0
      %2444 = vmatprep.subr.mxu0 0.0
      %2445 = vmatpush1.msra.mxu0 0.0
      %2446 = vmatprep.subr.mxu0 0.0
      %2447 = vmatpush1.msra.mxu0 0.0
      %2448 = vmatprep.subr.mxu0 0.0
      %2449 = vmatpush1.msra.mxu0 0.0
      %2450 = vmatprep.subr.mxu0 0.0
      %2451 = vmatpush1.msra.mxu0 0.0
      %2452 = vmatprep.subr.mxu0 0.0
      %2453 = vmatpush1.msra.mxu0 0.0
      %2454 = vmatprep.subr.mxu0 0.0
      %2455 = vmatpush1.msra.mxu0 0.0
      %2456 = vmatprep.subr.mxu0 0.0
      %2457 = vmatpush1.msra.mxu0 0.0
      %2458 = vmatprep.subr.mxu0 0.0
      %2459 = vmatpush1.msra.mxu0 0.0
      %2460 = vmatprep.subr.mxu0 0.0
      %2461 = vmatpush1.msra.mxu0 0.0
      %2462 = vmatprep.subr.mxu0 0.0
      %2463 = vmatpush1.msra.mxu0 0.0
      %2464 = vmatprep.subr.mxu0 0.0
      %2465 = vmatpush1.msra.mxu0 0.0
      %2466 = vmatprep.subr.mxu0 0.0
      %2467 = vmatpush1.msra.mxu0 0.0
      %2468 = vmatprep.subr.mxu0 0.0
      %2469 = vmatpush1.msra.mxu0 0.0
      %2470 = vmatprep.subr.mxu0 0.0
      %2471 = vmatpush1.msra.mxu0 0.0
      %2472 = vmatprep.subr.mxu0 0.0
      %2473 = vmatpush1.msra.mxu0 0.0
      %2474 = vmatprep.subr.mxu0 0.0
      %2475 = vmatpush1.msra.mxu0 0.0
      %2476 = vmatprep.subr.mxu0 0.0
      %2477 = vmatpush1.msra.mxu0 0.0
      %2478 = vmatprep.subr.mxu0 0.0
      %2479 = vmatpush1.msra.mxu0 0.0
      %2480 = vmatprep.subr.mxu0 0.0
      %2481 = vmatpush1.msra.mxu0 0.0
      %2482 = vmatprep.subr.mxu0 0.0
      %2483 = vmatpush1.msra.mxu0 0.0
      %2484 = vmatprep.subr.mxu0 0.0
      %2485 = vmatpush1.msra.mxu0 0.0
      %2486 = vmatprep.mubr.f32.mxu0 0.0
      %2487 = vmatmul.mubr.f32.gmra.mrb[0].mxu0 %v2372
      %v2488 = vpop.f32.mrb[0].mxu0
      %v2489 = vadd.f32 0.0, %v2488
      %v2490 = vpop.f32.mrb[0].mxu0
      %2491 = vmatprep.mubr.f32.mxu0 0.0
      %2492 = vmatmul.mubr.f32.gmra.mrb[0].mxu0 %v2375
      %v2493 = vpop.f32.mrb[0].mxu0
      %v2494 = vadd.f32 0.0, %v2493
      %v2495 = vpop.f32.mrb[0].mxu0
      %2496 = vmatprep.mubr.f32.mxu0 0.0
      %2497 = vmatmul.mubr.f32.gmra.mrb[0].mxu0 %v2378
      %v2498 = vpop.f32.mrb[0].mxu0
      %v2499 = vadd.f32 0.0, %v2498
      %v2500 = vpop.f32.mrb[0].mxu0
      %2501 = vmatprep.mubr.f32.mxu0 0.0
      %2502 = vmatmul.mubr.f32.gmra.mrb[0].mxu0 %v2381
      %v2503 = vpop.f32.mrb[0].mxu0
      %v2504 = vadd.f32 0.0, %v2503
      %v2505 = vpop.f32.mrb[0].mxu0
      %2506 = vmatprep.mubr.f32.mxu0 0.0
      %2507 = vmatmul.mubr.f32.gmra.mrb[0].mxu0 %v2384
      %v2508 = vpop.f32.mrb[0].mxu0
      %v2509 = vadd.f32 0.0, %v2508
      %v2510 = vpop.f32.mrb[0].mxu0
      %2511 = vmatprep.mubr.f32.mxu0 0.0
      %2512 = vmatmul.mubr.f32.gmra.mrb[0].mxu0 %v2387
      %v2513 = vpop.f32.mrb[0].mxu0
      %v2514 = vadd.f32 0.0, %v2513
      %v2515 = vpop.f32.mrb[0].mxu0
      %2516 = vmatprep.mubr.f32.mxu0 0.0
      %2517 = vmatmul.mubr.f32.gmra.mrb[0].mxu0 %v2390
      %v2518 = vpop.f32.mrb[0].mxu0
      %v2519 = vadd.f32 0.0, %v2518
      %v2520 = vpop.f32.mrb[0].mxu0
      %2521 = vmatprep.mubr.f32.mxu0 0.0
      %2522 = vmatmul.mubr.f32.gmra.mrb[0].mxu0 %v2393
      %v2523 = vpop.f32.mrb[0].mxu0
      %v2524 = vadd.f32 0.0, %v2523
      %v2525 = vpop.f32.mrb[0].mxu0
      %2526 = vmatprep.mubr.f32.mxu0 0.0
      %2527 = vmatmul.mubr.f32.gmra.mrb[0].mxu0 %v2396
      %v2528 = vpop.f32.mrb[0].mxu0
      %v2529 = vadd.f32 0.0, %v2528
      %v2530 = vpop.f32.mrb[0].mxu0
      %2531 = vmatprep.mubr.f32.mxu0 0.0
      %2532 = vmatmul.mubr.f32.gmra.mrb[0].mxu0 %v2399
      %v2533 = vpop.f32.mrb[0].mxu0
      %v2534 = vadd.f32 0.0, %v2533
      %v2535 = vpop.f32.mrb[0].mxu0
      %2536 = vmatprep.mubr.f32.mxu0 0.0
      %2537 = vmatmul.mubr.f32.gmra.mrb[0].mxu0 %v2402
      %v2538 = vpop.f32.mrb[0].mxu0
      %v2539 = vadd.f32 0.0, %v2538
      %v2540 = vpop.f32.mrb[0].mxu0
      %2541 = vmatprep.mubr.f32.mxu0 0.0
      %2542 = vmatmul.mubr.f32.gmra.mrb[0].mxu0 %v2405
      %v2543 = vpop.f32.mrb[0].mxu0
      %v2544 = vadd.f32 0.0, %v2543
      %v2545 = vpop.f32.mrb[0].mxu0
      %2546 = vmatprep.mubr.f32.mxu0 0.0
      %2547 = vmatmul.mubr.f32.gmra.mrb[0].mxu0 %v2408
      %v2548 = vpop.f32.mrb[0].mxu0
      %v2549 = vadd.f32 0.0, %v2548
      %v2550 = vpop.f32.mrb[0].mxu0
      %2551 = vmatprep.mubr.f32.mxu0 0.0
      %2552 = vmatmul.mubr.f32.gmra.mrb[0].mxu0 %v2411
      %v2553 = vpop.f32.mrb[0].mxu0
      %v2554 = vadd.f32 0.0, %v2553
      %v2555 = vpop.f32.mrb[0].mxu0
      %2556 = vmatprep.mubr.f32.mxu0 0.0
      %2557 = vmatmul.mubr.f32.gmra.mrb[0].mxu0 %v2414
      %v2558 = vpop.f32.mrb[0].mxu0
      %v2559 = vadd.f32 0.0, %v2558
      %v2560 = vpop.f32.mrb[0].mxu0
      %2561 = vmatprep.mubr.f32.mxu0 0.0
      %2562 = vmatmul.mubr.f32.gmra.mrb[0].mxu0 %v2417
      %v2563 = vpop.f32.mrb[0].mxu0
      %v2564 = vadd.f32 0.0, %v2563
      %v2565 = vpop.f32.mrb[0].mxu0
      %2566 = vdwg.mxu0
      %v2567 = vadd.f32 %v2336, %v2489
      %v2568 = vadd.f32 %v2337, %v2494
      %v2569 = vadd.f32 %v2338, %v2499
      %v2570 = vadd.f32 %v2339, %v2504
      %v2571 = vadd.f32 %v2340, %v2509
      %v2572 = vadd.f32 %v2341, %v2514
      %v2573 = vadd.f32 %v2342, %v2519
      %v2574 = vadd.f32 %v2343, %v2524
      %v2575 = vadd.f32 %v2344, %v2529
      %v2576 = vadd.f32 %v2345, %v2534
      %v2577 = vadd.f32 %v2346, %v2539
      %v2578 = vadd.f32 %v2347, %v2544
      %v2579 = vadd.f32 %v2348, %v2549
      %v2580 = vadd.f32 %v2349, %v2554
      %v2581 = vadd.f32 %v2350, %v2559
      %v2582 = vadd.f32 %v2351, %v2564
      %v2583 = vld [vmem:[%s2352 + $0x1] sm:$0xff]
      %v2584 = vld [vmem:[%s2352 + $0x9] sm:$0xff]
      %v2585 = vld [vmem:[%s2352 + $0x19] sm:$0xff]
      %v2586 = vld [vmem:[%s2352 + $0x21] sm:$0xff]
      %v2587 = vld [vmem:[%s2352 + $0x31] sm:$0xff]
      %v2588 = vld [vmem:[%s2352 + $0x39] sm:$0xff]
      %v2589 = vld [vmem:[%s2352 + $0x49] sm:$0xff]
      %v2590 = vld [vmem:[%s2352 + $0x51] sm:$0xff]
      %v2591 = vld [vmem:[%s2352 + $0x61] sm:$0xff]
      %v2592 = vld [vmem:[%s2352 + $0x69] sm:$0xff]
      %v2593 = vld [vmem:[%s2352 + $0x79] sm:$0xff]
      %v2594 = vld [vmem:[%s2352 + $0x81] sm:$0xff]
      %v2595 = vld [vmem:[%s2352 + $0x91] sm:$0xff]
      %v2596 = vld [vmem:[%s2352 + $0x99] sm:$0xff]
      %v2597 = vld [vmem:[%s2352 + $0xa9] sm:$0xff]
      %v2598 = vld [vmem:[%s2352 + $0xb1] sm:$0xff]
      %s2599 = scalar_lea.vmem %s238, 40
      %v2600 = vld [vmem:[%s2599] sm:$0xf]
      %v2602 = vsel %vm280, %v2583, 0
      %v2605 = vsel %vm280, %v2584, 0
      %v2608 = vsel %vm280, %v2585, 0
      %v2611 = vsel %vm280, %v2586, 0
      %v2614 = vsel %vm280, %v2587, 0
      %v2617 = vsel %vm280, %v2588, 0
      %v2620 = vsel %vm280, %v2589, 0
      %v2623 = vsel %vm280, %v2590, 0
      %v2626 = vsel %vm280, %v2591, 0
      %v2629 = vsel %vm280, %v2592, 0
      %v2632 = vsel %vm280, %v2593, 0
      %v2635 = vsel %vm280, %v2594, 0
      %v2638 = vsel %vm280, %v2595, 0
      %v2641 = vsel %vm280, %v2596, 0
      %v2644 = vsel %vm280, %v2597, 0
      %v2647 = vsel %vm280, %v2598, 0
      %v2650 = vsel %vm329, %v2600, 0
      %2652 = vmatprep.subr.mxu0 0.0
      %2653 = vmatpush1.msra.mxu0 %v2650
      %2654 = vmatprep.subr.mxu0 0.0
      %2655 = vmatpush1.msra.mxu0 0.0
      %2656 = vmatprep.subr.mxu0 0.0
      %2657 = vmatpush1.msra.mxu0 0.0
      %2658 = vmatprep.subr.mxu0 0.0
      %2659 = vmatpush1.msra.mxu0 0.0
      %2660 = vmatprep.subr.mxu0 0.0
      %2661 = vmatpush1.msra.mxu0 0.0
      %2662 = vmatprep.subr.mxu0 0.0
      %2663 = vmatpush1.msra.mxu0 0.0
      %2664 = vmatprep.subr.mxu0 0.0
      %2665 = vmatpush1.msra.mxu0 0.0
      %2666 = vmatprep.subr.mxu0 0.0
      %2667 = vmatpush1.msra.mxu0 0.0
      %2668 = vmatprep.subr.mxu0 0.0
      %2669 = vmatpush1.msra.mxu0 0.0
      %2670 = vmatprep.subr.mxu0 0.0
      %2671 = vmatpush1.msra.mxu0 0.0
      %2672 = vmatprep.subr.mxu0 0.0
      %2673 = vmatpush1.msra.mxu0 0.0
      %2674 = vmatprep.subr.mxu0 0.0
      %2675 = vmatpush1.msra.mxu0 0.0
      %2676 = vmatprep.subr.mxu0 0.0
      %2677 = vmatpush1.msra.mxu0 0.0
      %2678 = vmatprep.subr.mxu0 0.0
      %2679 = vmatpush1.msra.mxu0 0.0
      %2680 = vmatprep.subr.mxu0 0.0
      %2681 = vmatpush1.msra.mxu0 0.0
      %2682 = vmatprep.subr.mxu0 0.0
      %2683 = vmatpush1.msra.mxu0 0.0
      %2684 = vmatprep.subr.mxu0 0.0
      %2685 = vmatpush1.msra.mxu0 0.0
      %2686 = vmatprep.subr.mxu0 0.0
      %2687 = vmatpush1.msra.mxu0 0.0
      %2688 = vmatprep.subr.mxu0 0.0
      %2689 = vmatpush1.msra.mxu0 0.0
      %2690 = vmatprep.subr.mxu0 0.0
      %2691 = vmatpush1.msra.mxu0 0.0
      %2692 = vmatprep.subr.mxu0 0.0
      %2693 = vmatpush1.msra.mxu0 0.0
      %2694 = vmatprep.subr.mxu0 0.0
      %2695 = vmatpush1.msra.mxu0 0.0
      %2696 = vmatprep.subr.mxu0 0.0
      %2697 = vmatpush1.msra.mxu0 0.0
      %2698 = vmatprep.subr.mxu0 0.0
      %2699 = vmatpush1.msra.mxu0 0.0
      %2700 = vmatprep.subr.mxu0 0.0
      %2701 = vmatpush1.msra.mxu0 0.0
      %2702 = vmatprep.subr.mxu0 0.0
      %2703 = vmatpush1.msra.mxu0 0.0
      %2704 = vmatprep.subr.mxu0 0.0
      %2705 = vmatpush1.msra.mxu0 0.0
      %2706 = vmatprep.subr.mxu0 0.0
      %2707 = vmatpush1.msra.mxu0 0.0
      %2708 = vmatprep.subr.mxu0 0.0
      %2709 = vmatpush1.msra.mxu0 0.0
      %2710 = vmatprep.subr.mxu0 0.0
      %2711 = vmatpush1.msra.mxu0 0.0
      %2712 = vmatprep.subr.mxu0 0.0
      %2713 = vmatpush1.msra.mxu0 0.0
      %2714 = vmatprep.subr.mxu0 0.0
      %2715 = vmatpush1.msra.mxu0 0.0
      %2716 = vmatprep.mubr.f32.mxu0 0.0
      %2717 = vmatmul.mubr.f32.gmra.mrb[0].mxu0 %v2602
      %v2718 = vpop.f32.mrb[0].mxu0
      %v2719 = vadd.f32 0.0, %v2718
      %v2720 = vpop.f32.mrb[0].mxu0
      %2721 = vmatprep.mubr.f32.mxu0 0.0
      %2722 = vmatmul.mubr.f32.gmra.mrb[0].mxu0 %v2605
      %v2723 = vpop.f32.mrb[0].mxu0
      %v2724 = vadd.f32 0.0, %v2723
      %v2725 = vpop.f32.mrb[0].mxu0
      %2726 = vmatprep.mubr.f32.mxu0 0.0
      %2727 = vmatmul.mubr.f32.gmra.mrb[0].mxu0 %v2608
      %v2728 = vpop.f32.mrb[0].mxu0
      %v2729 = vadd.f32 0.0, %v2728
      %v2730 = vpop.f32.mrb[0].mxu0
      %2731 = vmatprep.mubr.f32.mxu0 0.0
      %2732 = vmatmul.mubr.f32.gmra.mrb[0].mxu0 %v2611
      %v2733 = vpop.f32.mrb[0].mxu0
      %v2734 = vadd.f32 0.0, %v2733
      %v2735 = vpop.f32.mrb[0].mxu0
      %2736 = vmatprep.mubr.f32.mxu0 0.0
      %2737 = vmatmul.mubr.f32.gmra.mrb[0].mxu0 %v2614
      %v2738 = vpop.f32.mrb[0].mxu0
      %v2739 = vadd.f32 0.0, %v2738
      %v2740 = vpop.f32.mrb[0].mxu0
      %2741 = vmatprep.mubr.f32.mxu0 0.0
      %2742 = vmatmul.mubr.f32.gmra.mrb[0].mxu0 %v2617
      %v2743 = vpop.f32.mrb[0].mxu0
      %v2744 = vadd.f32 0.0, %v2743
      %v2745 = vpop.f32.mrb[0].mxu0
      %2746 = vmatprep.mubr.f32.mxu0 0.0
      %2747 = vmatmul.mubr.f32.gmra.mrb[0].mxu0 %v2620
      %v2748 = vpop.f32.mrb[0].mxu0
      %v2749 = vadd.f32 0.0, %v2748
      %v2750 = vpop.f32.mrb[0].mxu0
      %2751 = vmatprep.mubr.f32.mxu0 0.0
      %2752 = vmatmul.mubr.f32.gmra.mrb[0].mxu0 %v2623
      %v2753 = vpop.f32.mrb[0].mxu0
      %v2754 = vadd.f32 0.0, %v2753
      %v2755 = vpop.f32.mrb[0].mxu0
      %2756 = vmatprep.mubr.f32.mxu0 0.0
      %2757 = vmatmul.mubr.f32.gmra.mrb[0].mxu0 %v2626
      %v2758 = vpop.f32.mrb[0].mxu0
      %v2759 = vadd.f32 0.0, %v2758
      %v2760 = vpop.f32.mrb[0].mxu0
      %2761 = vmatprep.mubr.f32.mxu0 0.0
      %2762 = vmatmul.mubr.f32.gmra.mrb[0].mxu0 %v2629
      %v2763 = vpop.f32.mrb[0].mxu0
      %v2764 = vadd.f32 0.0, %v2763
      %v2765 = vpop.f32.mrb[0].mxu0
      %2766 = vmatprep.mubr.f32.mxu0 0.0
      %2767 = vmatmul.mubr.f32.gmra.mrb[0].mxu0 %v2632
      %v2768 = vpop.f32.mrb[0].mxu0
      %v2769 = vadd.f32 0.0, %v2768
      %v2770 = vpop.f32.mrb[0].mxu0
      %2771 = vmatprep.mubr.f32.mxu0 0.0
      %2772 = vmatmul.mubr.f32.gmra.mrb[0].mxu0 %v2635
      %v2773 = vpop.f32.mrb[0].mxu0
      %v2774 = vadd.f32 0.0, %v2773
      %v2775 = vpop.f32.mrb[0].mxu0
      %2776 = vmatprep.mubr.f32.mxu0 0.0
      %2777 = vmatmul.mubr.f32.gmra.mrb[0].mxu0 %v2638
      %v2778 = vpop.f32.mrb[0].mxu0
      %v2779 = vadd.f32 0.0, %v2778
      %v2780 = vpop.f32.mrb[0].mxu0
      %2781 = vmatprep.mubr.f32.mxu0 0.0
      %2782 = vmatmul.mubr.f32.gmra.mrb[0].mxu0 %v2641
      %v2783 = vpop.f32.mrb[0].mxu0
      %v2784 = vadd.f32 0.0, %v2783
      %v2785 = vpop.f32.mrb[0].mxu0
      %2786 = vmatprep.mubr.f32.mxu0 0.0
      %2787 = vmatmul.mubr.f32.gmra.mrb[0].mxu0 %v2644
      %v2788 = vpop.f32.mrb[0].mxu0
      %v2789 = vadd.f32 0.0, %v2788
      %v2790 = vpop.f32.mrb[0].mxu0
      %2791 = vmatprep.mubr.f32.mxu0 0.0
      %2792 = vmatmul.mubr.f32.gmra.mrb[0].mxu0 %v2647
      %v2793 = vpop.f32.mrb[0].mxu0
      %v2794 = vadd.f32 0.0, %v2793
      %v2795 = vpop.f32.mrb[0].mxu0
      %2796 = vdwg.mxu0
      %v2797 = vadd.f32 %v2567, %v2719
      %v2798 = vadd.f32 %v2568, %v2724
      %v2799 = vadd.f32 %v2569, %v2729
      %v2800 = vadd.f32 %v2570, %v2734
      %v2801 = vadd.f32 %v2571, %v2739
      %v2802 = vadd.f32 %v2572, %v2744
      %v2803 = vadd.f32 %v2573, %v2749
      %v2804 = vadd.f32 %v2574, %v2754
      %v2805 = vadd.f32 %v2575, %v2759
      %v2806 = vadd.f32 %v2576, %v2764
      %v2807 = vadd.f32 %v2577, %v2769
      %v2808 = vadd.f32 %v2578, %v2774
      %v2809 = vadd.f32 %v2579, %v2779
      %v2810 = vadd.f32 %v2580, %v2784
      %v2811 = vadd.f32 %v2581, %v2789
      %v2812 = vadd.f32 %v2582, %v2794
      %v2813 = vld [vmem:[%s2352 + $0x2] sm:$0xff]
      %v2814 = vld [vmem:[%s2352 + $0xa] sm:$0xff]
      %v2815 = vld [vmem:[%s2352 + $0x1a] sm:$0xff]
      %v2816 = vld [vmem:[%s2352 + $0x22] sm:$0xff]
      %v2817 = vld [vmem:[%s2352 + $0x32] sm:$0xff]
      %v2818 = vld [vmem:[%s2352 + $0x3a] sm:$0xff]
      %v2819 = vld [vmem:[%s2352 + $0x4a] sm:$0xff]
      %v2820 = vld [vmem:[%s2352 + $0x52] sm:$0xff]
      %v2821 = vld [vmem:[%s2352 + $0x62] sm:$0xff]
      %v2822 = vld [vmem:[%s2352 + $0x6a] sm:$0xff]
      %v2823 = vld [vmem:[%s2352 + $0x7a] sm:$0xff]
      %v2824 = vld [vmem:[%s2352 + $0x82] sm:$0xff]
      %v2825 = vld [vmem:[%s2352 + $0x92] sm:$0xff]
      %v2826 = vld [vmem:[%s2352 + $0x9a] sm:$0xff]
      %v2827 = vld [vmem:[%s2352 + $0xaa] sm:$0xff]
      %v2828 = vld [vmem:[%s2352 + $0xb2] sm:$0xff]
      %s2829 = scalar_lea.vmem %s238, 44
      %v2830 = vld [vmem:[%s2829] sm:$0xf]
      %v2832 = vsel %vm280, %v2813, 0
      %v2835 = vsel %vm280, %v2814, 0
      %v2838 = vsel %vm280, %v2815, 0
      %v2841 = vsel %vm280, %v2816, 0
      %v2844 = vsel %vm280, %v2817, 0
      %v2847 = vsel %vm280, %v2818, 0
      %v2850 = vsel %vm280, %v2819, 0
      %v2853 = vsel %vm280, %v2820, 0
      %v2856 = vsel %vm280, %v2821, 0
      %v2859 = vsel %vm280, %v2822, 0
      %v2862 = vsel %vm280, %v2823, 0
      %v2865 = vsel %vm280, %v2824, 0
      %v2868 = vsel %vm280, %v2825, 0
      %v2871 = vsel %vm280, %v2826, 0
      %v2874 = vsel %vm280, %v2827, 0
      %v2877 = vsel %vm280, %v2828, 0
      %v2880 = vsel %vm329, %v2830, 0
      %2882 = vmatprep.subr.mxu0 0.0
      %2883 = vmatpush1.msra.mxu0 %v2880
      %2884 = vmatprep.subr.mxu0 0.0
      %2885 = vmatpush1.msra.mxu0 0.0
      %2886 = vmatprep.subr.mxu0 0.0
      %2887 = vmatpush1.msra.mxu0 0.0
      %2888 = vmatprep.subr.mxu0 0.0
      %2889 = vmatpush1.msra.mxu0 0.0
      %2890 = vmatprep.subr.mxu0 0.0
      %2891 = vmatpush1.msra.mxu0 0.0
      %2892 = vmatprep.subr.mxu0 0.0
      %2893 = vmatpush1.msra.mxu0 0.0
      %2894 = vmatprep.subr.mxu0 0.0
      %2895 = vmatpush1.msra.mxu0 0.0
      %2896 = vmatprep.subr.mxu0 0.0
      %2897 = vmatpush1.msra.mxu0 0.0
      %2898 = vmatprep.subr.mxu0 0.0
      %2899 = vmatpush1.msra.mxu0 0.0
      %2900 = vmatprep.subr.mxu0 0.0
      %2901 = vmatpush1.msra.mxu0 0.0
      %2902 = vmatprep.subr.mxu0 0.0
      %2903 = vmatpush1.msra.mxu0 0.0
      %2904 = vmatprep.subr.mxu0 0.0
      %2905 = vmatpush1.msra.mxu0 0.0
      %2906 = vmatprep.subr.mxu0 0.0
      %2907 = vmatpush1.msra.mxu0 0.0
      %2908 = vmatprep.subr.mxu0 0.0
      %2909 = vmatpush1.msra.mxu0 0.0
      %2910 = vmatprep.subr.mxu0 0.0
      %2911 = vmatpush1.msra.mxu0 0.0
      %2912 = vmatprep.subr.mxu0 0.0
      %2913 = vmatpush1.msra.mxu0 0.0
      %2914 = vmatprep.subr.mxu0 0.0
      %2915 = vmatpush1.msra.mxu0 0.0
      %2916 = vmatprep.subr.mxu0 0.0
      %2917 = vmatpush1.msra.mxu0 0.0
      %2918 = vmatprep.subr.mxu0 0.0
      %2919 = vmatpush1.msra.mxu0 0.0
      %2920 = vmatprep.subr.mxu0 0.0
      %2921 = vmatpush1.msra.mxu0 0.0
      %2922 = vmatprep.subr.mxu0 0.0
      %2923 = vmatpush1.msra.mxu0 0.0
      %2924 = vmatprep.subr.mxu0 0.0
      %2925 = vmatpush1.msra.mxu0 0.0
      %2926 = vmatprep.subr.mxu0 0.0
      %2927 = vmatpush1.msra.mxu0 0.0
      %2928 = vmatprep.subr.mxu0 0.0
      %2929 = vmatpush1.msra.mxu0 0.0
      %2930 = vmatprep.subr.mxu0 0.0
      %2931 = vmatpush1.msra.mxu0 0.0
      %2932 = vmatprep.subr.mxu0 0.0
      %2933 = vmatpush1.msra.mxu0 0.0
      %2934 = vmatprep.subr.mxu0 0.0
      %2935 = vmatpush1.msra.mxu0 0.0
      %2936 = vmatprep.subr.mxu0 0.0
      %2937 = vmatpush1.msra.mxu0 0.0
      %2938 = vmatprep.subr.mxu0 0.0
      %2939 = vmatpush1.msra.mxu0 0.0
      %2940 = vmatprep.subr.mxu0 0.0
      %2941 = vmatpush1.msra.mxu0 0.0
      %2942 = vmatprep.subr.mxu0 0.0
      %2943 = vmatpush1.msra.mxu0 0.0
      %2944 = vmatprep.subr.mxu0 0.0
      %2945 = vmatpush1.msra.mxu0 0.0
      %2946 = vmatprep.mubr.f32.mxu0 0.0
      %2947 = vmatmul.mubr.f32.gmra.mrb[0].mxu0 %v2832
      %v2948 = vpop.f32.mrb[0].mxu0
      %v2949 = vadd.f32 0.0, %v2948
      %v2950 = vpop.f32.mrb[0].mxu0
      %2951 = vmatprep.mubr.f32.mxu0 0.0
      %2952 = vmatmul.mubr.f32.gmra.mrb[0].mxu0 %v2835
      %v2953 = vpop.f32.mrb[0].mxu0
      %v2954 = vadd.f32 0.0, %v2953
      %v2955 = vpop.f32.mrb[0].mxu0
      %2956 = vmatprep.mubr.f32.mxu0 0.0
      %2957 = vmatmul.mubr.f32.gmra.mrb[0].mxu0 %v2838
      %v2958 = vpop.f32.mrb[0].mxu0
      %v2959 = vadd.f32 0.0, %v2958
      %v2960 = vpop.f32.mrb[0].mxu0
      %2961 = vmatprep.mubr.f32.mxu0 0.0
      %2962 = vmatmul.mubr.f32.gmra.mrb[0].mxu0 %v2841
      %v2963 = vpop.f32.mrb[0].mxu0
      %v2964 = vadd.f32 0.0, %v2963
      %v2965 = vpop.f32.mrb[0].mxu0
      %2966 = vmatprep.mubr.f32.mxu0 0.0
      %2967 = vmatmul.mubr.f32.gmra.mrb[0].mxu0 %v2844
      %v2968 = vpop.f32.mrb[0].mxu0
      %v2969 = vadd.f32 0.0, %v2968
      %v2970 = vpop.f32.mrb[0].mxu0
      %2971 = vmatprep.mubr.f32.mxu0 0.0
      %2972 = vmatmul.mubr.f32.gmra.mrb[0].mxu0 %v2847
      %v2973 = vpop.f32.mrb[0].mxu0
      %v2974 = vadd.f32 0.0, %v2973
      %v2975 = vpop.f32.mrb[0].mxu0
      %2976 = vmatprep.mubr.f32.mxu0 0.0
      %2977 = vmatmul.mubr.f32.gmra.mrb[0].mxu0 %v2850
      %v2978 = vpop.f32.mrb[0].mxu0
      %v2979 = vadd.f32 0.0, %v2978
      %v2980 = vpop.f32.mrb[0].mxu0
      %2981 = vmatprep.mubr.f32.mxu0 0.0
      %2982 = vmatmul.mubr.f32.gmra.mrb[0].mxu0 %v2853
      %v2983 = vpop.f32.mrb[0].mxu0
      %v2984 = vadd.f32 0.0, %v2983
      %v2985 = vpop.f32.mrb[0].mxu0
      %2986 = vmatprep.mubr.f32.mxu0 0.0
      %2987 = vmatmul.mubr.f32.gmra.mrb[0].mxu0 %v2856
      %v2988 = vpop.f32.mrb[0].mxu0
      %v2989 = vadd.f32 0.0, %v2988
      %v2990 = vpop.f32.mrb[0].mxu0
      %2991 = vmatprep.mubr.f32.mxu0 0.0
      %2992 = vmatmul.mubr.f32.gmra.mrb[0].mxu0 %v2859
      %v2993 = vpop.f32.mrb[0].mxu0
      %v2994 = vadd.f32 0.0, %v2993
      %v2995 = vpop.f32.mrb[0].mxu0
      %2996 = vmatprep.mubr.f32.mxu0 0.0
      %2997 = vmatmul.mubr.f32.gmra.mrb[0].mxu0 %v2862
      %v2998 = vpop.f32.mrb[0].mxu0
      %v2999 = vadd.f32 0.0, %v2998
      %v3000 = vpop.f32.mrb[0].mxu0
      %3001 = vmatprep.mubr.f32.mxu0 0.0
      %3002 = vmatmul.mubr.f32.gmra.mrb[0].mxu0 %v2865
      %v3003 = vpop.f32.mrb[0].mxu0
      %v3004 = vadd.f32 0.0, %v3003
      %v3005 = vpop.f32.mrb[0].mxu0
      %3006 = vmatprep.mubr.f32.mxu0 0.0
      %3007 = vmatmul.mubr.f32.gmra.mrb[0].mxu0 %v2868
      %v3008 = vpop.f32.mrb[0].mxu0
      %v3009 = vadd.f32 0.0, %v3008
      %v3010 = vpop.f32.mrb[0].mxu0
      %3011 = vmatprep.mubr.f32.mxu0 0.0
      %3012 = vmatmul.mubr.f32.gmra.mrb[0].mxu0 %v2871
      %v3013 = vpop.f32.mrb[0].mxu0
      %v3014 = vadd.f32 0.0, %v3013
      %v3015 = vpop.f32.mrb[0].mxu0
      %3016 = vmatprep.mubr.f32.mxu0 0.0
      %3017 = vmatmul.mubr.f32.gmra.mrb[0].mxu0 %v2874
      %v3018 = vpop.f32.mrb[0].mxu0
      %v3019 = vadd.f32 0.0, %v3018
      %v3020 = vpop.f32.mrb[0].mxu0
      %3021 = vmatprep.mubr.f32.mxu0 0.0
      %3022 = vmatmul.mubr.f32.gmra.mrb[0].mxu0 %v2877
      %v3023 = vpop.f32.mrb[0].mxu0
      %v3024 = vadd.f32 0.0, %v3023
      %v3025 = vpop.f32.mrb[0].mxu0
      %3026 = vdwg.mxu0
      %v3027 = vadd.f32 %v2797, %v2949
      %v3028 = vadd.f32 %v2798, %v2954
      %v3029 = vadd.f32 %v2799, %v2959
      %v3030 = vadd.f32 %v2800, %v2964
      %v3031 = vadd.f32 %v2801, %v2969
      %v3032 = vadd.f32 %v2802, %v2974
      %v3033 = vadd.f32 %v2803, %v2979
      %v3034 = vadd.f32 %v2804, %v2984
      %v3035 = vadd.f32 %v2805, %v2989
      %v3036 = vadd.f32 %v2806, %v2994
      %v3037 = vadd.f32 %v2807, %v2999
      %v3038 = vadd.f32 %v2808, %v3004
      %v3039 = vadd.f32 %v2809, %v3009
      %v3040 = vadd.f32 %v2810, %v3014
      %v3041 = vadd.f32 %v2811, %v3019
      %v3042 = vadd.f32 %v2812, %v3024
      %s3043 = scalar_lea.vmem %s254, 16
      %3044 = vst.msk [vmem:[%s3043] sm:$0xff] %vm1645, %v3027
      %3045 = vst.msk [vmem:[%s3043 + $0x8] sm:$0xff] %vm1645, %v3028
      %3046 = vst.msk [vmem:[%s3043 + $0x20] sm:$0xff] %vm1645, %v3029
      %3047 = vst.msk [vmem:[%s3043 + $0x28] sm:$0xff] %vm1645, %v3030
      %3048 = vst.msk [vmem:[%s3043 + $0x40] sm:$0xff] %vm1645, %v3031
      %3049 = vst.msk [vmem:[%s3043 + $0x48] sm:$0xff] %vm1645, %v3032
      %3050 = vst.msk [vmem:[%s3043 + $0x60] sm:$0xff] %vm1645, %v3033
      %3051 = vst.msk [vmem:[%s3043 + $0x68] sm:$0xff] %vm1645, %v3034
      %3052 = vst.msk [vmem:[%s3043 + $0x80] sm:$0xff] %vm1645, %v3035
      %3053 = vst.msk [vmem:[%s3043 + $0x88] sm:$0xff] %vm1645, %v3036
      %3054 = vst.msk [vmem:[%s3043 + $0xa0] sm:$0xff] %vm1645, %v3037
      %3055 = vst.msk [vmem:[%s3043 + $0xa8] sm:$0xff] %vm1645, %v3038
      %3056 = vst.msk [vmem:[%s3043 + $0xc0] sm:$0xff] %vm1645, %v3039
      %3057 = vst.msk [vmem:[%s3043 + $0xc8] sm:$0xff] %vm1645, %v3040
      %3058 = vst.msk [vmem:[%s3043 + $0xe0] sm:$0xff] %vm1645, %v3041
      %3059 = vst.msk [vmem:[%s3043 + $0xe8] sm:$0xff] %vm1645, %v3042
      %s3060 = smul.u32 8, %s20
      %p3061 = scmp.lt.s32.totalorder %s19, 1
      %s3062 = scalar_select %p3061, %s19, 1
      %p3063 = scmp.lt.s32.totalorder %s3060, 15
      %s3064 = scalar_select %p3063, %s3060, 15
      %p3065 = scmp.lt.s32.totalorder %s21, 0
      %s3066 = scalar_select %p3065, %s21, 0
      %s3067 = smul.addr %s3064, 4
      %s3068 = sadd.s32 %s3066, %s3067
      %s3069 = smul.addr %s3062, 64
      %s3070 = sadd.s32 %s3068, %s3069
      %s3071 = smul.addr %s3070, 8
      %s3072 = scalar_lea.vmem %s3, %s3071
      // Predicated region
      $region33: #{tpu_custom_call.1} parent=31 // pred_check
        %p3073 = pneg %p135
      $region34: #{tpu_custom_call.1} parent=31 // pred_check_branch
        %3075 = sbr.rel (%p3073) target = $region36
      $region35: #{tpu_custom_call.1} parent=31 // pred_region
        %s3076 = smul.u32 8, %s20
      $region36: #{tpu_custom_call.1} parent=31 // pred_fallthru
        _
    $region32: #{tpu_custom_call.1} parent=5 // pred_fallthru
      _
    %p3077 = scmp.le.s32.totalorder 2, %s9
    // Predicated region
    $region37: #{tpu_custom_call.1} parent=5 // pred_check
      %p3078 = pneg %p3077
    $region38: #{tpu_custom_call.1} parent=5 // pred_check_branch
      %3080 = sbr.rel (%p3078) target = $region40
    $region39: #{tpu_custom_call.1} parent=5 // pred_region
      %s3081 = ssub.s32 %s9, 2
      // Predicated region
      $region41: #{tpu_custom_call.1} parent=39 // pred_check
        %p3082 = pneg %p141
      $region42: #{tpu_custom_call.1} parent=39 // pred_check_branch
        %3084 = sbr.rel (%p3082) target = $region44
      $region43: #{tpu_custom_call.1} parent=39 // pred_region
        %s3085 = smul.u32 8, %s23
        %p3086 = scmp.lt.s32.totalorder %s22, 1
        %s3087 = scalar_select %p3086, %s22, 1
        %p3088 = scmp.lt.s32.totalorder %s3085, 15
        %s3089 = scalar_select %p3088, %s3085, 15
        %p3090 = scmp.lt.s32.totalorder %s24, 0
        %s3091 = scalar_select %p3090, %s24, 0
        %s3092 = smul.addr %s3089, 4
        %s3093 = sadd.s32 %s3091, %s3092
        %s3094 = smul.addr %s3087, 64
        %s3095 = sadd.s32 %s3093, %s3094
        %s3096 = smul.addr %s3095, 8
        %s3097 = scalar_lea.vmem %s3, %s3096
      $region44: #{tpu_custom_call.1} parent=39 // pred_fallthru
        _
    $region40: #{tpu_custom_call.1} parent=5 // pred_fallthru
      _
  $region6: #{tpu_custom_call.1} parent=0 // loop_footer
    %s13 = sadd.s32 1, %s9
  $region7: #{tpu_custom_call.1} parent=0 // loop_footer_branch
    %8 = sbr.rel target = $region3
  $region8: #{tpu_custom_call.1} parent=0 // loop_exit
    _

</llo_original>
